<compile_context>
chip_gen: v6e
topology: v6e:2x2x1
jax: 0.10.0
libtpu: 0.0.40
codegen_flags: <defaults>
</compile_context>

<pallas_src>
import functools

import jax
import jax.numpy as jnp
from jax.experimental import pallas as pl
from jax.experimental.pallas import tpu as pltpu


def _sga_kernel(x_ref, w_ref, b_ref, gamma_ref, o_ref, e_ref, p_ref, *, cb, n):
    """One (batch, phase, chunk-group) grid step.

    x_ref     : (1, C, cb*N)  lane-dense input block                 (VMEM)
    w_ref     : (3, C, C)     packed q/k/v 1x1-conv weights          (VMEM)
    b_ref     : (3, C, 1)     packed q/k/v biases                    (VMEM)
    gamma_ref : (1,)          residual scale                         (SMEM)
    o_ref     : (1, C, cb*N)  lane-dense output block                (VMEM)
    e_ref     : (N, N)        energy / attention scratch (persists)  (VMEM)
    p_ref     : (2, C, cb*N)  projection scratch (q/k, later v)      (VMEM)
    """
    phase = pl.program_id(1)   # 0 = accumulate energy, 1 = apply attention
    blk = pl.program_id(2)     # chunk-group index
    last_blk = pl.num_programs(2) - 1

    xb = x_ref[0]              # (C, cb*N)

    @pl.when(phase == 0)
    def _accumulate_energy():
        @pl.when(blk == 0)
        def _init():
            e_ref[...] = jnp.zeros_like(e_ref)

        # Whole-block 1x1 convolutions: one (C,C) x (C, cb*N) matmul each;
        # the (C,1) bias broadcast happens once per block, not per chunk.
        p_ref[0] = jnp.dot(w_ref[0], xb, preferred_element_type=jnp.float32) + b_ref[0]
        p_ref[1] = jnp.dot(w_ref[1], xb, preferred_element_type=jnp.float32) + b_ref[1]

        # energy[i, j] += sum_{c, a} q[c, a*N + i] * k[c, a*N + j]
        # accumulated straight into the VMEM scratch (no register (N,N) acc).
        for a in range(cb):
            qa = p_ref[0, :, pl.ds(a * n, n)]      # (C, N)
            ka = p_ref[1, :, pl.ds(a * n, n)]      # (C, N)
            e_ref[...] += jax.lax.dot_general(
                qa, ka, (((0,), (0,)), ((), ())),
                preferred_element_type=jnp.float32)

        # Softmax as soon as the full energy is available (end of phase 0) so
        # the first phase-1 step's input DMA overlaps it.
        @pl.when(blk == last_blk)
        def _softmax():
            e = e_ref[...]
            e = e - jnp.max(e, axis=-1, keepdims=True)
            ee = jnp.exp(e)
            denom = jnp.sum(ee, axis=-1, keepdims=True)
            # Approximate reciprocal runs on the otherwise idle EUP slot;
            # ~1e-3 relative deviation from an exact softmax.
            e_ref[...] = ee * pl.reciprocal(denom, approx=True)

    @pl.when(phase == 1)
    def _apply_attention():
        attn = e_ref[...]                          # (N, N), already softmaxed
        p_ref[0] = jnp.dot(w_ref[2], xb, preferred_element_type=jnp.float32) + b_ref[2]
        g = gamma_ref[0]
        for a in range(cb):
            va = p_ref[0, :, pl.ds(a * n, n)]      # (C, N)
            # out[c, i] = sum_j v[c, a*N + j] * attn[i, j]  == V_a @ attn^T
            outa = jax.lax.dot_general(
                va, attn, (((1,), (1,)), ((), ())),
                preferred_element_type=jnp.float32)
            xa = x_ref[0, :, pl.ds(a * n, n)].astype(jnp.float32)
            o_ref[0, :, pl.ds(a * n, n)] = (g * outa + xa).astype(o_ref.dtype)


def _pick_chunks(t, c, n, itemsize, *, max_unroll=32, target_block_bytes=4 << 20):
    """Chunks per block.

    Prefer full-plane residency (cb == t): x is then read from HBM exactly once
    per batch and reused by both phases.  Otherwise pick the largest divisor of
    t that (a) keeps the block under ~4 MiB (big blocks amortize the ~0.35us
    per-grid-step overhead), (b) bounds the static chunk unroll, and (c) keeps
    the block's lane dim a multiple of 128 (BlockSpec tiling constraint).
    """
    def ok(d):
        if d * c * n * itemsize > target_block_bytes or d > max_unroll:
            return False
        return d == t or (d * n) % 128 == 0

    good = [d for d in range(1, t + 1) if t % d == 0 and ok(d)]
    return max(good) if good else t    # fall back to full residency


def sga_forward(x, wq, bq, wk, bk, wv, bv, gamma):
    B, C, N, T = x.shape
    dtype = x.dtype
    itemsize = jnp.dtype(dtype).itemsize

    # Free reshape: chunk a of channel c is columns [a*N, (a+1)*N) of (C, N*T).
    # No transposes, no dtype upcast -- I/O stays in the caller's dtype.
    x_flat = x.reshape(B, C, N * T)

    w_all = jnp.stack([wq, wk, wv]).astype(jnp.float32)                    # (3, C, C)
    b_all = jnp.stack([bq, bk, bv]).astype(jnp.float32).reshape(3, C, 1)   # (3, C, 1)
    gamma_arr = jnp.asarray(gamma, jnp.float32).reshape(1)

    cb = _pick_chunks(T, C, N, itemsize)
    grid = (B, 2, T // cb)

    # Resident VMEM: double-buffered in/out blocks + weights + scratches.
    blk_bytes = C * cb * N * itemsize
    resident = (4 * blk_bytes
                + 2 * int(w_all.size + b_all.size) * 4
                + N * N * 4
                + 2 * C * cb * N * 4)
    # <= 48 MiB keeps headroom under v7x's 64 MiB physical VMEM; on v5e/v6e
    # (128 MiB) this could be raised toward ~100 MiB for very large planes.
    vmem_limit = int(min(48 << 20, max(32 << 20, 2 * resident)))

    kernel = functools.partial(_sga_kernel, cb=cb, n=N)

    out_flat = pl.pallas_call(
        kernel,
        out_shape=jax.ShapeDtypeStruct((B, C, N * T), dtype),
        grid_spec=pltpu.PrefetchScalarGridSpec(
            num_scalar_prefetch=0,
            grid=grid,
            in_specs=[
                pl.BlockSpec((1, C, cb * N), lambda b, p, a: (b, 0, a)),
                pl.BlockSpec((3, C, C), lambda b, p, a: (0, 0, 0)),
                pl.BlockSpec((3, C, 1), lambda b, p, a: (0, 0, 0)),
                pl.BlockSpec(memory_space=pltpu.MemorySpace.SMEM),   # gamma scalar
            ],
            # With cb == T (the case here) the output block index never changes
            # within a batch, so the block is flushed once, after phase 1 fills
            # it.  If T//cb > 1, phase 0 flushes not-yet-written blocks that
            # phase 1 then overwrites -- correct, just extra write bandwidth.
            out_specs=pl.BlockSpec((1, C, cb * N), lambda b, p, a: (b, 0, a)),
            scratch_shapes=[
                pltpu.VMEM((N, N), jnp.float32),          # energy / attention
                pltpu.VMEM((2, C, cb * N), jnp.float32),  # q/k (phase 0), v (phase 1)
            ],
        ),
        compiler_params=pltpu.CompilerParams(
            dimension_semantics=("parallel", "arbitrary", "arbitrary"),
            vmem_limit_bytes=vmem_limit,
        ),
    )(x_flat, w_all, b_all, gamma_arr)

    # Free reshape back to the module's output layout.
    return out_flat.reshape(B, C, N, T)


def sga_reference(x, wq, bq, wk, bk, wv, bv, gamma):
    """Pure-JAX reference mirroring the torch forward (sans plotting)."""
    B, C, N, T = x.shape

    def conv1x1(xx, w, b):
        return jnp.einsum('oc,bcnt->bont', w, xx) + b[None, :, None, None]

    q = conv1x1(x, wq, bq).reshape(B, -1, N).transpose(0, 2, 1)
    k = conv1x1(x, wk, bk).reshape(B, -1, N)
    v = conv1x1(x, wv, bv).reshape(B, -1, N)
    energy = jnp.einsum('bik,bkj->bij', q, k)
    attn = jax.nn.softmax(energy, axis=-1)
    out = jnp.einsum('bck,bjk->bcj', v, attn)          # bmm(v, attn^T)
    out = out.reshape(B, C, N, T)
    return gamma * out + x


if __name__ == "__main__":
    B, C, N, T = 2, 4, 16, 16
    key = jax.random.PRNGKey(0)
    ks = jax.random.split(key, 7)
    x = jax.random.normal(ks[0], (B, C, N, T), jnp.float32)

    # Conv2d(in_dim, in_dim, kernel_size=1) -> weight (C, C), bias (C,)
    scale = 1.0 / (C ** 0.5)
    wq = jax.random.uniform(ks[1], (C, C), jnp.float32, -scale, scale)
    wk = jax.random.uniform(ks[2], (C, C), jnp.float32, -scale, scale)
    wv = jax.random.uniform(ks[3], (C, C), jnp.float32, -scale, scale)
    bq = jax.random.uniform(ks[4], (C,), jnp.float32, -scale, scale)
    bk = jax.random.uniform(ks[5], (C,), jnp.float32, -scale, scale)
    bv = jax.random.uniform(ks[6], (C,), jnp.float32, -scale, scale)
    # nn.Parameter(torch.zeros(1)) in __init__; nonzero here so the attention
    # path actually contributes to the output.
    gamma = jnp.float32(0.5)

    # TODO(synk): print(attention.size()) + matplotlib/seaborn heatmap of
    # attention[:, 120:140, 120:140] are host-side visualization side effects
    # with no Pallas equivalent (and require N >= 140); intentionally omitted.

    out = jax.block_until_ready(sga_forward(x, wq, bq, wk, bk, wv, bv, gamma))
    ref = sga_reference(x, wq, bq, wk, bk, wv, bv, gamma)

    assert out.shape == (B, C, N, T)
    # Matmuls/accumulation are f32; tolerance covers the approximate EUP
    # reciprocal used for the softmax normalization.
    assert jnp.allclose(out, ref, atol=2e-3, rtol=2e-3), \
        f"max abs diff {jnp.max(jnp.abs(out - ref))}"
    print("KERNEL_OK")
</pallas_src>

<mosaic_0001>
module attributes {stable_mosaic.version = 11 : i64} {
  func.func @_sga_kernel(%arg0: i32, %arg1: i32, %arg2: i32, %arg3: memref<1x4x256xf32, #tpu.memory_space<vmem>>, %arg4: memref<3x4x4xf32, #tpu.memory_space<vmem>>, %arg5: memref<3x4x1xf32, #tpu.memory_space<vmem>>, %arg6: memref<1xf32, #tpu.memory_space<smem>>, %arg7: memref<1x4x256xf32, #tpu.memory_space<vmem>>, %arg8: memref<16x16xf32, #tpu.memory_space<vmem>>, %arg9: memref<2x4x256xf32, #tpu.memory_space<vmem>>) attributes {dimension_semantics = [#tpu.dimension_semantics<parallel>, #tpu.dimension_semantics<arbitrary>, #tpu.dimension_semantics<arbitrary>], iteration_bounds = array<i64: 2, 2, 1>, scalar_prefetch = 0 : i64, scratch_operands = 2 : i64, tpu.core_type = #tpu.core_type<tc>, window_params = [{transform_indices = @transform_0, window_bounds = array<i64: 1, 4, 256>}, {pipeline_mode = #tpu.pipeline_mode<synchronous>, transform_indices = @transform_1, window_bounds = array<i64: 3, 4, 4>}, {pipeline_mode = #tpu.pipeline_mode<synchronous>, transform_indices = @transform_2, window_bounds = array<i64: 3, 4, 1>}, {transform_indices = @transform_3, window_bounds = array<i64: 1>}, {transform_indices = @transform_4, window_bounds = array<i64: 1, 4, 256>}]} {
    %c0 = arith.constant 0 : index
    %c0_0 = arith.constant 0 : index
    %c0_1 = arith.constant 0 : index
    %0 = vector.load %arg3[%c0, %c0_0, %c0_1] : memref<1x4x256xf32, #tpu.memory_space<vmem>>, vector<1x4x256xf32>
    %1 = vector.shape_cast %0 : vector<1x4x256xf32> to vector<4x256xf32>
    %c0_i32 = arith.constant 0 : i32
    %2 = arith.cmpi eq, %arg1, %c0_i32 : i32
    %3 = arith.extui %2 : i1 to i32
    %c0_i32_2 = arith.constant 0 : i32
    %4 = arith.cmpi ne, %3, %c0_i32_2 : i32
    scf.if %4 {
      %c0_i32_4 = arith.constant 0 : i32
      %8 = arith.cmpi eq, %arg2, %c0_i32_4 : i32
      %9 = arith.extui %8 : i1 to i32
      %c0_i32_5 = arith.constant 0 : i32
      %10 = arith.cmpi ne, %9, %c0_i32_5 : i32
      scf.if %10 {
        %cst_187 = arith.constant 0.000000e+00 : f32
        %162 = vector.broadcast %cst_187 : f32 to vector<16x16xf32>
        %c0_188 = arith.constant 0 : index
        %c0_189 = arith.constant 0 : index
        %163 = vector.load %arg8[%c0_188, %c0_189] : memref<16x16xf32, #tpu.memory_space<vmem>>, vector<16x16xf32>
        tpu.vector_store %arg8[%c0_188, %c0_189], %162 {strides = array<i32>} : memref<16x16xf32, #tpu.memory_space<vmem>>, vector<16x16xf32>,
      } else {
      }
      %c0_6 = arith.constant 0 : index
      %c0_7 = arith.constant 0 : index
      %c0_8 = arith.constant 0 : index
      %11 = vector.load %arg4[%c0_6, %c0_7, %c0_8] : memref<3x4x4xf32, #tpu.memory_space<vmem>>, vector<1x4x4xf32>
      %12 = vector.shape_cast %11 : vector<1x4x4xf32> to vector<4x4xf32>
      %cst = arith.constant dense<0.000000e+00> : vector<4x256xf32>
      %13 = tpu.matmul %12, %1, %cst {dimension_numbers = #tpu.dot_dimension_numbers<[1], [0], [0], [1], [0, 0, 1, 1], [], []>} : vector<4x4xf32>, vector<4x256xf32>, vector<4x256xf32> -> vector<4x256xf32>
      %c0_9 = arith.constant 0 : index
      %c0_10 = arith.constant 0 : index
      %c0_11 = arith.constant 0 : index
      %14 = vector.load %arg5[%c0_9, %c0_10, %c0_11] : memref<3x4x1xf32, #tpu.memory_space<vmem>>, vector<1x4x1xf32>
      %15 = vector.shape_cast %14 : vector<1x4x1xf32> to vector<4x1xf32>
      %16 = vector.broadcast %15 : vector<4x1xf32> to vector<4x256xf32>
      %17 = arith.addf %13, %16 : vector<4x256xf32>
      %c0_12 = arith.constant 0 : index
      %c0_13 = arith.constant 0 : index
      %c0_14 = arith.constant 0 : index
      %18 = vector.load %arg9[%c0_12, %c0_13, %c0_14] : memref<2x4x256xf32, #tpu.memory_space<vmem>>, vector<1x4x256xf32>
      %19 = vector.shape_cast %18 : vector<1x4x256xf32> to vector<4x256xf32>
      %20 = vector.shape_cast %17 : vector<4x256xf32> to vector<1x4x256xf32>
      tpu.vector_store %arg9[%c0_12, %c0_13, %c0_14], %20 {strides = array<i32>} : memref<2x4x256xf32, #tpu.memory_space<vmem>>, vector<1x4x256xf32>,
      %c1 = arith.constant 1 : index
      %c0_15 = arith.constant 0 : index
      %c0_16 = arith.constant 0 : index
      %21 = vector.load %arg4[%c1, %c0_15, %c0_16] : memref<3x4x4xf32, #tpu.memory_space<vmem>>, vector<1x4x4xf32>
      %22 = vector.shape_cast %21 : vector<1x4x4xf32> to vector<4x4xf32>
      %cst_17 = arith.constant dense<0.000000e+00> : vector<4x256xf32>
      %23 = tpu.matmul %22, %1, %cst_17 {dimension_numbers = #tpu.dot_dimension_numbers<[1], [0], [0], [1], [0, 0, 1, 1], [], []>} : vector<4x4xf32>, vector<4x256xf32>, vector<4x256xf32> -> vector<4x256xf32>
      %c1_18 = arith.constant 1 : index
      %c0_19 = arith.constant 0 : index
      %c0_20 = arith.constant 0 : index
      %24 = vector.load %arg5[%c1_18, %c0_19, %c0_20] : memref<3x4x1xf32, #tpu.memory_space<vmem>>, vector<1x4x1xf32>
      %25 = vector.shape_cast %24 : vector<1x4x1xf32> to vector<4x1xf32>
      %26 = vector.broadcast %25 : vector<4x1xf32> to vector<4x256xf32>
      %27 = arith.addf %23, %26 : vector<4x256xf32>
      %c1_21 = arith.constant 1 : index
      %c0_22 = arith.constant 0 : index
      %c0_23 = arith.constant 0 : index
      %28 = vector.load %arg9[%c1_21, %c0_22, %c0_23] : memref<2x4x256xf32, #tpu.memory_space<vmem>>, vector<1x4x256xf32>
      %29 = vector.shape_cast %28 : vector<1x4x256xf32> to vector<4x256xf32>
      %30 = vector.shape_cast %27 : vector<4x256xf32> to vector<1x4x256xf32>
      tpu.vector_store %arg9[%c1_21, %c0_22, %c0_23], %30 {strides = array<i32>} : memref<2x4x256xf32, #tpu.memory_space<vmem>>, vector<1x4x256xf32>,
      %c0_24 = arith.constant 0 : index
      %c0_25 = arith.constant 0 : index
      %c0_26 = arith.constant 0 : index
      %31 = vector.load %arg9[%c0_24, %c0_25, %c0_26] : memref<2x4x256xf32, #tpu.memory_space<vmem>>, vector<1x4x16xf32>
      %32 = vector.shape_cast %31 : vector<1x4x16xf32> to vector<4x16xf32>
      %c1_27 = arith.constant 1 : index
      %c0_28 = arith.constant 0 : index
      %c0_29 = arith.constant 0 : index
      %33 = vector.load %arg9[%c1_27, %c0_28, %c0_29] : memref<2x4x256xf32, #tpu.memory_space<vmem>>, vector<1x4x16xf32>
      %34 = vector.shape_cast %33 : vector<1x4x16xf32> to vector<4x16xf32>
      %c0_30 = arith.constant 0 : index
      %c0_31 = arith.constant 0 : index
      %35 = vector.load %arg8[%c0_30, %c0_31] : memref<16x16xf32, #tpu.memory_space<vmem>>, vector<16x16xf32>
      %cst_32 = arith.constant dense<0.000000e+00> : vector<16x16xf32>
      %36 = tpu.matmul %32, %34, %cst_32 {dimension_numbers = #tpu.dot_dimension_numbers<[0], [0], [1], [1], [0, 1, 1, 1], [], []>} : vector<4x16xf32>, vector<4x16xf32>, vector<16x16xf32> -> vector<16x16xf32>
      %37 = arith.addf %35, %36 : vector<16x16xf32>
      %c0_33 = arith.constant 0 : index
      %c0_34 = arith.constant 0 : index
      %38 = vector.load %arg8[%c0_33, %c0_34] : memref<16x16xf32, #tpu.memory_space<vmem>>, vector<16x16xf32>
      tpu.vector_store %arg8[%c0_33, %c0_34], %37 {strides = array<i32>} : memref<16x16xf32, #tpu.memory_space<vmem>>, vector<16x16xf32>,
      %c0_35 = arith.constant 0 : index
      %c0_36 = arith.constant 0 : index
      %c16 = arith.constant 16 : index
      %39 = vector.load %arg9[%c0_35, %c0_36, %c16] : memref<2x4x256xf32, #tpu.memory_space<vmem>>, vector<1x4x16xf32>
      %40 = vector.shape_cast %39 : vector<1x4x16xf32> to vector<4x16xf32>
      %c1_37 = arith.constant 1 : index
      %c0_38 = arith.constant 0 : index
      %c16_39 = arith.constant 16 : index
      %41 = vector.load %arg9[%c1_37, %c0_38, %c16_39] : memref<2x4x256xf32, #tpu.memory_space<vmem>>, vector<1x4x16xf32>
      %42 = vector.shape_cast %41 : vector<1x4x16xf32> to vector<4x16xf32>
      %c0_40 = arith.constant 0 : index
      %c0_41 = arith.constant 0 : index
      %43 = vector.load %arg8[%c0_40, %c0_41] : memref<16x16xf32, #tpu.memory_space<vmem>>, vector<16x16xf32>
      %cst_42 = arith.constant dense<0.000000e+00> : vector<16x16xf32>
      %44 = tpu.matmul %40, %42, %cst_42 {dimension_numbers = #tpu.dot_dimension_numbers<[0], [0], [1], [1], [0, 1, 1, 1], [], []>} : vector<4x16xf32>, vector<4x16xf32>, vector<16x16xf32> -> vector<16x16xf32>
      %45 = arith.addf %43, %44 : vector<16x16xf32>
      %c0_43 = arith.constant 0 : index
      %c0_44 = arith.constant 0 : index
      %46 = vector.load %arg8[%c0_43, %c0_44] : memref<16x16xf32, #tpu.memory_space<vmem>>, vector<16x16xf32>
      tpu.vector_store %arg8[%c0_43, %c0_44], %45 {strides = array<i32>} : memref<16x16xf32, #tpu.memory_space<vmem>>, vector<16x16xf32>,
      %c0_45 = arith.constant 0 : index
      %c0_46 = arith.constant 0 : index
      %c32 = arith.constant 32 : index
      %47 = vector.load %arg9[%c0_45, %c0_46, %c32] : memref<2x4x256xf32, #tpu.memory_space<vmem>>, vector<1x4x16xf32>
      %48 = vector.shape_cast %47 : vector<1x4x16xf32> to vector<4x16xf32>
      %c1_47 = arith.constant 1 : index
      %c0_48 = arith.constant 0 : index
      %c32_49 = arith.constant 32 : index
      %49 = vector.load %arg9[%c1_47, %c0_48, %c32_49] : memref<2x4x256xf32, #tpu.memory_space<vmem>>, vector<1x4x16xf32>
      %50 = vector.shape_cast %49 : vector<1x4x16xf32> to vector<4x16xf32>
      %c0_50 = arith.constant 0 : index
      %c0_51 = arith.constant 0 : index
      %51 = vector.load %arg8[%c0_50, %c0_51] : memref<16x16xf32, #tpu.memory_space<vmem>>, vector<16x16xf32>
      %cst_52 = arith.constant dense<0.000000e+00> : vector<16x16xf32>
      %52 = tpu.matmul %48, %50, %cst_52 {dimension_numbers = #tpu.dot_dimension_numbers<[0], [0], [1], [1], [0, 1, 1, 1], [], []>} : vector<4x16xf32>, vector<4x16xf32>, vector<16x16xf32> -> vector<16x16xf32>
      %53 = arith.addf %51, %52 : vector<16x16xf32>
      %c0_53 = arith.constant 0 : index
      %c0_54 = arith.constant 0 : index
      %54 = vector.load %arg8[%c0_53, %c0_54] : memref<16x16xf32, #tpu.memory_space<vmem>>, vector<16x16xf32>
      tpu.vector_store %arg8[%c0_53, %c0_54], %53 {strides = array<i32>} : memref<16x16xf32, #tpu.memory_space<vmem>>, vector<16x16xf32>,
      %c0_55 = arith.constant 0 : index
      %c0_56 = arith.constant 0 : index
      %c48 = arith.constant 48 : index
      %55 = vector.load %arg9[%c0_55, %c0_56, %c48] : memref<2x4x256xf32, #tpu.memory_space<vmem>>, vector<1x4x16xf32>
      %56 = vector.shape_cast %55 : vector<1x4x16xf32> to vector<4x16xf32>
      %c1_57 = arith.constant 1 : index
      %c0_58 = arith.constant 0 : index
      %c48_59 = arith.constant 48 : index
      %57 = vector.load %arg9[%c1_57, %c0_58, %c48_59] : memref<2x4x256xf32, #tpu.memory_space<vmem>>, vector<1x4x16xf32>
      %58 = vector.shape_cast %57 : vector<1x4x16xf32> to vector<4x16xf32>
      %c0_60 = arith.constant 0 : index
      %c0_61 = arith.constant 0 : index
      %59 = vector.load %arg8[%c0_60, %c0_61] : memref<16x16xf32, #tpu.memory_space<vmem>>, vector<16x16xf32>
      %cst_62 = arith.constant dense<0.000000e+00> : vector<16x16xf32>
      %60 = tpu.matmul %56, %58, %cst_62 {dimension_numbers = #tpu.dot_dimension_numbers<[0], [0], [1], [1], [0, 1, 1, 1], [], []>} : vector<4x16xf32>, vector<4x16xf32>, vector<16x16xf32> -> vector<16x16xf32>
      %61 = arith.addf %59, %60 : vector<16x16xf32>
      %c0_63 = arith.constant 0 : index
      %c0_64 = arith.constant 0 : index
      %62 = vector.load %arg8[%c0_63, %c0_64] : memref<16x16xf32, #tpu.memory_space<vmem>>, vector<16x16xf32>
      tpu.vector_store %arg8[%c0_63, %c0_64], %61 {strides = array<i32>} : memref<16x16xf32, #tpu.memory_space<vmem>>, vector<16x16xf32>,
      %c0_65 = arith.constant 0 : index
      %c0_66 = arith.constant 0 : index
      %c64 = arith.constant 64 : index
      %63 = vector.load %arg9[%c0_65, %c0_66, %c64] : memref<2x4x256xf32, #tpu.memory_space<vmem>>, vector<1x4x16xf32>
      %64 = vector.shape_cast %63 : vector<1x4x16xf32> to vector<4x16xf32>
      %c1_67 = arith.constant 1 : index
      %c0_68 = arith.constant 0 : index
      %c64_69 = arith.constant 64 : index
      %65 = vector.load %arg9[%c1_67, %c0_68, %c64_69] : memref<2x4x256xf32, #tpu.memory_space<vmem>>, vector<1x4x16xf32>
      %66 = vector.shape_cast %65 : vector<1x4x16xf32> to vector<4x16xf32>
      %c0_70 = arith.constant 0 : index
      %c0_71 = arith.constant 0 : index
      %67 = vector.load %arg8[%c0_70, %c0_71] : memref<16x16xf32, #tpu.memory_space<vmem>>, vector<16x16xf32>
      %cst_72 = arith.constant dense<0.000000e+00> : vector<16x16xf32>
      %68 = tpu.matmul %64, %66, %cst_72 {dimension_numbers = #tpu.dot_dimension_numbers<[0], [0], [1], [1], [0, 1, 1, 1], [], []>} : vector<4x16xf32>, vector<4x16xf32>, vector<16x16xf32> -> vector<16x16xf32>
      %69 = arith.addf %67, %68 : vector<16x16xf32>
      %c0_73 = arith.constant 0 : index
      %c0_74 = arith.constant 0 : index
      %70 = vector.load %arg8[%c0_73, %c0_74] : memref<16x16xf32, #tpu.memory_space<vmem>>, vector<16x16xf32>
      tpu.vector_store %arg8[%c0_73, %c0_74], %69 {strides = array<i32>} : memref<16x16xf32, #tpu.memory_space<vmem>>, vector<16x16xf32>,
      %c0_75 = arith.constant 0 : index
      %c0_76 = arith.constant 0 : index
      %c80 = arith.constant 80 : index
      %71 = vector.load %arg9[%c0_75, %c0_76, %c80] : memref<2x4x256xf32, #tpu.memory_space<vmem>>, vector<1x4x16xf32>
      %72 = vector.shape_cast %71 : vector<1x4x16xf32> to vector<4x16xf32>
      %c1_77 = arith.constant 1 : index
      %c0_78 = arith.constant 0 : index
      %c80_79 = arith.constant 80 : index
      %73 = vector.load %arg9[%c1_77, %c0_78, %c80_79] : memref<2x4x256xf32, #tpu.memory_space<vmem>>, vector<1x4x16xf32>
      %74 = vector.shape_cast %73 : vector<1x4x16xf32> to vector<4x16xf32>
      %c0_80 = arith.constant 0 : index
      %c0_81 = arith.constant 0 : index
      %75 = vector.load %arg8[%c0_80, %c0_81] : memref<16x16xf32, #tpu.memory_space<vmem>>, vector<16x16xf32>
      %cst_82 = arith.constant dense<0.000000e+00> : vector<16x16xf32>
      %76 = tpu.matmul %72, %74, %cst_82 {dimension_numbers = #tpu.dot_dimension_numbers<[0], [0], [1], [1], [0, 1, 1, 1], [], []>} : vector<4x16xf32>, vector<4x16xf32>, vector<16x16xf32> -> vector<16x16xf32>
      %77 = arith.addf %75, %76 : vector<16x16xf32>
      %c0_83 = arith.constant 0 : index
      %c0_84 = arith.constant 0 : index
      %78 = vector.load %arg8[%c0_83, %c0_84] : memref<16x16xf32, #tpu.memory_space<vmem>>, vector<16x16xf32>
      tpu.vector_store %arg8[%c0_83, %c0_84], %77 {strides = array<i32>} : memref<16x16xf32, #tpu.memory_space<vmem>>, vector<16x16xf32>,
      %c0_85 = arith.constant 0 : index
      %c0_86 = arith.constant 0 : index
      %c96 = arith.constant 96 : index
      %79 = vector.load %arg9[%c0_85, %c0_86, %c96] : memref<2x4x256xf32, #tpu.memory_space<vmem>>, vector<1x4x16xf32>
      %80 = vector.shape_cast %79 : vector<1x4x16xf32> to vector<4x16xf32>
      %c1_87 = arith.constant 1 : index
      %c0_88 = arith.constant 0 : index
      %c96_89 = arith.constant 96 : index
      %81 = vector.load %arg9[%c1_87, %c0_88, %c96_89] : memref<2x4x256xf32, #tpu.memory_space<vmem>>, vector<1x4x16xf32>
      %82 = vector.shape_cast %81 : vector<1x4x16xf32> to vector<4x16xf32>
      %c0_90 = arith.constant 0 : index
      %c0_91 = arith.constant 0 : index
      %83 = vector.load %arg8[%c0_90, %c0_91] : memref<16x16xf32, #tpu.memory_space<vmem>>, vector<16x16xf32>
      %cst_92 = arith.constant dense<0.000000e+00> : vector<16x16xf32>
      %84 = tpu.matmul %80, %82, %cst_92 {dimension_numbers = #tpu.dot_dimension_numbers<[0], [0], [1], [1], [0, 1, 1, 1], [], []>} : vector<4x16xf32>, vector<4x16xf32>, vector<16x16xf32> -> vector<16x16xf32>
      %85 = arith.addf %83, %84 : vector<16x16xf32>
      %c0_93 = arith.constant 0 : index
      %c0_94 = arith.constant 0 : index
      %86 = vector.load %arg8[%c0_93, %c0_94] : memref<16x16xf32, #tpu.memory_space<vmem>>, vector<16x16xf32>
      tpu.vector_store %arg8[%c0_93, %c0_94], %85 {strides = array<i32>} : memref<16x16xf32, #tpu.memory_space<vmem>>, vector<16x16xf32>,
      %c0_95 = arith.constant 0 : index
      %c0_96 = arith.constant 0 : index
      %c112 = arith.constant 112 : index
      %87 = vector.load %arg9[%c0_95, %c0_96, %c112] : memref<2x4x256xf32, #tpu.memory_space<vmem>>, vector<1x4x16xf32>
      %88 = vector.shape_cast %87 : vector<1x4x16xf32> to vector<4x16xf32>
      %c1_97 = arith.constant 1 : index
      %c0_98 = arith.constant 0 : index
      %c112_99 = arith.constant 112 : index
      %89 = vector.load %arg9[%c1_97, %c0_98, %c112_99] : memref<2x4x256xf32, #tpu.memory_space<vmem>>, vector<1x4x16xf32>
      %90 = vector.shape_cast %89 : vector<1x4x16xf32> to vector<4x16xf32>
      %c0_100 = arith.constant 0 : index
      %c0_101 = arith.constant 0 : index
      %91 = vector.load %arg8[%c0_100, %c0_101] : memref<16x16xf32, #tpu.memory_space<vmem>>, vector<16x16xf32>
      %cst_102 = arith.constant dense<0.000000e+00> : vector<16x16xf32>
      %92 = tpu.matmul %88, %90, %cst_102 {dimension_numbers = #tpu.dot_dimension_numbers<[0], [0], [1], [1], [0, 1, 1, 1], [], []>} : vector<4x16xf32>, vector<4x16xf32>, vector<16x16xf32> -> vector<16x16xf32>
      %93 = arith.addf %91, %92 : vector<16x16xf32>
      %c0_103 = arith.constant 0 : index
      %c0_104 = arith.constant 0 : index
      %94 = vector.load %arg8[%c0_103, %c0_104] : memref<16x16xf32, #tpu.memory_space<vmem>>, vector<16x16xf32>
      tpu.vector_store %arg8[%c0_103, %c0_104], %93 {strides = array<i32>} : memref<16x16xf32, #tpu.memory_space<vmem>>, vector<16x16xf32>,
      %c0_105 = arith.constant 0 : index
      %c0_106 = arith.constant 0 : index
      %c128 = arith.constant 128 : index
      %95 = vector.load %arg9[%c0_105, %c0_106, %c128] : memref<2x4x256xf32, #tpu.memory_space<vmem>>, vector<1x4x16xf32>
      %96 = vector.shape_cast %95 : vector<1x4x16xf32> to vector<4x16xf32>
      %c1_107 = arith.constant 1 : index
      %c0_108 = arith.constant 0 : index
      %c128_109 = arith.constant 128 : index
      %97 = vector.load %arg9[%c1_107, %c0_108, %c128_109] : memref<2x4x256xf32, #tpu.memory_space<vmem>>, vector<1x4x16xf32>
      %98 = vector.shape_cast %97 : vector<1x4x16xf32> to vector<4x16xf32>
      %c0_110 = arith.constant 0 : index
      %c0_111 = arith.constant 0 : index
      %99 = vector.load %arg8[%c0_110, %c0_111] : memref<16x16xf32, #tpu.memory_space<vmem>>, vector<16x16xf32>
      %cst_112 = arith.constant dense<0.000000e+00> : vector<16x16xf32>
      %100 = tpu.matmul %96, %98, %cst_112 {dimension_numbers = #tpu.dot_dimension_numbers<[0], [0], [1], [1], [0, 1, 1, 1], [], []>} : vector<4x16xf32>, vector<4x16xf32>, vector<16x16xf32> -> vector<16x16xf32>
      %101 = arith.addf %99, %100 : vector<16x16xf32>
      %c0_113 = arith.constant 0 : index
      %c0_114 = arith.constant 0 : index
      %102 = vector.load %arg8[%c0_113, %c0_114] : memref<16x16xf32, #tpu.memory_space<vmem>>, vector<16x16xf32>
      tpu.vector_store %arg8[%c0_113, %c0_114], %101 {strides = array<i32>} : memref<16x16xf32, #tpu.memory_space<vmem>>, vector<16x16xf32>,
      %c0_115 = arith.constant 0 : index
      %c0_116 = arith.constant 0 : index
      %c144 = arith.constant 144 : index
      %103 = vector.load %arg9[%c0_115, %c0_116, %c144] : memref<2x4x256xf32, #tpu.memory_space<vmem>>, vector<1x4x16xf32>
      %104 = vector.shape_cast %103 : vector<1x4x16xf32> to vector<4x16xf32>
      %c1_117 = arith.constant 1 : index
      %c0_118 = arith.constant 0 : index
      %c144_119 = arith.constant 144 : index
      %105 = vector.load %arg9[%c1_117, %c0_118, %c144_119] : memref<2x4x256xf32, #tpu.memory_space<vmem>>, vector<1x4x16xf32>
      %106 = vector.shape_cast %105 : vector<1x4x16xf32> to vector<4x16xf32>
      %c0_120 = arith.constant 0 : index
      %c0_121 = arith.constant 0 : index
      %107 = vector.load %arg8[%c0_120, %c0_121] : memref<16x16xf32, #tpu.memory_space<vmem>>, vector<16x16xf32>
      %cst_122 = arith.constant dense<0.000000e+00> : vector<16x16xf32>
      %108 = tpu.matmul %104, %106, %cst_122 {dimension_numbers = #tpu.dot_dimension_numbers<[0], [0], [1], [1], [0, 1, 1, 1], [], []>} : vector<4x16xf32>, vector<4x16xf32>, vector<16x16xf32> -> vector<16x16xf32>
      %109 = arith.addf %107, %108 : vector<16x16xf32>
      %c0_123 = arith.constant 0 : index
      %c0_124 = arith.constant 0 : index
      %110 = vector.load %arg8[%c0_123, %c0_124] : memref<16x16xf32, #tpu.memory_space<vmem>>, vector<16x16xf32>
      tpu.vector_store %arg8[%c0_123, %c0_124], %109 {strides = array<i32>} : memref<16x16xf32, #tpu.memory_space<vmem>>, vector<16x16xf32>,
      %c0_125 = arith.constant 0 : index
      %c0_126 = arith.constant 0 : index
      %c160 = arith.constant 160 : index
      %111 = vector.load %arg9[%c0_125, %c0_126, %c160] : memref<2x4x256xf32, #tpu.memory_space<vmem>>, vector<1x4x16xf32>
      %112 = vector.shape_cast %111 : vector<1x4x16xf32> to vector<4x16xf32>
      %c1_127 = arith.constant 1 : index
      %c0_128 = arith.constant 0 : index
      %c160_129 = arith.constant 160 : index
      %113 = vector.load %arg9[%c1_127, %c0_128, %c160_129] : memref<2x4x256xf32, #tpu.memory_space<vmem>>, vector<1x4x16xf32>
      %114 = vector.shape_cast %113 : vector<1x4x16xf32> to vector<4x16xf32>
      %c0_130 = arith.constant 0 : index
      %c0_131 = arith.constant 0 : index
      %115 = vector.load %arg8[%c0_130, %c0_131] : memref<16x16xf32, #tpu.memory_space<vmem>>, vector<16x16xf32>
      %cst_132 = arith.constant dense<0.000000e+00> : vector<16x16xf32>
      %116 = tpu.matmul %112, %114, %cst_132 {dimension_numbers = #tpu.dot_dimension_numbers<[0], [0], [1], [1], [0, 1, 1, 1], [], []>} : vector<4x16xf32>, vector<4x16xf32>, vector<16x16xf32> -> vector<16x16xf32>
      %117 = arith.addf %115, %116 : vector<16x16xf32>
      %c0_133 = arith.constant 0 : index
      %c0_134 = arith.constant 0 : index
      %118 = vector.load %arg8[%c0_133, %c0_134] : memref<16x16xf32, #tpu.memory_space<vmem>>, vector<16x16xf32>
      tpu.vector_store %arg8[%c0_133, %c0_134], %117 {strides = array<i32>} : memref<16x16xf32, #tpu.memory_space<vmem>>, vector<16x16xf32>,
      %c0_135 = arith.constant 0 : index
      %c0_136 = arith.constant 0 : index
      %c176 = arith.constant 176 : index
      %119 = vector.load %arg9[%c0_135, %c0_136, %c176] : memref<2x4x256xf32, #tpu.memory_space<vmem>>, vector<1x4x16xf32>
      %120 = vector.shape_cast %119 : vector<1x4x16xf32> to vector<4x16xf32>
      %c1_137 = arith.constant 1 : index
      %c0_138 = arith.constant 0 : index
      %c176_139 = arith.constant 176 : index
      %121 = vector.load %arg9[%c1_137, %c0_138, %c176_139] : memref<2x4x256xf32, #tpu.memory_space<vmem>>, vector<1x4x16xf32>
      %122 = vector.shape_cast %121 : vector<1x4x16xf32> to vector<4x16xf32>
      %c0_140 = arith.constant 0 : index
      %c0_141 = arith.constant 0 : index
      %123 = vector.load %arg8[%c0_140, %c0_141] : memref<16x16xf32, #tpu.memory_space<vmem>>, vector<16x16xf32>
      %cst_142 = arith.constant dense<0.000000e+00> : vector<16x16xf32>
      %124 = tpu.matmul %120, %122, %cst_142 {dimension_numbers = #tpu.dot_dimension_numbers<[0], [0], [1], [1], [0, 1, 1, 1], [], []>} : vector<4x16xf32>, vector<4x16xf32>, vector<16x16xf32> -> vector<16x16xf32>
      %125 = arith.addf %123, %124 : vector<16x16xf32>
      %c0_143 = arith.constant 0 : index
      %c0_144 = arith.constant 0 : index
      %126 = vector.load %arg8[%c0_143, %c0_144] : memref<16x16xf32, #tpu.memory_space<vmem>>, vector<16x16xf32>
      tpu.vector_store %arg8[%c0_143, %c0_144], %125 {strides = array<i32>} : memref<16x16xf32, #tpu.memory_space<vmem>>, vector<16x16xf32>,
      %c0_145 = arith.constant 0 : index
      %c0_146 = arith.constant 0 : index
      %c192 = arith.constant 192 : index
      %127 = vector.load %arg9[%c0_145, %c0_146, %c192] : memref<2x4x256xf32, #tpu.memory_space<vmem>>, vector<1x4x16xf32>
      %128 = vector.shape_cast %127 : vector<1x4x16xf32> to vector<4x16xf32>
      %c1_147 = arith.constant 1 : index
      %c0_148 = arith.constant 0 : index
      %c192_149 = arith.constant 192 : index
      %129 = vector.load %arg9[%c1_147, %c0_148, %c192_149] : memref<2x4x256xf32, #tpu.memory_space<vmem>>, vector<1x4x16xf32>
      %130 = vector.shape_cast %129 : vector<1x4x16xf32> to vector<4x16xf32>
      %c0_150 = arith.constant 0 : index
      %c0_151 = arith.constant 0 : index
      %131 = vector.load %arg8[%c0_150, %c0_151] : memref<16x16xf32, #tpu.memory_space<vmem>>, vector<16x16xf32>
      %cst_152 = arith.constant dense<0.000000e+00> : vector<16x16xf32>
      %132 = tpu.matmul %128, %130, %cst_152 {dimension_numbers = #tpu.dot_dimension_numbers<[0], [0], [1], [1], [0, 1, 1, 1], [], []>} : vector<4x16xf32>, vector<4x16xf32>, vector<16x16xf32> -> vector<16x16xf32>
      %133 = arith.addf %131, %132 : vector<16x16xf32>
      %c0_153 = arith.constant 0 : index
      %c0_154 = arith.constant 0 : index
      %134 = vector.load %arg8[%c0_153, %c0_154] : memref<16x16xf32, #tpu.memory_space<vmem>>, vector<16x16xf32>
      tpu.vector_store %arg8[%c0_153, %c0_154], %133 {strides = array<i32>} : memref<16x16xf32, #tpu.memory_space<vmem>>, vector<16x16xf32>,
      %c0_155 = arith.constant 0 : index
      %c0_156 = arith.constant 0 : index
      %c208 = arith.constant 208 : index
      %135 = vector.load %arg9[%c0_155, %c0_156, %c208] : memref<2x4x256xf32, #tpu.memory_space<vmem>>, vector<1x4x16xf32>
      %136 = vector.shape_cast %135 : vector<1x4x16xf32> to vector<4x16xf32>
      %c1_157 = arith.constant 1 : index
      %c0_158 = arith.constant 0 : index
      %c208_159 = arith.constant 208 : index
      %137 = vector.load %arg9[%c1_157, %c0_158, %c208_159] : memref<2x4x256xf32, #tpu.memory_space<vmem>>, vector<1x4x16xf32>
      %138 = vector.shape_cast %137 : vector<1x4x16xf32> to vector<4x16xf32>
      %c0_160 = arith.constant 0 : index
      %c0_161 = arith.constant 0 : index
      %139 = vector.load %arg8[%c0_160, %c0_161] : memref<16x16xf32, #tpu.memory_space<vmem>>, vector<16x16xf32>
      %cst_162 = arith.constant dense<0.000000e+00> : vector<16x16xf32>
      %140 = tpu.matmul %136, %138, %cst_162 {dimension_numbers = #tpu.dot_dimension_numbers<[0], [0], [1], [1], [0, 1, 1, 1], [], []>} : vector<4x16xf32>, vector<4x16xf32>, vector<16x16xf32> -> vector<16x16xf32>
      %141 = arith.addf %139, %140 : vector<16x16xf32>
      %c0_163 = arith.constant 0 : index
      %c0_164 = arith.constant 0 : index
      %142 = vector.load %arg8[%c0_163, %c0_164] : memref<16x16xf32, #tpu.memory_space<vmem>>, vector<16x16xf32>
      tpu.vector_store %arg8[%c0_163, %c0_164], %141 {strides = array<i32>} : memref<16x16xf32, #tpu.memory_space<vmem>>, vector<16x16xf32>,
      %c0_165 = arith.constant 0 : index
      %c0_166 = arith.constant 0 : index
      %c224 = arith.constant 224 : index
      %143 = vector.load %arg9[%c0_165, %c0_166, %c224] : memref<2x4x256xf32, #tpu.memory_space<vmem>>, vector<1x4x16xf32>
      %144 = vector.shape_cast %143 : vector<1x4x16xf32> to vector<4x16xf32>
      %c1_167 = arith.constant 1 : index
      %c0_168 = arith.constant 0 : index
      %c224_169 = arith.constant 224 : index
      %145 = vector.load %arg9[%c1_167, %c0_168, %c224_169] : memref<2x4x256xf32, #tpu.memory_space<vmem>>, vector<1x4x16xf32>
      %146 = vector.shape_cast %145 : vector<1x4x16xf32> to vector<4x16xf32>
      %c0_170 = arith.constant 0 : index
      %c0_171 = arith.constant 0 : index
      %147 = vector.load %arg8[%c0_170, %c0_171] : memref<16x16xf32, #tpu.memory_space<vmem>>, vector<16x16xf32>
      %cst_172 = arith.constant dense<0.000000e+00> : vector<16x16xf32>
      %148 = tpu.matmul %144, %146, %cst_172 {dimension_numbers = #tpu.dot_dimension_numbers<[0], [0], [1], [1], [0, 1, 1, 1], [], []>} : vector<4x16xf32>, vector<4x16xf32>, vector<16x16xf32> -> vector<16x16xf32>
      %149 = arith.addf %147, %148 : vector<16x16xf32>
      %c0_173 = arith.constant 0 : index
      %c0_174 = arith.constant 0 : index
      %150 = vector.load %arg8[%c0_173, %c0_174] : memref<16x16xf32, #tpu.memory_space<vmem>>, vector<16x16xf32>
      tpu.vector_store %arg8[%c0_173, %c0_174], %149 {strides = array<i32>} : memref<16x16xf32, #tpu.memory_space<vmem>>, vector<16x16xf32>,
      %c0_175 = arith.constant 0 : index
      %c0_176 = arith.constant 0 : index
      %c240 = arith.constant 240 : index
      %151 = vector.load %arg9[%c0_175, %c0_176, %c240] : memref<2x4x256xf32, #tpu.memory_space<vmem>>, vector<1x4x16xf32>
      %152 = vector.shape_cast %151 : vector<1x4x16xf32> to vector<4x16xf32>
      %c1_177 = arith.constant 1 : index
      %c0_178 = arith.constant 0 : index
      %c240_179 = arith.constant 240 : index
      %153 = vector.load %arg9[%c1_177, %c0_178, %c240_179] : memref<2x4x256xf32, #tpu.memory_space<vmem>>, vector<1x4x16xf32>
      %154 = vector.shape_cast %153 : vector<1x4x16xf32> to vector<4x16xf32>
      %c0_180 = arith.constant 0 : index
      %c0_181 = arith.constant 0 : index
      %155 = vector.load %arg8[%c0_180, %c0_181] : memref<16x16xf32, #tpu.memory_space<vmem>>, vector<16x16xf32>
      %cst_182 = arith.constant dense<0.000000e+00> : vector<16x16xf32>
      %156 = tpu.matmul %152, %154, %cst_182 {dimension_numbers = #tpu.dot_dimension_numbers<[0], [0], [1], [1], [0, 1, 1, 1], [], []>} : vector<4x16xf32>, vector<4x16xf32>, vector<16x16xf32> -> vector<16x16xf32>
      %157 = arith.addf %155, %156 : vector<16x16xf32>
      %c0_183 = arith.constant 0 : index
      %c0_184 = arith.constant 0 : index
      %158 = vector.load %arg8[%c0_183, %c0_184] : memref<16x16xf32, #tpu.memory_space<vmem>>, vector<16x16xf32>
      tpu.vector_store %arg8[%c0_183, %c0_184], %157 {strides = array<i32>} : memref<16x16xf32, #tpu.memory_space<vmem>>, vector<16x16xf32>,
      %c0_i32_185 = arith.constant 0 : i32
      %159 = arith.cmpi eq, %arg2, %c0_i32_185 : i32
      %160 = arith.extui %159 : i1 to i32
      %c0_i32_186 = arith.constant 0 : i32
      %161 = arith.cmpi ne, %160, %c0_i32_186 : i32
      scf.if %161 {
        %c0_187 = arith.constant 0 : index
        %c0_188 = arith.constant 0 : index
        %162 = vector.load %arg8[%c0_187, %c0_188] : memref<16x16xf32, #tpu.memory_space<vmem>>, vector<16x16xf32>
        %cst_189 = arith.constant dense<0xFF800000> : vector<16xf32>
        %163 = vector.multi_reduction <maximumf>, %162, %cst_189 [1] : vector<16x16xf32> to vector<16xf32>
        %164 = vector.shape_cast %163 : vector<16xf32> to vector<16x1xf32>
        %165 = vector.broadcast %164 : vector<16x1xf32> to vector<16x16xf32>
        %166 = arith.subf %162, %165 : vector<16x16xf32>
        %167 = math.exp %166 : vector<16x16xf32>
        %cst_190 = arith.constant dense<0.000000e+00> : vector<16xf32>
        %168 = vector.multi_reduction <add>, %167, %cst_190 [1] : vector<16x16xf32> to vector<16xf32>
        %169 = vector.shape_cast %168 : vector<16xf32> to vector<16x1xf32>
        %170 = tpu.reciprocal %169 {approx = true} : vector<16x1xf32> -> vector<16x1xf32>
        %171 = vector.broadcast %170 : vector<16x1xf32> to vector<16x16xf32>
        %172 = arith.mulf %167, %171 : vector<16x16xf32>
        %c0_191 = arith.constant 0 : index
        %c0_192 = arith.constant 0 : index
        %173 = vector.load %arg8[%c0_191, %c0_192] : memref<16x16xf32, #tpu.memory_space<vmem>>, vector<16x16xf32>
        tpu.vector_store %arg8[%c0_191, %c0_192], %172 {strides = array<i32>} : memref<16x16xf32, #tpu.memory_space<vmem>>, vector<16x16xf32>,
      } else {
      }
    } else {
    }
    %c1_i32 = arith.constant 1 : i32
    %5 = arith.cmpi eq, %arg1, %c1_i32 : i32
    %6 = arith.extui %5 : i1 to i32
    %c0_i32_3 = arith.constant 0 : i32
    %7 = arith.cmpi ne, %6, %c0_i32_3 : i32
    scf.if %7 {
      %c0_4 = arith.constant 0 : index
      %c0_5 = arith.constant 0 : index
      %8 = vector.load %arg8[%c0_4, %c0_5] : memref<16x16xf32, #tpu.memory_space<vmem>>, vector<16x16xf32>
      %c2 = arith.constant 2 : index
      %c0_6 = arith.constant 0 : index
      %c0_7 = arith.constant 0 : index
      %9 = vector.load %arg4[%c2, %c0_6, %c0_7] : memref<3x4x4xf32, #tpu.memory_space<vmem>>, vector<1x4x4xf32>
      %10 = vector.shape_cast %9 : vector<1x4x4xf32> to vector<4x4xf32>
      %cst = arith.constant dense<0.000000e+00> : vector<4x256xf32>
      %11 = tpu.matmul %10, %1, %cst {dimension_numbers = #tpu.dot_dimension_numbers<[1], [0], [0], [1], [0, 0, 1, 1], [], []>} : vector<4x4xf32>, vector<4x256xf32>, vector<4x256xf32> -> vector<4x256xf32>
      %c2_8 = arith.constant 2 : index
      %c0_9 = arith.constant 0 : index
      %c0_10 = arith.constant 0 : index
      %12 = vector.load %arg5[%c2_8, %c0_9, %c0_10] : memref<3x4x1xf32, #tpu.memory_space<vmem>>, vector<1x4x1xf32>
      %13 = vector.shape_cast %12 : vector<1x4x1xf32> to vector<4x1xf32>
      %14 = vector.broadcast %13 : vector<4x1xf32> to vector<4x256xf32>
      %15 = arith.addf %11, %14 : vector<4x256xf32>
      %c0_11 = arith.constant 0 : index
      %c0_12 = arith.constant 0 : index
      %c0_13 = arith.constant 0 : index
      %16 = vector.load %arg9[%c0_11, %c0_12, %c0_13] : memref<2x4x256xf32, #tpu.memory_space<vmem>>, vector<1x4x256xf32>
      %17 = vector.shape_cast %16 : vector<1x4x256xf32> to vector<4x256xf32>
      %18 = vector.shape_cast %15 : vector<4x256xf32> to vector<1x4x256xf32>
      tpu.vector_store %arg9[%c0_11, %c0_12, %c0_13], %18 {strides = array<i32>} : memref<2x4x256xf32, #tpu.memory_space<vmem>>, vector<1x4x256xf32>,
      %c0_14 = arith.constant 0 : index
      %19 = memref.load %arg6[%c0_14] : memref<1xf32, #tpu.memory_space<smem>>
      %c0_15 = arith.constant 0 : index
      %c0_16 = arith.constant 0 : index
      %c0_17 = arith.constant 0 : index
      %20 = vector.load %arg9[%c0_15, %c0_16, %c0_17] : memref<2x4x256xf32, #tpu.memory_space<vmem>>, vector<1x4x16xf32>
      %21 = vector.shape_cast %20 : vector<1x4x16xf32> to vector<4x16xf32>
      %cst_18 = arith.constant dense<0.000000e+00> : vector<4x16xf32>
      %22 = tpu.matmul %21, %8, %cst_18 {dimension_numbers = #tpu.dot_dimension_numbers<[1], [1], [0], [0], [0, 0, 1, 0], [], []>} : vector<4x16xf32>, vector<16x16xf32>, vector<4x16xf32> -> vector<4x16xf32>
      %c0_19 = arith.constant 0 : index
      %c0_20 = arith.constant 0 : index
      %c0_21 = arith.constant 0 : index
      %23 = vector.load %arg3[%c0_19, %c0_20, %c0_21] : memref<1x4x256xf32, #tpu.memory_space<vmem>>, vector<1x4x16xf32>
      %24 = vector.shape_cast %23 : vector<1x4x16xf32> to vector<4x16xf32>
      %25 = vector.broadcast %19 : f32 to vector<4x16xf32>
      %26 = arith.mulf %25, %22 : vector<4x16xf32>
      %27 = arith.addf %26, %24 : vector<4x16xf32>
      %c0_22 = arith.constant 0 : index
      %c0_23 = arith.constant 0 : index
      %c0_24 = arith.constant 0 : index
      %28 = vector.load %arg7[%c0_22, %c0_23, %c0_24] : memref<1x4x256xf32, #tpu.memory_space<vmem>>, vector<1x4x16xf32>
      %29 = vector.shape_cast %28 : vector<1x4x16xf32> to vector<4x16xf32>
      %30 = vector.shape_cast %27 : vector<4x16xf32> to vector<1x4x16xf32>
      tpu.vector_store %arg7[%c0_22, %c0_23, %c0_24], %30 {strides = array<i32>} : memref<1x4x256xf32, #tpu.memory_space<vmem>>, vector<1x4x16xf32>,
      %c0_25 = arith.constant 0 : index
      %c0_26 = arith.constant 0 : index
      %c16 = arith.constant 16 : index
      %31 = vector.load %arg9[%c0_25, %c0_26, %c16] : memref<2x4x256xf32, #tpu.memory_space<vmem>>, vector<1x4x16xf32>
      %32 = vector.shape_cast %31 : vector<1x4x16xf32> to vector<4x16xf32>
      %cst_27 = arith.constant dense<0.000000e+00> : vector<4x16xf32>
      %33 = tpu.matmul %32, %8, %cst_27 {dimension_numbers = #tpu.dot_dimension_numbers<[1], [1], [0], [0], [0, 0, 1, 0], [], []>} : vector<4x16xf32>, vector<16x16xf32>, vector<4x16xf32> -> vector<4x16xf32>
      %c0_28 = arith.constant 0 : index
      %c0_29 = arith.constant 0 : index
      %c16_30 = arith.constant 16 : index
      %34 = vector.load %arg3[%c0_28, %c0_29, %c16_30] : memref<1x4x256xf32, #tpu.memory_space<vmem>>, vector<1x4x16xf32>
      %35 = vector.shape_cast %34 : vector<1x4x16xf32> to vector<4x16xf32>
      %36 = vector.broadcast %19 : f32 to vector<4x16xf32>
      %37 = arith.mulf %36, %33 : vector<4x16xf32>
      %38 = arith.addf %37, %35 : vector<4x16xf32>
      %c0_31 = arith.constant 0 : index
      %c0_32 = arith.constant 0 : index
      %c16_33 = arith.constant 16 : index
      %39 = vector.load %arg7[%c0_31, %c0_32, %c16_33] : memref<1x4x256xf32, #tpu.memory_space<vmem>>, vector<1x4x16xf32>
      %40 = vector.shape_cast %39 : vector<1x4x16xf32> to vector<4x16xf32>
      %41 = vector.shape_cast %38 : vector<4x16xf32> to vector<1x4x16xf32>
      tpu.vector_store %arg7[%c0_31, %c0_32, %c16_33], %41 {strides = array<i32>} : memref<1x4x256xf32, #tpu.memory_space<vmem>>, vector<1x4x16xf32>,
      %c0_34 = arith.constant 0 : index
      %c0_35 = arith.constant 0 : index
      %c32 = arith.constant 32 : index
      %42 = vector.load %arg9[%c0_34, %c0_35, %c32] : memref<2x4x256xf32, #tpu.memory_space<vmem>>, vector<1x4x16xf32>
      %43 = vector.shape_cast %42 : vector<1x4x16xf32> to vector<4x16xf32>
      %cst_36 = arith.constant dense<0.000000e+00> : vector<4x16xf32>
      %44 = tpu.matmul %43, %8, %cst_36 {dimension_numbers = #tpu.dot_dimension_numbers<[1], [1], [0], [0], [0, 0, 1, 0], [], []>} : vector<4x16xf32>, vector<16x16xf32>, vector<4x16xf32> -> vector<4x16xf32>
      %c0_37 = arith.constant 0 : index
      %c0_38 = arith.constant 0 : index
      %c32_39 = arith.constant 32 : index
      %45 = vector.load %arg3[%c0_37, %c0_38, %c32_39] : memref<1x4x256xf32, #tpu.memory_space<vmem>>, vector<1x4x16xf32>
      %46 = vector.shape_cast %45 : vector<1x4x16xf32> to vector<4x16xf32>
      %47 = vector.broadcast %19 : f32 to vector<4x16xf32>
      %48 = arith.mulf %47, %44 : vector<4x16xf32>
      %49 = arith.addf %48, %46 : vector<4x16xf32>
      %c0_40 = arith.constant 0 : index
      %c0_41 = arith.constant 0 : index
      %c32_42 = arith.constant 32 : index
      %50 = vector.load %arg7[%c0_40, %c0_41, %c32_42] : memref<1x4x256xf32, #tpu.memory_space<vmem>>, vector<1x4x16xf32>
      %51 = vector.shape_cast %50 : vector<1x4x16xf32> to vector<4x16xf32>
      %52 = vector.shape_cast %49 : vector<4x16xf32> to vector<1x4x16xf32>
      tpu.vector_store %arg7[%c0_40, %c0_41, %c32_42], %52 {strides = array<i32>} : memref<1x4x256xf32, #tpu.memory_space<vmem>>, vector<1x4x16xf32>,
      %c0_43 = arith.constant 0 : index
      %c0_44 = arith.constant 0 : index
      %c48 = arith.constant 48 : index
      %53 = vector.load %arg9[%c0_43, %c0_44, %c48] : memref<2x4x256xf32, #tpu.memory_space<vmem>>, vector<1x4x16xf32>
      %54 = vector.shape_cast %53 : vector<1x4x16xf32> to vector<4x16xf32>
      %cst_45 = arith.constant dense<0.000000e+00> : vector<4x16xf32>
      %55 = tpu.matmul %54, %8, %cst_45 {dimension_numbers = #tpu.dot_dimension_numbers<[1], [1], [0], [0], [0, 0, 1, 0], [], []>} : vector<4x16xf32>, vector<16x16xf32>, vector<4x16xf32> -> vector<4x16xf32>
      %c0_46 = arith.constant 0 : index
      %c0_47 = arith.constant 0 : index
      %c48_48 = arith.constant 48 : index
      %56 = vector.load %arg3[%c0_46, %c0_47, %c48_48] : memref<1x4x256xf32, #tpu.memory_space<vmem>>, vector<1x4x16xf32>
      %57 = vector.shape_cast %56 : vector<1x4x16xf32> to vector<4x16xf32>
      %58 = vector.broadcast %19 : f32 to vector<4x16xf32>
      %59 = arith.mulf %58, %55 : vector<4x16xf32>
      %60 = arith.addf %59, %57 : vector<4x16xf32>
      %c0_49 = arith.constant 0 : index
      %c0_50 = arith.constant 0 : index
      %c48_51 = arith.constant 48 : index
      %61 = vector.load %arg7[%c0_49, %c0_50, %c48_51] : memref<1x4x256xf32, #tpu.memory_space<vmem>>, vector<1x4x16xf32>
      %62 = vector.shape_cast %61 : vector<1x4x16xf32> to vector<4x16xf32>
      %63 = vector.shape_cast %60 : vector<4x16xf32> to vector<1x4x16xf32>
      tpu.vector_store %arg7[%c0_49, %c0_50, %c48_51], %63 {strides = array<i32>} : memref<1x4x256xf32, #tpu.memory_space<vmem>>, vector<1x4x16xf32>,
      %c0_52 = arith.constant 0 : index
      %c0_53 = arith.constant 0 : index
      %c64 = arith.constant 64 : index
      %64 = vector.load %arg9[%c0_52, %c0_53, %c64] : memref<2x4x256xf32, #tpu.memory_space<vmem>>, vector<1x4x16xf32>
      %65 = vector.shape_cast %64 : vector<1x4x16xf32> to vector<4x16xf32>
      %cst_54 = arith.constant dense<0.000000e+00> : vector<4x16xf32>
      %66 = tpu.matmul %65, %8, %cst_54 {dimension_numbers = #tpu.dot_dimension_numbers<[1], [1], [0], [0], [0, 0, 1, 0], [], []>} : vector<4x16xf32>, vector<16x16xf32>, vector<4x16xf32> -> vector<4x16xf32>
      %c0_55 = arith.constant 0 : index
      %c0_56 = arith.constant 0 : index
      %c64_57 = arith.constant 64 : index
      %67 = vector.load %arg3[%c0_55, %c0_56, %c64_57] : memref<1x4x256xf32, #tpu.memory_space<vmem>>, vector<1x4x16xf32>
      %68 = vector.shape_cast %67 : vector<1x4x16xf32> to vector<4x16xf32>
      %69 = vector.broadcast %19 : f32 to vector<4x16xf32>
      %70 = arith.mulf %69, %66 : vector<4x16xf32>
      %71 = arith.addf %70, %68 : vector<4x16xf32>
      %c0_58 = arith.constant 0 : index
      %c0_59 = arith.constant 0 : index
      %c64_60 = arith.constant 64 : index
      %72 = vector.load %arg7[%c0_58, %c0_59, %c64_60] : memref<1x4x256xf32, #tpu.memory_space<vmem>>, vector<1x4x16xf32>
      %73 = vector.shape_cast %72 : vector<1x4x16xf32> to vector<4x16xf32>
      %74 = vector.shape_cast %71 : vector<4x16xf32> to vector<1x4x16xf32>
      tpu.vector_store %arg7[%c0_58, %c0_59, %c64_60], %74 {strides = array<i32>} : memref<1x4x256xf32, #tpu.memory_space<vmem>>, vector<1x4x16xf32>,
      %c0_61 = arith.constant 0 : index
      %c0_62 = arith.constant 0 : index
      %c80 = arith.constant 80 : index
      %75 = vector.load %arg9[%c0_61, %c0_62, %c80] : memref<2x4x256xf32, #tpu.memory_space<vmem>>, vector<1x4x16xf32>
      %76 = vector.shape_cast %75 : vector<1x4x16xf32> to vector<4x16xf32>
      %cst_63 = arith.constant dense<0.000000e+00> : vector<4x16xf32>
      %77 = tpu.matmul %76, %8, %cst_63 {dimension_numbers = #tpu.dot_dimension_numbers<[1], [1], [0], [0], [0, 0, 1, 0], [], []>} : vector<4x16xf32>, vector<16x16xf32>, vector<4x16xf32> -> vector<4x16xf32>
      %c0_64 = arith.constant 0 : index
      %c0_65 = arith.constant 0 : index
      %c80_66 = arith.constant 80 : index
      %78 = vector.load %arg3[%c0_64, %c0_65, %c80_66] : memref<1x4x256xf32, #tpu.memory_space<vmem>>, vector<1x4x16xf32>
      %79 = vector.shape_cast %78 : vector<1x4x16xf32> to vector<4x16xf32>
      %80 = vector.broadcast %19 : f32 to vector<4x16xf32>
      %81 = arith.mulf %80, %77 : vector<4x16xf32>
      %82 = arith.addf %81, %79 : vector<4x16xf32>
      %c0_67 = arith.constant 0 : index
      %c0_68 = arith.constant 0 : index
      %c80_69 = arith.constant 80 : index
      %83 = vector.load %arg7[%c0_67, %c0_68, %c80_69] : memref<1x4x256xf32, #tpu.memory_space<vmem>>, vector<1x4x16xf32>
      %84 = vector.shape_cast %83 : vector<1x4x16xf32> to vector<4x16xf32>
      %85 = vector.shape_cast %82 : vector<4x16xf32> to vector<1x4x16xf32>
      tpu.vector_store %arg7[%c0_67, %c0_68, %c80_69], %85 {strides = array<i32>} : memref<1x4x256xf32, #tpu.memory_space<vmem>>, vector<1x4x16xf32>,
      %c0_70 = arith.constant 0 : index
      %c0_71 = arith.constant 0 : index
      %c96 = arith.constant 96 : index
      %86 = vector.load %arg9[%c0_70, %c0_71, %c96] : memref<2x4x256xf32, #tpu.memory_space<vmem>>, vector<1x4x16xf32>
      %87 = vector.shape_cast %86 : vector<1x4x16xf32> to vector<4x16xf32>
      %cst_72 = arith.constant dense<0.000000e+00> : vector<4x16xf32>
      %88 = tpu.matmul %87, %8, %cst_72 {dimension_numbers = #tpu.dot_dimension_numbers<[1], [1], [0], [0], [0, 0, 1, 0], [], []>} : vector<4x16xf32>, vector<16x16xf32>, vector<4x16xf32> -> vector<4x16xf32>
      %c0_73 = arith.constant 0 : index
      %c0_74 = arith.constant 0 : index
      %c96_75 = arith.constant 96 : index
      %89 = vector.load %arg3[%c0_73, %c0_74, %c96_75] : memref<1x4x256xf32, #tpu.memory_space<vmem>>, vector<1x4x16xf32>
      %90 = vector.shape_cast %89 : vector<1x4x16xf32> to vector<4x16xf32>
      %91 = vector.broadcast %19 : f32 to vector<4x16xf32>
      %92 = arith.mulf %91, %88 : vector<4x16xf32>
      %93 = arith.addf %92, %90 : vector<4x16xf32>
      %c0_76 = arith.constant 0 : index
      %c0_77 = arith.constant 0 : index
      %c96_78 = arith.constant 96 : index
      %94 = vector.load %arg7[%c0_76, %c0_77, %c96_78] : memref<1x4x256xf32, #tpu.memory_space<vmem>>, vector<1x4x16xf32>
      %95 = vector.shape_cast %94 : vector<1x4x16xf32> to vector<4x16xf32>
      %96 = vector.shape_cast %93 : vector<4x16xf32> to vector<1x4x16xf32>
      tpu.vector_store %arg7[%c0_76, %c0_77, %c96_78], %96 {strides = array<i32>} : memref<1x4x256xf32, #tpu.memory_space<vmem>>, vector<1x4x16xf32>,
      %c0_79 = arith.constant 0 : index
      %c0_80 = arith.constant 0 : index
      %c112 = arith.constant 112 : index
      %97 = vector.load %arg9[%c0_79, %c0_80, %c112] : memref<2x4x256xf32, #tpu.memory_space<vmem>>, vector<1x4x16xf32>
      %98 = vector.shape_cast %97 : vector<1x4x16xf32> to vector<4x16xf32>
      %cst_81 = arith.constant dense<0.000000e+00> : vector<4x16xf32>
      %99 = tpu.matmul %98, %8, %cst_81 {dimension_numbers = #tpu.dot_dimension_numbers<[1], [1], [0], [0], [0, 0, 1, 0], [], []>} : vector<4x16xf32>, vector<16x16xf32>, vector<4x16xf32> -> vector<4x16xf32>
      %c0_82 = arith.constant 0 : index
      %c0_83 = arith.constant 0 : index
      %c112_84 = arith.constant 112 : index
      %100 = vector.load %arg3[%c0_82, %c0_83, %c112_84] : memref<1x4x256xf32, #tpu.memory_space<vmem>>, vector<1x4x16xf32>
      %101 = vector.shape_cast %100 : vector<1x4x16xf32> to vector<4x16xf32>
      %102 = vector.broadcast %19 : f32 to vector<4x16xf32>
      %103 = arith.mulf %102, %99 : vector<4x16xf32>
      %104 = arith.addf %103, %101 : vector<4x16xf32>
      %c0_85 = arith.constant 0 : index
      %c0_86 = arith.constant 0 : index
      %c112_87 = arith.constant 112 : index
      %105 = vector.load %arg7[%c0_85, %c0_86, %c112_87] : memref<1x4x256xf32, #tpu.memory_space<vmem>>, vector<1x4x16xf32>
      %106 = vector.shape_cast %105 : vector<1x4x16xf32> to vector<4x16xf32>
      %107 = vector.shape_cast %104 : vector<4x16xf32> to vector<1x4x16xf32>
      tpu.vector_store %arg7[%c0_85, %c0_86, %c112_87], %107 {strides = array<i32>} : memref<1x4x256xf32, #tpu.memory_space<vmem>>, vector<1x4x16xf32>,
      %c0_88 = arith.constant 0 : index
      %c0_89 = arith.constant 0 : index
      %c128 = arith.constant 128 : index
      %108 = vector.load %arg9[%c0_88, %c0_89, %c128] : memref<2x4x256xf32, #tpu.memory_space<vmem>>, vector<1x4x16xf32>
      %109 = vector.shape_cast %108 : vector<1x4x16xf32> to vector<4x16xf32>
      %cst_90 = arith.constant dense<0.000000e+00> : vector<4x16xf32>
      %110 = tpu.matmul %109, %8, %cst_90 {dimension_numbers = #tpu.dot_dimension_numbers<[1], [1], [0], [0], [0, 0, 1, 0], [], []>} : vector<4x16xf32>, vector<16x16xf32>, vector<4x16xf32> -> vector<4x16xf32>
      %c0_91 = arith.constant 0 : index
      %c0_92 = arith.constant 0 : index
      %c128_93 = arith.constant 128 : index
      %111 = vector.load %arg3[%c0_91, %c0_92, %c128_93] : memref<1x4x256xf32, #tpu.memory_space<vmem>>, vector<1x4x16xf32>
      %112 = vector.shape_cast %111 : vector<1x4x16xf32> to vector<4x16xf32>
      %113 = vector.broadcast %19 : f32 to vector<4x16xf32>
      %114 = arith.mulf %113, %110 : vector<4x16xf32>
      %115 = arith.addf %114, %112 : vector<4x16xf32>
      %c0_94 = arith.constant 0 : index
      %c0_95 = arith.constant 0 : index
      %c128_96 = arith.constant 128 : index
      %116 = vector.load %arg7[%c0_94, %c0_95, %c128_96] : memref<1x4x256xf32, #tpu.memory_space<vmem>>, vector<1x4x16xf32>
      %117 = vector.shape_cast %116 : vector<1x4x16xf32> to vector<4x16xf32>
      %118 = vector.shape_cast %115 : vector<4x16xf32> to vector<1x4x16xf32>
      tpu.vector_store %arg7[%c0_94, %c0_95, %c128_96], %118 {strides = array<i32>} : memref<1x4x256xf32, #tpu.memory_space<vmem>>, vector<1x4x16xf32>,
      %c0_97 = arith.constant 0 : index
      %c0_98 = arith.constant 0 : index
      %c144 = arith.constant 144 : index
      %119 = vector.load %arg9[%c0_97, %c0_98, %c144] : memref<2x4x256xf32, #tpu.memory_space<vmem>>, vector<1x4x16xf32>
      %120 = vector.shape_cast %119 : vector<1x4x16xf32> to vector<4x16xf32>
      %cst_99 = arith.constant dense<0.000000e+00> : vector<4x16xf32>
      %121 = tpu.matmul %120, %8, %cst_99 {dimension_numbers = #tpu.dot_dimension_numbers<[1], [1], [0], [0], [0, 0, 1, 0], [], []>} : vector<4x16xf32>, vector<16x16xf32>, vector<4x16xf32> -> vector<4x16xf32>
      %c0_100 = arith.constant 0 : index
      %c0_101 = arith.constant 0 : index
      %c144_102 = arith.constant 144 : index
      %122 = vector.load %arg3[%c0_100, %c0_101, %c144_102] : memref<1x4x256xf32, #tpu.memory_space<vmem>>, vector<1x4x16xf32>
      %123 = vector.shape_cast %122 : vector<1x4x16xf32> to vector<4x16xf32>
      %124 = vector.broadcast %19 : f32 to vector<4x16xf32>
      %125 = arith.mulf %124, %121 : vector<4x16xf32>
      %126 = arith.addf %125, %123 : vector<4x16xf32>
      %c0_103 = arith.constant 0 : index
      %c0_104 = arith.constant 0 : index
      %c144_105 = arith.constant 144 : index
      %127 = vector.load %arg7[%c0_103, %c0_104, %c144_105] : memref<1x4x256xf32, #tpu.memory_space<vmem>>, vector<1x4x16xf32>
      %128 = vector.shape_cast %127 : vector<1x4x16xf32> to vector<4x16xf32>
      %129 = vector.shape_cast %126 : vector<4x16xf32> to vector<1x4x16xf32>
      tpu.vector_store %arg7[%c0_103, %c0_104, %c144_105], %129 {strides = array<i32>} : memref<1x4x256xf32, #tpu.memory_space<vmem>>, vector<1x4x16xf32>,
      %c0_106 = arith.constant 0 : index
      %c0_107 = arith.constant 0 : index
      %c160 = arith.constant 160 : index
      %130 = vector.load %arg9[%c0_106, %c0_107, %c160] : memref<2x4x256xf32, #tpu.memory_space<vmem>>, vector<1x4x16xf32>
      %131 = vector.shape_cast %130 : vector<1x4x16xf32> to vector<4x16xf32>
      %cst_108 = arith.constant dense<0.000000e+00> : vector<4x16xf32>
      %132 = tpu.matmul %131, %8, %cst_108 {dimension_numbers = #tpu.dot_dimension_numbers<[1], [1], [0], [0], [0, 0, 1, 0], [], []>} : vector<4x16xf32>, vector<16x16xf32>, vector<4x16xf32> -> vector<4x16xf32>
      %c0_109 = arith.constant 0 : index
      %c0_110 = arith.constant 0 : index
      %c160_111 = arith.constant 160 : index
      %133 = vector.load %arg3[%c0_109, %c0_110, %c160_111] : memref<1x4x256xf32, #tpu.memory_space<vmem>>, vector<1x4x16xf32>
      %134 = vector.shape_cast %133 : vector<1x4x16xf32> to vector<4x16xf32>
      %135 = vector.broadcast %19 : f32 to vector<4x16xf32>
      %136 = arith.mulf %135, %132 : vector<4x16xf32>
      %137 = arith.addf %136, %134 : vector<4x16xf32>
      %c0_112 = arith.constant 0 : index
      %c0_113 = arith.constant 0 : index
      %c160_114 = arith.constant 160 : index
      %138 = vector.load %arg7[%c0_112, %c0_113, %c160_114] : memref<1x4x256xf32, #tpu.memory_space<vmem>>, vector<1x4x16xf32>
      %139 = vector.shape_cast %138 : vector<1x4x16xf32> to vector<4x16xf32>
      %140 = vector.shape_cast %137 : vector<4x16xf32> to vector<1x4x16xf32>
      tpu.vector_store %arg7[%c0_112, %c0_113, %c160_114], %140 {strides = array<i32>} : memref<1x4x256xf32, #tpu.memory_space<vmem>>, vector<1x4x16xf32>,
      %c0_115 = arith.constant 0 : index
      %c0_116 = arith.constant 0 : index
      %c176 = arith.constant 176 : index
      %141 = vector.load %arg9[%c0_115, %c0_116, %c176] : memref<2x4x256xf32, #tpu.memory_space<vmem>>, vector<1x4x16xf32>
      %142 = vector.shape_cast %141 : vector<1x4x16xf32> to vector<4x16xf32>
      %cst_117 = arith.constant dense<0.000000e+00> : vector<4x16xf32>
      %143 = tpu.matmul %142, %8, %cst_117 {dimension_numbers = #tpu.dot_dimension_numbers<[1], [1], [0], [0], [0, 0, 1, 0], [], []>} : vector<4x16xf32>, vector<16x16xf32>, vector<4x16xf32> -> vector<4x16xf32>
      %c0_118 = arith.constant 0 : index
      %c0_119 = arith.constant 0 : index
      %c176_120 = arith.constant 176 : index
      %144 = vector.load %arg3[%c0_118, %c0_119, %c176_120] : memref<1x4x256xf32, #tpu.memory_space<vmem>>, vector<1x4x16xf32>
      %145 = vector.shape_cast %144 : vector<1x4x16xf32> to vector<4x16xf32>
      %146 = vector.broadcast %19 : f32 to vector<4x16xf32>
      %147 = arith.mulf %146, %143 : vector<4x16xf32>
      %148 = arith.addf %147, %145 : vector<4x16xf32>
      %c0_121 = arith.constant 0 : index
      %c0_122 = arith.constant 0 : index
      %c176_123 = arith.constant 176 : index
      %149 = vector.load %arg7[%c0_121, %c0_122, %c176_123] : memref<1x4x256xf32, #tpu.memory_space<vmem>>, vector<1x4x16xf32>
      %150 = vector.shape_cast %149 : vector<1x4x16xf32> to vector<4x16xf32>
      %151 = vector.shape_cast %148 : vector<4x16xf32> to vector<1x4x16xf32>
      tpu.vector_store %arg7[%c0_121, %c0_122, %c176_123], %151 {strides = array<i32>} : memref<1x4x256xf32, #tpu.memory_space<vmem>>, vector<1x4x16xf32>,
      %c0_124 = arith.constant 0 : index
      %c0_125 = arith.constant 0 : index
      %c192 = arith.constant 192 : index
      %152 = vector.load %arg9[%c0_124, %c0_125, %c192] : memref<2x4x256xf32, #tpu.memory_space<vmem>>, vector<1x4x16xf32>
      %153 = vector.shape_cast %152 : vector<1x4x16xf32> to vector<4x16xf32>
      %cst_126 = arith.constant dense<0.000000e+00> : vector<4x16xf32>
      %154 = tpu.matmul %153, %8, %cst_126 {dimension_numbers = #tpu.dot_dimension_numbers<[1], [1], [0], [0], [0, 0, 1, 0], [], []>} : vector<4x16xf32>, vector<16x16xf32>, vector<4x16xf32> -> vector<4x16xf32>
      %c0_127 = arith.constant 0 : index
      %c0_128 = arith.constant 0 : index
      %c192_129 = arith.constant 192 : index
      %155 = vector.load %arg3[%c0_127, %c0_128, %c192_129] : memref<1x4x256xf32, #tpu.memory_space<vmem>>, vector<1x4x16xf32>
      %156 = vector.shape_cast %155 : vector<1x4x16xf32> to vector<4x16xf32>
      %157 = vector.broadcast %19 : f32 to vector<4x16xf32>
      %158 = arith.mulf %157, %154 : vector<4x16xf32>
      %159 = arith.addf %158, %156 : vector<4x16xf32>
      %c0_130 = arith.constant 0 : index
      %c0_131 = arith.constant 0 : index
      %c192_132 = arith.constant 192 : index
      %160 = vector.load %arg7[%c0_130, %c0_131, %c192_132] : memref<1x4x256xf32, #tpu.memory_space<vmem>>, vector<1x4x16xf32>
      %161 = vector.shape_cast %160 : vector<1x4x16xf32> to vector<4x16xf32>
      %162 = vector.shape_cast %159 : vector<4x16xf32> to vector<1x4x16xf32>
      tpu.vector_store %arg7[%c0_130, %c0_131, %c192_132], %162 {strides = array<i32>} : memref<1x4x256xf32, #tpu.memory_space<vmem>>, vector<1x4x16xf32>,
      %c0_133 = arith.constant 0 : index
      %c0_134 = arith.constant 0 : index
      %c208 = arith.constant 208 : index
      %163 = vector.load %arg9[%c0_133, %c0_134, %c208] : memref<2x4x256xf32, #tpu.memory_space<vmem>>, vector<1x4x16xf32>
      %164 = vector.shape_cast %163 : vector<1x4x16xf32> to vector<4x16xf32>
      %cst_135 = arith.constant dense<0.000000e+00> : vector<4x16xf32>
      %165 = tpu.matmul %164, %8, %cst_135 {dimension_numbers = #tpu.dot_dimension_numbers<[1], [1], [0], [0], [0, 0, 1, 0], [], []>} : vector<4x16xf32>, vector<16x16xf32>, vector<4x16xf32> -> vector<4x16xf32>
      %c0_136 = arith.constant 0 : index
      %c0_137 = arith.constant 0 : index
      %c208_138 = arith.constant 208 : index
      %166 = vector.load %arg3[%c0_136, %c0_137, %c208_138] : memref<1x4x256xf32, #tpu.memory_space<vmem>>, vector<1x4x16xf32>
      %167 = vector.shape_cast %166 : vector<1x4x16xf32> to vector<4x16xf32>
      %168 = vector.broadcast %19 : f32 to vector<4x16xf32>
      %169 = arith.mulf %168, %165 : vector<4x16xf32>
      %170 = arith.addf %169, %167 : vector<4x16xf32>
      %c0_139 = arith.constant 0 : index
      %c0_140 = arith.constant 0 : index
      %c208_141 = arith.constant 208 : index
      %171 = vector.load %arg7[%c0_139, %c0_140, %c208_141] : memref<1x4x256xf32, #tpu.memory_space<vmem>>, vector<1x4x16xf32>
      %172 = vector.shape_cast %171 : vector<1x4x16xf32> to vector<4x16xf32>
      %173 = vector.shape_cast %170 : vector<4x16xf32> to vector<1x4x16xf32>
      tpu.vector_store %arg7[%c0_139, %c0_140, %c208_141], %173 {strides = array<i32>} : memref<1x4x256xf32, #tpu.memory_space<vmem>>, vector<1x4x16xf32>,
      %c0_142 = arith.constant 0 : index
      %c0_143 = arith.constant 0 : index
      %c224 = arith.constant 224 : index
      %174 = vector.load %arg9[%c0_142, %c0_143, %c224] : memref<2x4x256xf32, #tpu.memory_space<vmem>>, vector<1x4x16xf32>
      %175 = vector.shape_cast %174 : vector<1x4x16xf32> to vector<4x16xf32>
      %cst_144 = arith.constant dense<0.000000e+00> : vector<4x16xf32>
      %176 = tpu.matmul %175, %8, %cst_144 {dimension_numbers = #tpu.dot_dimension_numbers<[1], [1], [0], [0], [0, 0, 1, 0], [], []>} : vector<4x16xf32>, vector<16x16xf32>, vector<4x16xf32> -> vector<4x16xf32>
      %c0_145 = arith.constant 0 : index
      %c0_146 = arith.constant 0 : index
      %c224_147 = arith.constant 224 : index
      %177 = vector.load %arg3[%c0_145, %c0_146, %c224_147] : memref<1x4x256xf32, #tpu.memory_space<vmem>>, vector<1x4x16xf32>
      %178 = vector.shape_cast %177 : vector<1x4x16xf32> to vector<4x16xf32>
      %179 = vector.broadcast %19 : f32 to vector<4x16xf32>
      %180 = arith.mulf %179, %176 : vector<4x16xf32>
      %181 = arith.addf %180, %178 : vector<4x16xf32>
      %c0_148 = arith.constant 0 : index
      %c0_149 = arith.constant 0 : index
      %c224_150 = arith.constant 224 : index
      %182 = vector.load %arg7[%c0_148, %c0_149, %c224_150] : memref<1x4x256xf32, #tpu.memory_space<vmem>>, vector<1x4x16xf32>
      %183 = vector.shape_cast %182 : vector<1x4x16xf32> to vector<4x16xf32>
      %184 = vector.shape_cast %181 : vector<4x16xf32> to vector<1x4x16xf32>
      tpu.vector_store %arg7[%c0_148, %c0_149, %c224_150], %184 {strides = array<i32>} : memref<1x4x256xf32, #tpu.memory_space<vmem>>, vector<1x4x16xf32>,
      %c0_151 = arith.constant 0 : index
      %c0_152 = arith.constant 0 : index
      %c240 = arith.constant 240 : index
      %185 = vector.load %arg9[%c0_151, %c0_152, %c240] : memref<2x4x256xf32, #tpu.memory_space<vmem>>, vector<1x4x16xf32>
      %186 = vector.shape_cast %185 : vector<1x4x16xf32> to vector<4x16xf32>
      %cst_153 = arith.constant dense<0.000000e+00> : vector<4x16xf32>
      %187 = tpu.matmul %186, %8, %cst_153 {dimension_numbers = #tpu.dot_dimension_numbers<[1], [1], [0], [0], [0, 0, 1, 0], [], []>} : vector<4x16xf32>, vector<16x16xf32>, vector<4x16xf32> -> vector<4x16xf32>
      %c0_154 = arith.constant 0 : index
      %c0_155 = arith.constant 0 : index
      %c240_156 = arith.constant 240 : index
      %188 = vector.load %arg3[%c0_154, %c0_155, %c240_156] : memref<1x4x256xf32, #tpu.memory_space<vmem>>, vector<1x4x16xf32>
      %189 = vector.shape_cast %188 : vector<1x4x16xf32> to vector<4x16xf32>
      %190 = vector.broadcast %19 : f32 to vector<4x16xf32>
      %191 = arith.mulf %190, %187 : vector<4x16xf32>
      %192 = arith.addf %191, %189 : vector<4x16xf32>
      %c0_157 = arith.constant 0 : index
      %c0_158 = arith.constant 0 : index
      %c240_159 = arith.constant 240 : index
      %193 = vector.load %arg7[%c0_157, %c0_158, %c240_159] : memref<1x4x256xf32, #tpu.memory_space<vmem>>, vector<1x4x16xf32>
      %194 = vector.shape_cast %193 : vector<1x4x16xf32> to vector<4x16xf32>
      %195 = vector.shape_cast %192 : vector<4x16xf32> to vector<1x4x16xf32>
      tpu.vector_store %arg7[%c0_157, %c0_158, %c240_159], %195 {strides = array<i32>} : memref<1x4x256xf32, #tpu.memory_space<vmem>>, vector<1x4x16xf32>,
    } else {
    }
    return
  }
  func.func @transform_0(%arg0: i32, %arg1: i32, %arg2: i32) -> (i32, i32, i32) {
    %c0_i32 = arith.constant 0 : i32
    %c0_i32_0 = arith.constant 0 : i32
    return %arg0, %c0_i32, %arg2 : i32, i32, i32
  }
  func.func @transform_1(%arg0: i32, %arg1: i32, %arg2: i32) -> (i32, i32, i32) {
    %c0_i32 = arith.constant 0 : i32
    %c0_i32_0 = arith.constant 0 : i32
    %c0_i32_1 = arith.constant 0 : i32
    %c0_i32_2 = arith.constant 0 : i32
    return %c0_i32, %c0_i32_0, %c0_i32_1 : i32, i32, i32
  }
  func.func @transform_2(%arg0: i32, %arg1: i32, %arg2: i32) -> (i32, i32, i32) {
    %c0_i32 = arith.constant 0 : i32
    %c0_i32_0 = arith.constant 0 : i32
    %c0_i32_1 = arith.constant 0 : i32
    %c0_i32_2 = arith.constant 0 : i32
    return %c0_i32, %c0_i32_0, %c0_i32_1 : i32, i32, i32
  }
  func.func @transform_3(%arg0: i32, %arg1: i32, %arg2: i32) -> i32 {
    %c0_i32 = arith.constant 0 : i32
    %c0_i32_0 = arith.constant 0 : i32
    return %c0_i32 : i32
  }
  func.func @transform_4(%arg0: i32, %arg1: i32, %arg2: i32) -> (i32, i32, i32) {
    %c0_i32 = arith.constant 0 : i32
    %c0_i32_0 = arith.constant 0 : i32
    return %arg0, %c0_i32, %arg2 : i32, i32, i32
  }
}

</mosaic_0001>

<llo_original>
// kernel: tpu_custom_call.1
$region0: #{tpu_custom_call.1}
  #allocation0 [shape = 'u32[]', space=smem, size = 0x4, offset = 0x4, fixed_abs, tag = 'smem constant byte address 0x4 - core index']
  #allocation1 [shape = 'u32[144,128]{1,0:T(1,128)}', space=vmem, size = 0x12000, scoped, tag = 'internal scratch']
  #allocation2 [shape = 'f32[16,16]{1,0:T(8,128)}', space=vmem, size = 0x2000, scoped, tag = 'scratch operand']
  #allocation3 [shape = 'f32[2,4,256]{2,1,0:T(4,128)}', space=vmem, size = 0x2000, scoped, tag = 'scratch operand']
  #allocation4 [shape = 'f32[1]{0:T(128)S(6)}', space=smem, size = 0x200, scoped, tag = 'scoped memory for tpu_custom_call.1']
  %s0 = inlined_call_operand.vmem [shape: f32[2,4,256], index: 0, kind: input, shape index: {}]
  %s1 = inlined_call_operand.hbm [shape: f32[3,4,4], index: 1, kind: input, shape index: {}]
  %s2 = inlined_call_operand.vmem [shape: f32[3,4,1], index: 2, kind: input, shape index: {}]
  %s3 = inlined_call_operand.<no memory space> [shape: f32[1], index: 3, kind: input, shape index: {}]
  %s4 = inlined_call_operand.hbm [shape: f32[2,4,256], index: 4, kind: output, shape index: {}]
  %s5 = sld [smem:[#allocation0]]
  $region69: #{tpu_custom_call.1} parent=0
    _
  %s7 = ssub.s32 1, %s5
  %s8 = scalar_select 0, %s7, %s5
  %9 = sst [smem:[#allocation4]] %s3
  $region1: #{tpu_custom_call.1} parent=0
    #allocation5 [shape = 'u8[6144]{0}', space=vmem, size = 0x1800, scoped, tag = 'input window, operand 1, single buffered']
    #allocation6 [shape = 's32[2]{0}', space=sflag, size = 0x8, scoped, tag = 'scoped memory for tpu_custom_call.1']
    #allocation7 [shape = 's32[2]{0}', space=sflag, size = 0x8, scoped, tag = 'scoped memory for tpu_custom_call.1']
    #allocation8 [shape = 'u8[8192]{0}', space=vmem, size = 0x2000, scoped, tag = 'output window, operand 0']
    %10 = vsyncpa [#allocation6], 0
    %11 = vsyncpa [#allocation7], 0
    %s12 = scalar_lea.sflag [#allocation7], 1
    %13 = vsyncpa %s12, 0
    loop: start=0, step=1, limit=6
    $region2: #{tpu_custom_call.1} parent=1 // loop_pre_header
      _
    $region3: #{tpu_custom_call.1} parent=1 // loop_header
      %s15 = sphi 0, %s19
      %p16 = scmp.ge.s32.totalorder %s15, 6
      %s22 = sphi 0, %s41
      %s23 = sphi 0, %s37
      %s24 = sphi 0, %s33
      %s25 = sphi 0, %s22
      %s26 = sphi 0, %s23
      %s27 = sphi 0, %s24
      %s28 = sphi 0, %s25
      %s29 = sphi 0, %s26
      %s30 = sphi 0, %s27
      %s46 = sphi 0, %s48
      %s49 = sphi 0, %s46
      %s50 = sphi 0, %s49
      %s66 = sphi 0, %s50
      %s70 = sphi 0, %s70
      %s72 = sphi 0, %s70
      %s73 = sphi 0, %s72
      %s87 = sphi 0, %s73
      %s91 = sphi 0, %s91
      %s93 = sphi 0, %s91
      %s94 = sphi 0, %s93
      %s108 = sphi 0, %s94
      %s112 = sphi 0, %s112
      %s114 = sphi 0, %s112
      %s115 = sphi 0, %s114
      %s129 = sphi 0, %s115
      %s137 = sphi 0, %s139
      %s140 = sphi 0, %s137
      %s141 = sphi 0, %s140
      %s157 = sphi 0, %s141
    $region4: #{tpu_custom_call.1} parent=1 // loop_header_branch
      %18 = sbr.rel (%p16) target = $region8
    $region5: #{tpu_custom_call.1} parent=1 // loop_body
      %s20 = ssub.s32 %s15, 1
      %s21 = ssub.s32 %s15, 2
      %s31 = sadd.s32 1, %s24
      %p32 = scmp.ge.s32.totalorder %s31, 1
      %s33 = scalar_select %p32, 0, %s31
      %s34 = sadd.s32 1, %s23
      %s35 = scalar_select %p32, %s34, %s23
      %p36 = scmp.ge.s32.totalorder %s35, 2
      %s37 = scalar_select %p36, 0, %s35
      %s38 = sadd.s32 1, %s22
      %s39 = scalar_select %p36, %s38, %s22
      %p40 = scmp.ge.s32.totalorder %s39, 2
      %s41 = scalar_select %p40, 0, %s39
      %s42 = ssub.s32 %s22, %s41
      %s43 = ssub.s32 %s24, %s33
      %s44 = sor.u32 %s42, %s43
      %p45 = scmp.eq.s32.totalorder %s44, 0
      %s47 = sadd.s32 %s46, 1
      %s48 = scalar_select %p45, %s46, %s47
      %p51 = pneg %p45
      %p52 = scmp.eq.s32.totalorder %s15, 3
      %p53 = por %p51, %p52
      %p54 = scmp.ne.s32.totalorder %s46, %s49
      %p55 = scmp.eq.s32.totalorder %s15, 0
      %p56 = por %p54, %p55
      %p57 = scmp.ne.s32.totalorder %s46, %s49
      %p58 = scmp.eq.s32.totalorder %s20, 3
      %p59 = por %p57, %p58
      %p60 = scmp.ne.s32.totalorder %s49, %s50
      %p61 = scmp.eq.s32.totalorder %s20, 0
      %p62 = por %p60, %p61
      %p63 = scmp.ne.s32.totalorder %s49, %s50
      %p64 = scmp.eq.s32.totalorder %s21, 3
      %p65 = por %p63, %p64
      %p67 = scmp.ne.s32.totalorder %s50, %s66
      %p68 = scmp.eq.s32.totalorder %s21, 0
      %p69 = por %p67, %p68
      %s71 = sadd.s32 %s70, 1
      %p74 = scmp.eq.s32.totalorder %s15, 3
      %p75 = scmp.ne.s32.totalorder %s70, %s72
      %p76 = scmp.eq.s32.totalorder %s15, 0
      %p77 = por %p75, %p76
      %p78 = scmp.ne.s32.totalorder %s70, %s72
      %p79 = scmp.eq.s32.totalorder %s20, 3
      %p80 = por %p78, %p79
      %p81 = scmp.ne.s32.totalorder %s72, %s73
      %p82 = scmp.eq.s32.totalorder %s20, 0
      %p83 = por %p81, %p82
      %p84 = scmp.ne.s32.totalorder %s72, %s73
      %p85 = scmp.eq.s32.totalorder %s21, 3
      %p86 = por %p84, %p85
      %p88 = scmp.ne.s32.totalorder %s73, %s87
      %p89 = scmp.eq.s32.totalorder %s21, 0
      %p90 = por %p88, %p89
      %s92 = sadd.s32 %s91, 1
      %p95 = scmp.eq.s32.totalorder %s15, 3
      %p96 = scmp.ne.s32.totalorder %s91, %s93
      %p97 = scmp.eq.s32.totalorder %s15, 0
      %p98 = por %p96, %p97
      %p99 = scmp.ne.s32.totalorder %s91, %s93
      %p100 = scmp.eq.s32.totalorder %s20, 3
      %p101 = por %p99, %p100
      %p102 = scmp.ne.s32.totalorder %s93, %s94
      %p103 = scmp.eq.s32.totalorder %s20, 0
      %p104 = por %p102, %p103
      %p105 = scmp.ne.s32.totalorder %s93, %s94
      %p106 = scmp.eq.s32.totalorder %s21, 3
      %p107 = por %p105, %p106
      %p109 = scmp.ne.s32.totalorder %s94, %s108
      %p110 = scmp.eq.s32.totalorder %s21, 0
      %p111 = por %p109, %p110
      %s113 = sadd.s32 %s112, 1
      %p116 = scmp.eq.s32.totalorder %s15, 3
      %p117 = scmp.ne.s32.totalorder %s112, %s114
      %p118 = scmp.eq.s32.totalorder %s15, 0
      %p119 = por %p117, %p118
      %p120 = scmp.ne.s32.totalorder %s112, %s114
      %p121 = scmp.eq.s32.totalorder %s20, 3
      %p122 = por %p120, %p121
      %p123 = scmp.ne.s32.totalorder %s114, %s115
      %p124 = scmp.eq.s32.totalorder %s20, 0
      %p125 = por %p123, %p124
      %p126 = scmp.ne.s32.totalorder %s114, %s115
      %p127 = scmp.eq.s32.totalorder %s21, 3
      %p128 = por %p126, %p127
      %p130 = scmp.ne.s32.totalorder %s115, %s129
      %p131 = scmp.eq.s32.totalorder %s21, 0
      %p132 = por %p130, %p131
      %s133 = ssub.s32 %s22, %s41
      %s134 = ssub.s32 %s24, %s33
      %s135 = sor.u32 %s133, %s134
      %p136 = scmp.eq.s32.totalorder %s135, 0
      %s138 = sadd.s32 %s137, 1
      %s139 = scalar_select %p136, %s137, %s138
      %p142 = pneg %p136
      %p143 = scmp.eq.s32.totalorder %s15, 3
      %p144 = por %p142, %p143
      %p145 = scmp.ne.s32.totalorder %s137, %s140
      %p146 = scmp.eq.s32.totalorder %s15, 0
      %p147 = por %p145, %p146
      %p148 = scmp.ne.s32.totalorder %s137, %s140
      %p149 = scmp.eq.s32.totalorder %s20, 3
      %p150 = por %p148, %p149
      %p151 = scmp.ne.s32.totalorder %s140, %s141
      %p152 = scmp.eq.s32.totalorder %s20, 0
      %p153 = por %p151, %p152
      %p154 = scmp.ne.s32.totalorder %s140, %s141
      %p155 = scmp.eq.s32.totalorder %s21, 3
      %p156 = por %p154, %p155
      %p158 = scmp.ne.s32.totalorder %s141, %s157
      %p159 = scmp.eq.s32.totalorder %s21, 0
      %p160 = por %p158, %p159
      %p161 = scmp.le.s32.totalorder 1, %s15
      %p162 = scmp.lt.s32.totalorder %s15, 5
      %p163 = pnand %p161, %p162
      %p164 = pneg %p163
      // Predicated region
      $region9: #{tpu_custom_call.1} parent=5 // pred_check
        _
      $region10: #{tpu_custom_call.1} parent=5 // pred_check_branch
        %166 = sbr.rel (%p163) target = $region12
      $region11: #{tpu_custom_call.1} parent=5 // pred_region
        %s167 = ssub.s32 %s15, 1
        // Predicated region
        $region13: #{tpu_custom_call.1} parent=11 // pred_check
          %p168 = pneg %p83
        $region14: #{tpu_custom_call.1} parent=11 // pred_check_branch
          %170 = sbr.rel (%p168) target = $region16
        $region15: #{tpu_custom_call.1} parent=11 // pred_region
          %s172 = ssub.s32 192, 192
          %173 = vsyncadd [#allocation6], %s172
          %s174 = sshll.u32 [#allocation5], 4
          %s175 = int_to_ptr.vmem [resolvable:$true] %s174
          %180 = dma.hbm_to_vmem [thread:$0]  %s1, 192, %s175, [#allocation6], 64, 64, 4
        $region16: #{tpu_custom_call.1} parent=11 // pred_fallthru
          _
        // Predicated region
        $region17: #{tpu_custom_call.1} parent=11 // pred_check
          %p181 = pneg %p104
        $region18: #{tpu_custom_call.1} parent=11 // pred_check_branch
          %183 = sbr.rel (%p181) target = $region20
        $region19: #{tpu_custom_call.1} parent=11 // pred_region
          _
        $region20: #{tpu_custom_call.1} parent=11 // pred_fallthru
          _
        // Predicated region
        $region21: #{tpu_custom_call.1} parent=11 // pred_check
          %p184 = pneg %p125
        $region22: #{tpu_custom_call.1} parent=11 // pred_check_branch
          %186 = sbr.rel (%p184) target = $region24
        $region23: #{tpu_custom_call.1} parent=11 // pred_region
          _
        $region24: #{tpu_custom_call.1} parent=11 // pred_fallthru
          _
      $region12: #{tpu_custom_call.1} parent=5 // pred_fallthru
        _
      %p187 = scmp.lt.s32.totalorder %s15, 4
      // Predicated region
      $region25: #{tpu_custom_call.1} parent=5 // pred_check
        %p188 = pneg %p187
      $region26: #{tpu_custom_call.1} parent=5 // pred_check_branch
        %190 = sbr.rel (%p188) target = $region28
      $region27: #{tpu_custom_call.1} parent=5 // pred_region
        // Predicated region
        $region29: #{tpu_custom_call.1} parent=27 // pred_check
          %p191 = pneg %p56
        $region30: #{tpu_custom_call.1} parent=27 // pred_check_branch
          %193 = sbr.rel (%p191) target = $region32
        $region31: #{tpu_custom_call.1} parent=27 // pred_region
          %s194 = smul.u32 2, %s24
          %p195 = scmp.lt.s32.totalorder %s22, 1
          %s196 = scalar_select %p195, %s22, 1
          %p197 = scmp.lt.s32.totalorder %s194, 1
          %s198 = scalar_select %p197, %s194, 1
          %s199 = smul.addr %s196, 2
          %s200 = sadd.s32 %s198, %s199
          %s201 = smul.addr %s200, 4
          %s202 = scalar_lea.vmem %s0, %s201
          %s203 = smul.u32 2, %s24
        $region32: #{tpu_custom_call.1} parent=27 // pred_fallthru
          _
      $region28: #{tpu_custom_call.1} parent=5 // pred_fallthru
        _
      %p204 = scmp.le.s32.totalorder 1, %s15
      %p205 = scmp.lt.s32.totalorder %s15, 5
      %p206 = pnand %p204, %p205
      %p207 = pneg %p206
      // Predicated region
      $region33: #{tpu_custom_call.1} parent=5 // pred_check
        _
      $region34: #{tpu_custom_call.1} parent=5 // pred_check_branch
        %209 = sbr.rel (%p206) target = $region36
      $region35: #{tpu_custom_call.1} parent=5 // pred_region
        %s210 = ssub.s32 %s15, 1
        // Predicated region
        $region37: #{tpu_custom_call.1} parent=35 // pred_check
          %p211 = pneg %p83
        $region38: #{tpu_custom_call.1} parent=35 // pred_check_branch
          %213 = sbr.rel (%p211) target = $region40
        $region39: #{tpu_custom_call.1} parent=35 // pred_region
          %214 = dma.done [#allocation6], 192
        $region40: #{tpu_custom_call.1} parent=35 // pred_fallthru
          _
        %s215 = smul.u32 2, %s27
        %p216 = scmp.lt.s32.totalorder %s25, 1
        %s217 = scalar_select %p216, %s25, 1
        %p218 = scmp.lt.s32.totalorder %s215, 1
        %s219 = scalar_select %p218, %s215, 1
        %s220 = smul.addr %s217, 2
        %s221 = sadd.s32 %s219, %s220
        %s222 = smul.addr %s221, 4
        %s223 = scalar_lea.vmem %s0, %s222
        %p224 = pneg %p62
        %p225 = pneg %p59
        %p226 = pneg %p83
        %p227 = pneg %p80
        %p228 = pneg %p104
        %p229 = pneg %p101
        %p230 = pneg %p125
        %p231 = pneg %p122
        %p232 = pneg %p153
        %p233 = pneg %p150
        %s234 = sand.u32 %s140, 1
        %s235 = scalar_lea.sflag [#allocation7], %s234
        %s236 = sand.u32 %s140, 1
        %s237 = smul.addr %s236, 8
        %s238 = scalar_lea.vmem [#allocation8], %s237
        %s239 = smul.u32 2, %s27
        %p240 = scmp.lt.s32.totalorder %s25, 1
        %s241 = scalar_select %p240, %s25, 1
        %p242 = scmp.lt.s32.totalorder %s239, 1
        %s243 = scalar_select %p242, %s239, 1
        %s244 = smul.addr %s241, 2
        %s245 = sadd.s32 %s243, %s244
        %s246 = smul.addr %s245, 4
        %s247 = scalar_lea.vmem %s0, %s246
        %s248 = smul.u32 2, %s27
        %s249 = smul.u32 2, %s27
        %v250 = vld [vmem:[%s247] sm:$0xff]
        %p251 = scmp.eq.s32.totalorder %s26, 0
        // Predicated region
        $region41: #{tpu_custom_call.1} parent=35 // pred_check
          %p252 = pneg %p251
        $region42: #{tpu_custom_call.1} parent=35 // pred_check_branch
          %254 = sbr.rel (%p252) target = $region44
        $region43: #{tpu_custom_call.1} parent=35 // pred_region
          %p255 = scmp.eq.s32.totalorder %s27, 0
          // Predicated region
          $region45: #{tpu_custom_call.1} parent=43 // pred_check
            %p256 = pneg %p255
          $region46: #{tpu_custom_call.1} parent=43 // pred_check_branch
            %258 = sbr.rel (%p256) target = $region48
          $region47: #{tpu_custom_call.1} parent=43 // pred_region
            %vm259 = vcmask 130048
            %260 = vst.msk [vmem:[#allocation2] sm:$0xff] %vm259, 0.0
            %261 = vst.msk [vmem:[#allocation2 + $0x8] sm:$0xff] %vm259, 0.0
          $region48: #{tpu_custom_call.1} parent=43 // pred_fallthru
            _
          %v262 = vld [vmem:[#allocation5] sm:$0xf]
          %v263 = vld [vmem:[%s2] sm:$0xf]
          %265 = vset.pattern.permute.xlu0 0
          %266 = vperm.xlu0 %265, %v263
          %v267 = vpop.permute.xlu0 %266
          %v270 = vcombine.high %v250, %v250
          %vm271 = vcmask 31744
          %v273 = vsel %vm271, %v262, 0
          %vm275 = vcmask 1043456
          %v276 = vsel %vm275, %v250, 0
          %v278 = vsel %vm275, %v270, 0
          %280 = vmatprep.subr.mxu0 0.0
          %281 = vmatpush1.msra.mxu0 0.0
          %282 = vmatprep.subr.mxu0 0.0
          %283 = vmatpush1.msra.mxu0 0.0
          %284 = vmatprep.subr.mxu0 0.0
          %285 = vmatpush1.msra.mxu0 0.0
          %286 = vmatprep.subr.mxu0 0.0
          %287 = vmatpush1.msra.mxu0 0.0
          %288 = vmatprep.subr.mxu0 0.0
          %289 = vmatpush1.msra.mxu0 0.0
          %290 = vmatprep.subr.mxu0 0.0
          %291 = vmatpush1.msra.mxu0 0.0
          %292 = vmatprep.subr.mxu0 0.0
          %293 = vmatpush1.msra.mxu0 0.0
          %294 = vmatprep.subr.mxu0 0.0
          %295 = vmatpush1.msra.mxu0 0.0
          %296 = vmatprep.subr.mxu0 0.0
          %297 = vmatpush1.msra.mxu0 0.0
          %298 = vmatprep.subr.mxu0 0.0
          %299 = vmatpush1.msra.mxu0 0.0
          %300 = vmatprep.subr.mxu0 0.0
          %301 = vmatpush1.msra.mxu0 0.0
          %302 = vmatprep.subr.mxu0 0.0
          %303 = vmatpush1.msra.mxu0 0.0
          %304 = vmatprep.subr.mxu0 0.0
          %305 = vmatpush1.msra.mxu0 0.0
          %306 = vmatprep.subr.mxu0 0.0
          %307 = vmatpush1.msra.mxu0 0.0
          %308 = vmatprep.subr.mxu0 0.0
          %309 = vmatpush1.msra.mxu0 0.0
          %310 = vmatprep.subr.mxu0 %v278
          %311 = vmatpush1.msra.mxu0 %v276
          %312 = vmatprep.subr.mxu0 0.0
          %313 = vmatpush2.msra.mxu0 0.0
          %314 = vmatprep.subr.mxu0 0.0
          %315 = vmatpush2.msra.mxu0 0.0
          %316 = vmatprep.subr.mxu0 0.0
          %317 = vmatpush2.msra.mxu0 0.0
          %318 = vmatprep.subr.mxu0 0.0
          %319 = vmatpush2.msra.mxu0 0.0
          %320 = vmatprep.subr.mxu0 0.0
          %321 = vmatpush2.msra.mxu0 0.0
          %322 = vmatprep.subr.mxu0 0.0
          %323 = vmatpush2.msra.mxu0 0.0
          %324 = vmatprep.subr.mxu0 0.0
          %325 = vmatpush2.msra.mxu0 0.0
          %326 = vmatprep.subr.mxu0 0.0
          %327 = vmatpush2.msra.mxu0 0.0
          %328 = vmatprep.subr.mxu0 0.0
          %329 = vmatpush2.msra.mxu0 0.0
          %330 = vmatprep.subr.mxu0 0.0
          %331 = vmatpush2.msra.mxu0 0.0
          %332 = vmatprep.subr.mxu0 0.0
          %333 = vmatpush2.msra.mxu0 0.0
          %334 = vmatprep.subr.mxu0 0.0
          %335 = vmatpush2.msra.mxu0 0.0
          %336 = vmatprep.subr.mxu0 0.0
          %337 = vmatpush2.msra.mxu0 0.0
          %338 = vmatprep.subr.mxu0 0.0
          %339 = vmatpush2.msra.mxu0 0.0
          %340 = vmatprep.subr.mxu0 0.0
          %341 = vmatpush2.msra.mxu0 0.0
          %342 = vmatprep.subr.mxu0 0.0
          %343 = vmatpush2.msra.mxu0 0.0
          %344 = vmatprep.mubr.f32.mxu0 0.0
          %345 = vmatmul.mubr.f32.gmra.mxu0 %v273
          %v346 = vpop.f32.mrf.mxu0
          %v347 = vadd.f32 %v267, %v346
          %v348 = vpop.f32.mrf.mxu0
          %v349 = vadd.f32 %v267, %v348
          %350 = vdwg.mxu0
          %v353 = vcombine.low %v347, %v349
          %355 = vst [vmem:[#allocation3] sm:$0xff] %v353
          %s356 = scalar_lea.vmem [#allocation5], 4
          %v357 = vld [vmem:[%s356] sm:$0xf]
          %s358 = scalar_lea.vmem %s2, 4
          %v359 = vld [vmem:[%s358] sm:$0xf]
          %361 = vset.pattern.permute.xlu0 0
          %362 = vperm.xlu0 %361, %v359
          %v363 = vpop.permute.xlu0 %362
          %v366 = vsel %vm271, %v357, 0
          %368 = vmatprep.subr.mxu0 0.0
          %369 = vmatpush1.msra.mxu0 0.0
          %370 = vmatprep.subr.mxu0 0.0
          %371 = vmatpush1.msra.mxu0 0.0
          %372 = vmatprep.subr.mxu0 0.0
          %373 = vmatpush1.msra.mxu0 0.0
          %374 = vmatprep.subr.mxu0 0.0
          %375 = vmatpush1.msra.mxu0 0.0
          %376 = vmatprep.subr.mxu0 0.0
          %377 = vmatpush1.msra.mxu0 0.0
          %378 = vmatprep.subr.mxu0 0.0
          %379 = vmatpush1.msra.mxu0 0.0
          %380 = vmatprep.subr.mxu0 0.0
          %381 = vmatpush1.msra.mxu0 0.0
          %382 = vmatprep.subr.mxu0 0.0
          %383 = vmatpush1.msra.mxu0 0.0
          %384 = vmatprep.subr.mxu0 0.0
          %385 = vmatpush1.msra.mxu0 0.0
          %386 = vmatprep.subr.mxu0 0.0
          %387 = vmatpush1.msra.mxu0 0.0
          %388 = vmatprep.subr.mxu0 0.0
          %389 = vmatpush1.msra.mxu0 0.0
          %390 = vmatprep.subr.mxu0 0.0
          %391 = vmatpush1.msra.mxu0 0.0
          %392 = vmatprep.subr.mxu0 0.0
          %393 = vmatpush1.msra.mxu0 0.0
          %394 = vmatprep.subr.mxu0 0.0
          %395 = vmatpush1.msra.mxu0 0.0
          %396 = vmatprep.subr.mxu0 0.0
          %397 = vmatpush1.msra.mxu0 0.0
          %398 = vmatprep.subr.mxu0 %v278
          %399 = vmatpush1.msra.mxu0 %v276
          %400 = vmatprep.subr.mxu0 0.0
          %401 = vmatpush2.msra.mxu0 0.0
          %402 = vmatprep.subr.mxu0 0.0
          %403 = vmatpush2.msra.mxu0 0.0
          %404 = vmatprep.subr.mxu0 0.0
          %405 = vmatpush2.msra.mxu0 0.0
          %406 = vmatprep.subr.mxu0 0.0
          %407 = vmatpush2.msra.mxu0 0.0
          %408 = vmatprep.subr.mxu0 0.0
          %409 = vmatpush2.msra.mxu0 0.0
          %410 = vmatprep.subr.mxu0 0.0
          %411 = vmatpush2.msra.mxu0 0.0
          %412 = vmatprep.subr.mxu0 0.0
          %413 = vmatpush2.msra.mxu0 0.0
          %414 = vmatprep.subr.mxu0 0.0
          %415 = vmatpush2.msra.mxu0 0.0
          %416 = vmatprep.subr.mxu0 0.0
          %417 = vmatpush2.msra.mxu0 0.0
          %418 = vmatprep.subr.mxu0 0.0
          %419 = vmatpush2.msra.mxu0 0.0
          %420 = vmatprep.subr.mxu0 0.0
          %421 = vmatpush2.msra.mxu0 0.0
          %422 = vmatprep.subr.mxu0 0.0
          %423 = vmatpush2.msra.mxu0 0.0
          %424 = vmatprep.subr.mxu0 0.0
          %425 = vmatpush2.msra.mxu0 0.0
          %426 = vmatprep.subr.mxu0 0.0
          %427 = vmatpush2.msra.mxu0 0.0
          %428 = vmatprep.subr.mxu0 0.0
          %429 = vmatpush2.msra.mxu0 0.0
          %430 = vmatprep.subr.mxu0 0.0
          %431 = vmatpush2.msra.mxu0 0.0
          %432 = vmatprep.mubr.f32.mxu0 0.0
          %433 = vmatmul.mubr.f32.gmra.mxu0 %v366
          %v434 = vpop.f32.mrf.mxu0
          %v435 = vadd.f32 %v363, %v434
          %v436 = vpop.f32.mrf.mxu0
          %v437 = vadd.f32 %v363, %v436
          %438 = vdwg.mxu0
          %v441 = vcombine.low %v435, %v437
          %s443 = scalar_lea.vmem [#allocation3], 8
          %444 = vst [vmem:[%s443] sm:$0xff] %v441
          %v445 = vld [vmem:[#allocation3] sm:$0xf]
          %v446 = vld [vmem:[%s443] sm:$0xf]
          %v447 = vld [vmem:[#allocation2] sm:$0xff]
          %v448 = vld [vmem:[#allocation2 + $0x8] sm:$0xff]
          %449 = vxpose.xlu0.b32.start [1/16] %v445, 128
          %450 = vxpose.xlu0.b32.cont [2/16] 0.0, 128
          %451 = vxpose.xlu0.b32.cont [3/16] 0.0, 128
          %452 = vxpose.xlu0.b32.cont [4/16] 0.0, 128
          %453 = vxpose.xlu0.b32.cont [5/16] 0.0, 128
          %454 = vxpose.xlu0.b32.cont [6/16] 0.0, 128
          %455 = vxpose.xlu0.b32.cont [7/16] 0.0, 128
          %456 = vxpose.xlu0.b32.cont [8/16] 0.0, 128
          %457 = vxpose.xlu0.b32.cont [9/16] 0.0, 128
          %458 = vxpose.xlu0.b32.cont [10/16] 0.0, 128
          %459 = vxpose.xlu0.b32.cont [11/16] 0.0, 128
          %460 = vxpose.xlu0.b32.cont [12/16] 0.0, 128
          %461 = vxpose.xlu0.b32.cont [13/16] 0.0, 128
          %462 = vxpose.xlu0.b32.cont [14/16] 0.0, 128
          %463 = vxpose.xlu0.b32.cont [15/16] 0.0, 128
          %464 = vxpose.xlu0.b32.end [16/16] 0.0, 128
          %v465 = vpop.trf.xlu0
          %v466 = vpop.trf.xlu0
          %v467 = vpop.trf.xlu0
          %v468 = vpop.trf.xlu0
          %v469 = vpop.trf.xlu0
          %v470 = vpop.trf.xlu0
          %v471 = vpop.trf.xlu0
          %v472 = vpop.trf.xlu0
          %v473 = vpop.trf.xlu0
          %v474 = vpop.trf.xlu0
          %v475 = vpop.trf.xlu0
          %v476 = vpop.trf.xlu0
          %v477 = vpop.trf.xlu0
          %v478 = vpop.trf.xlu0
          %v479 = vpop.trf.xlu0
          %v480 = vpop.trf.xlu0
          %v482 = vsel %vm271, %v465, 0
          %v485 = vsel %vm271, %v466, 0
          %v488 = vsel %vm275, %v446, 0
          %490 = vmatprep.subr.mxu0 0.0
          %491 = vmatpush1.msra.mxu0 0.0
          %492 = vmatprep.subr.mxu0 0.0
          %493 = vmatpush1.msra.mxu0 0.0
          %494 = vmatprep.subr.mxu0 0.0
          %495 = vmatpush1.msra.mxu0 0.0
          %496 = vmatprep.subr.mxu0 0.0
          %497 = vmatpush1.msra.mxu0 0.0
          %498 = vmatprep.subr.mxu0 0.0
          %499 = vmatpush1.msra.mxu0 0.0
          %500 = vmatprep.subr.mxu0 0.0
          %501 = vmatpush1.msra.mxu0 0.0
          %502 = vmatprep.subr.mxu0 0.0
          %503 = vmatpush1.msra.mxu0 0.0
          %504 = vmatprep.subr.mxu0 0.0
          %505 = vmatpush1.msra.mxu0 0.0
          %506 = vmatprep.subr.mxu0 0.0
          %507 = vmatpush1.msra.mxu0 0.0
          %508 = vmatprep.subr.mxu0 0.0
          %509 = vmatpush1.msra.mxu0 0.0
          %510 = vmatprep.subr.mxu0 0.0
          %511 = vmatpush1.msra.mxu0 0.0
          %512 = vmatprep.subr.mxu0 0.0
          %513 = vmatpush1.msra.mxu0 0.0
          %514 = vmatprep.subr.mxu0 0.0
          %515 = vmatpush1.msra.mxu0 0.0
          %516 = vmatprep.subr.mxu0 0.0
          %517 = vmatpush1.msra.mxu0 0.0
          %518 = vmatprep.subr.mxu0 0.0
          %519 = vmatpush1.msra.mxu0 0.0
          %520 = vmatprep.subr.mxu0 0.0
          %521 = vmatpush1.msra.mxu0 %v488
          %522 = vmatprep.subr.mxu0 0.0
          %523 = vmatpush2.msra.mxu0 0.0
          %524 = vmatprep.subr.mxu0 0.0
          %525 = vmatpush2.msra.mxu0 0.0
          %526 = vmatprep.subr.mxu0 0.0
          %527 = vmatpush2.msra.mxu0 0.0
          %528 = vmatprep.subr.mxu0 0.0
          %529 = vmatpush2.msra.mxu0 0.0
          %530 = vmatprep.subr.mxu0 0.0
          %531 = vmatpush2.msra.mxu0 0.0
          %532 = vmatprep.subr.mxu0 0.0
          %533 = vmatpush2.msra.mxu0 0.0
          %534 = vmatprep.subr.mxu0 0.0
          %535 = vmatpush2.msra.mxu0 0.0
          %536 = vmatprep.subr.mxu0 0.0
          %537 = vmatpush2.msra.mxu0 0.0
          %538 = vmatprep.subr.mxu0 0.0
          %539 = vmatpush2.msra.mxu0 0.0
          %540 = vmatprep.subr.mxu0 0.0
          %541 = vmatpush2.msra.mxu0 0.0
          %542 = vmatprep.subr.mxu0 0.0
          %543 = vmatpush2.msra.mxu0 0.0
          %544 = vmatprep.subr.mxu0 0.0
          %545 = vmatpush2.msra.mxu0 0.0
          %546 = vmatprep.subr.mxu0 0.0
          %547 = vmatpush2.msra.mxu0 0.0
          %548 = vmatprep.subr.mxu0 0.0
          %549 = vmatpush2.msra.mxu0 0.0
          %550 = vmatprep.subr.mxu0 0.0
          %551 = vmatpush2.msra.mxu0 0.0
          %552 = vmatprep.subr.mxu0 0.0
          %553 = vmatpush2.msra.mxu0 0.0
          %554 = vmatprep.mubr.f32.mxu0 0.0
          %555 = vmatmul.mubr.f32.gmra.mxu0 %v482
          %v556 = vpop.f32.mrf.mxu0
          %v557 = vadd.f32 0.0, %v556
          %v558 = vpop.f32.mrf.mxu0
          %559 = vmatprep.mubr.f32.mxu0 0.0
          %560 = vmatmul.mubr.f32.gmra.mxu0 %v485
          %v561 = vpop.f32.mrf.mxu0
          %v562 = vadd.f32 0.0, %v561
          %v563 = vpop.f32.mrf.mxu0
          %564 = vdwg.mxu0
          %v565 = vadd.f32 %v447, %v557
          %v566 = vadd.f32 %v448, %v562
          %vm567 = vcmask 130048
          %568 = vst.msk [vmem:[#allocation2] sm:$0xff] %vm567, %v565
          %569 = vst.msk [vmem:[#allocation2 + $0x8] sm:$0xff] %vm567, %v566
          %v570 = vld [vmem:[#allocation3] sm:$0xf]
          %v571 = vld [vmem:[%s443] sm:$0xf]
          %v572 = vld [vmem:[#allocation2] sm:$0xff]
          %v573 = vld [vmem:[#allocation2 + $0x8] sm:$0xff]
          %575 = vrot.lane.b32.xlu0 %v570, 112
          %v576 = vpop.permute.xlu0 %575
          %578 = vxpose.xlu0.b32.start [1/16] %v576, 128
          %579 = vxpose.xlu0.b32.cont [2/16] 0.0, 128
          %580 = vxpose.xlu0.b32.cont [3/16] 0.0, 128
          %581 = vxpose.xlu0.b32.cont [4/16] 0.0, 128
          %582 = vxpose.xlu0.b32.cont [5/16] 0.0, 128
          %583 = vxpose.xlu0.b32.cont [6/16] 0.0, 128
          %584 = vxpose.xlu0.b32.cont [7/16] 0.0, 128
          %585 = vxpose.xlu0.b32.cont [8/16] 0.0, 128
          %586 = vxpose.xlu0.b32.cont [9/16] 0.0, 128
          %587 = vxpose.xlu0.b32.cont [10/16] 0.0, 128
          %588 = vxpose.xlu0.b32.cont [11/16] 0.0, 128
          %589 = vxpose.xlu0.b32.cont [12/16] 0.0, 128
          %590 = vxpose.xlu0.b32.cont [13/16] 0.0, 128
          %591 = vxpose.xlu0.b32.cont [14/16] 0.0, 128
          %592 = vxpose.xlu0.b32.cont [15/16] 0.0, 128
          %593 = vxpose.xlu0.b32.end [16/16] 0.0, 128
          %v594 = vpop.trf.xlu0
          %v595 = vpop.trf.xlu0
          %v596 = vpop.trf.xlu0
          %v597 = vpop.trf.xlu0
          %v598 = vpop.trf.xlu0
          %v599 = vpop.trf.xlu0
          %v600 = vpop.trf.xlu0
          %v601 = vpop.trf.xlu0
          %v602 = vpop.trf.xlu0
          %v603 = vpop.trf.xlu0
          %v604 = vpop.trf.xlu0
          %v605 = vpop.trf.xlu0
          %v606 = vpop.trf.xlu0
          %v607 = vpop.trf.xlu0
          %v608 = vpop.trf.xlu0
          %v609 = vpop.trf.xlu0
          %611 = vrot.lane.b32.xlu0 %v571, 112
          %v612 = vpop.permute.xlu0 %611
          %v614 = vsel %vm271, %v594, 0
          %v617 = vsel %vm271, %v595, 0
          %v619 = vsel %vm275, %v612, 0
          %621 = vmatprep.subr.mxu0 0.0
          %622 = vmatpush1.msra.mxu0 0.0
          %623 = vmatprep.subr.mxu0 0.0
          %624 = vmatpush1.msra.mxu0 0.0
          %625 = vmatprep.subr.mxu0 0.0
          %626 = vmatpush1.msra.mxu0 0.0
          %627 = vmatprep.subr.mxu0 0.0
          %628 = vmatpush1.msra.mxu0 0.0
          %629 = vmatprep.subr.mxu0 0.0
          %630 = vmatpush1.msra.mxu0 0.0
          %631 = vmatprep.subr.mxu0 0.0
          %632 = vmatpush1.msra.mxu0 0.0
          %633 = vmatprep.subr.mxu0 0.0
          %634 = vmatpush1.msra.mxu0 0.0
          %635 = vmatprep.subr.mxu0 0.0
          %636 = vmatpush1.msra.mxu0 0.0
          %637 = vmatprep.subr.mxu0 0.0
          %638 = vmatpush1.msra.mxu0 0.0
          %639 = vmatprep.subr.mxu0 0.0
          %640 = vmatpush1.msra.mxu0 0.0
          %641 = vmatprep.subr.mxu0 0.0
          %642 = vmatpush1.msra.mxu0 0.0
          %643 = vmatprep.subr.mxu0 0.0
          %644 = vmatpush1.msra.mxu0 0.0
          %645 = vmatprep.subr.mxu0 0.0
          %646 = vmatpush1.msra.mxu0 0.0
          %647 = vmatprep.subr.mxu0 0.0
          %648 = vmatpush1.msra.mxu0 0.0
          %649 = vmatprep.subr.mxu0 0.0
          %650 = vmatpush1.msra.mxu0 0.0
          %651 = vmatprep.subr.mxu0 0.0
          %652 = vmatpush1.msra.mxu0 %v619
          %653 = vmatprep.subr.mxu0 0.0
          %654 = vmatpush2.msra.mxu0 0.0
          %655 = vmatprep.subr.mxu0 0.0
          %656 = vmatpush2.msra.mxu0 0.0
          %657 = vmatprep.subr.mxu0 0.0
          %658 = vmatpush2.msra.mxu0 0.0
          %659 = vmatprep.subr.mxu0 0.0
          %660 = vmatpush2.msra.mxu0 0.0
          %661 = vmatprep.subr.mxu0 0.0
          %662 = vmatpush2.msra.mxu0 0.0
          %663 = vmatprep.subr.mxu0 0.0
          %664 = vmatpush2.msra.mxu0 0.0
          %665 = vmatprep.subr.mxu0 0.0
          %666 = vmatpush2.msra.mxu0 0.0
          %667 = vmatprep.subr.mxu0 0.0
          %668 = vmatpush2.msra.mxu0 0.0
          %669 = vmatprep.subr.mxu0 0.0
          %670 = vmatpush2.msra.mxu0 0.0
          %671 = vmatprep.subr.mxu0 0.0
          %672 = vmatpush2.msra.mxu0 0.0
          %673 = vmatprep.subr.mxu0 0.0
          %674 = vmatpush2.msra.mxu0 0.0
          %675 = vmatprep.subr.mxu0 0.0
          %676 = vmatpush2.msra.mxu0 0.0
          %677 = vmatprep.subr.mxu0 0.0
          %678 = vmatpush2.msra.mxu0 0.0
          %679 = vmatprep.subr.mxu0 0.0
          %680 = vmatpush2.msra.mxu0 0.0
          %681 = vmatprep.subr.mxu0 0.0
          %682 = vmatpush2.msra.mxu0 0.0
          %683 = vmatprep.subr.mxu0 0.0
          %684 = vmatpush2.msra.mxu0 0.0
          %685 = vmatprep.mubr.f32.mxu0 0.0
          %686 = vmatmul.mubr.f32.gmra.mxu0 %v614
          %v687 = vpop.f32.mrf.mxu0
          %v688 = vadd.f32 0.0, %v687
          %v689 = vpop.f32.mrf.mxu0
          %690 = vmatprep.mubr.f32.mxu0 0.0
          %691 = vmatmul.mubr.f32.gmra.mxu0 %v617
          %v692 = vpop.f32.mrf.mxu0
          %v693 = vadd.f32 0.0, %v692
          %v694 = vpop.f32.mrf.mxu0
          %695 = vdwg.mxu0
          %v696 = vadd.f32 %v572, %v688
          %v697 = vadd.f32 %v573, %v693
          %698 = vst.msk [vmem:[#allocation2] sm:$0xff] %vm567, %v696
          %699 = vst.msk [vmem:[#allocation2 + $0x8] sm:$0xff] %vm567, %v697
          %v700 = vld [vmem:[#allocation3] sm:$0xf]
          %v701 = vld [vmem:[%s443] sm:$0xf]
          %v702 = vld [vmem:[#allocation2] sm:$0xff]
          %v703 = vld [vmem:[#allocation2 + $0x8] sm:$0xff]
          %705 = vrot.lane.b32.xlu0 %v700, 96
          %v706 = vpop.permute.xlu0 %705
          %708 = vxpose.xlu0.b32.start [1/16] %v706, 128
          %709 = vxpose.xlu0.b32.cont [2/16] 0.0, 128
          %710 = vxpose.xlu0.b32.cont [3/16] 0.0, 128
          %711 = vxpose.xlu0.b32.cont [4/16] 0.0, 128
          %712 = vxpose.xlu0.b32.cont [5/16] 0.0, 128
          %713 = vxpose.xlu0.b32.cont [6/16] 0.0, 128
          %714 = vxpose.xlu0.b32.cont [7/16] 0.0, 128
          %715 = vxpose.xlu0.b32.cont [8/16] 0.0, 128
          %716 = vxpose.xlu0.b32.cont [9/16] 0.0, 128
          %717 = vxpose.xlu0.b32.cont [10/16] 0.0, 128
          %718 = vxpose.xlu0.b32.cont [11/16] 0.0, 128
          %719 = vxpose.xlu0.b32.cont [12/16] 0.0, 128
          %720 = vxpose.xlu0.b32.cont [13/16] 0.0, 128
          %721 = vxpose.xlu0.b32.cont [14/16] 0.0, 128
          %722 = vxpose.xlu0.b32.cont [15/16] 0.0, 128
          %723 = vxpose.xlu0.b32.end [16/16] 0.0, 128
          %v724 = vpop.trf.xlu0
          %v725 = vpop.trf.xlu0
          %v726 = vpop.trf.xlu0
          %v727 = vpop.trf.xlu0
          %v728 = vpop.trf.xlu0
          %v729 = vpop.trf.xlu0
          %v730 = vpop.trf.xlu0
          %v731 = vpop.trf.xlu0
          %v732 = vpop.trf.xlu0
          %v733 = vpop.trf.xlu0
          %v734 = vpop.trf.xlu0
          %v735 = vpop.trf.xlu0
          %v736 = vpop.trf.xlu0
          %v737 = vpop.trf.xlu0
          %v738 = vpop.trf.xlu0
          %v739 = vpop.trf.xlu0
          %741 = vrot.lane.b32.xlu0 %v701, 96
          %v742 = vpop.permute.xlu0 %741
          %v744 = vsel %vm271, %v724, 0
          %v747 = vsel %vm271, %v725, 0
          %v749 = vsel %vm275, %v742, 0
          %751 = vmatprep.subr.mxu0 0.0
          %752 = vmatpush1.msra.mxu0 0.0
          %753 = vmatprep.subr.mxu0 0.0
          %754 = vmatpush1.msra.mxu0 0.0
          %755 = vmatprep.subr.mxu0 0.0
          %756 = vmatpush1.msra.mxu0 0.0
          %757 = vmatprep.subr.mxu0 0.0
          %758 = vmatpush1.msra.mxu0 0.0
          %759 = vmatprep.subr.mxu0 0.0
          %760 = vmatpush1.msra.mxu0 0.0
          %761 = vmatprep.subr.mxu0 0.0
          %762 = vmatpush1.msra.mxu0 0.0
          %763 = vmatprep.subr.mxu0 0.0
          %764 = vmatpush1.msra.mxu0 0.0
          %765 = vmatprep.subr.mxu0 0.0
          %766 = vmatpush1.msra.mxu0 0.0
          %767 = vmatprep.subr.mxu0 0.0
          %768 = vmatpush1.msra.mxu0 0.0
          %769 = vmatprep.subr.mxu0 0.0
          %770 = vmatpush1.msra.mxu0 0.0
          %771 = vmatprep.subr.mxu0 0.0
          %772 = vmatpush1.msra.mxu0 0.0
          %773 = vmatprep.subr.mxu0 0.0
          %774 = vmatpush1.msra.mxu0 0.0
          %775 = vmatprep.subr.mxu0 0.0
          %776 = vmatpush1.msra.mxu0 0.0
          %777 = vmatprep.subr.mxu0 0.0
          %778 = vmatpush1.msra.mxu0 0.0
          %779 = vmatprep.subr.mxu0 0.0
          %780 = vmatpush1.msra.mxu0 0.0
          %781 = vmatprep.subr.mxu0 0.0
          %782 = vmatpush1.msra.mxu0 %v749
          %783 = vmatprep.subr.mxu0 0.0
          %784 = vmatpush2.msra.mxu0 0.0
          %785 = vmatprep.subr.mxu0 0.0
          %786 = vmatpush2.msra.mxu0 0.0
          %787 = vmatprep.subr.mxu0 0.0
          %788 = vmatpush2.msra.mxu0 0.0
          %789 = vmatprep.subr.mxu0 0.0
          %790 = vmatpush2.msra.mxu0 0.0
          %791 = vmatprep.subr.mxu0 0.0
          %792 = vmatpush2.msra.mxu0 0.0
          %793 = vmatprep.subr.mxu0 0.0
          %794 = vmatpush2.msra.mxu0 0.0
          %795 = vmatprep.subr.mxu0 0.0
          %796 = vmatpush2.msra.mxu0 0.0
          %797 = vmatprep.subr.mxu0 0.0
          %798 = vmatpush2.msra.mxu0 0.0
          %799 = vmatprep.subr.mxu0 0.0
          %800 = vmatpush2.msra.mxu0 0.0
          %801 = vmatprep.subr.mxu0 0.0
          %802 = vmatpush2.msra.mxu0 0.0
          %803 = vmatprep.subr.mxu0 0.0
          %804 = vmatpush2.msra.mxu0 0.0
          %805 = vmatprep.subr.mxu0 0.0
          %806 = vmatpush2.msra.mxu0 0.0
          %807 = vmatprep.subr.mxu0 0.0
          %808 = vmatpush2.msra.mxu0 0.0
          %809 = vmatprep.subr.mxu0 0.0
          %810 = vmatpush2.msra.mxu0 0.0
          %811 = vmatprep.subr.mxu0 0.0
          %812 = vmatpush2.msra.mxu0 0.0
          %813 = vmatprep.subr.mxu0 0.0
          %814 = vmatpush2.msra.mxu0 0.0
          %815 = vmatprep.mubr.f32.mxu0 0.0
          %816 = vmatmul.mubr.f32.gmra.mxu0 %v744
          %v817 = vpop.f32.mrf.mxu0
          %v818 = vadd.f32 0.0, %v817
          %v819 = vpop.f32.mrf.mxu0
          %820 = vmatprep.mubr.f32.mxu0 0.0
          %821 = vmatmul.mubr.f32.gmra.mxu0 %v747
          %v822 = vpop.f32.mrf.mxu0
          %v823 = vadd.f32 0.0, %v822
          %v824 = vpop.f32.mrf.mxu0
          %825 = vdwg.mxu0
          %v826 = vadd.f32 %v702, %v818
          %v827 = vadd.f32 %v703, %v823
          %828 = vst.msk [vmem:[#allocation2] sm:$0xff] %vm567, %v826
          %829 = vst.msk [vmem:[#allocation2 + $0x8] sm:$0xff] %vm567, %v827
          %v830 = vld [vmem:[#allocation3] sm:$0xf]
          %v831 = vld [vmem:[%s443] sm:$0xf]
          %v832 = vld [vmem:[#allocation2] sm:$0xff]
          %v833 = vld [vmem:[#allocation2 + $0x8] sm:$0xff]
          %835 = vrot.lane.b32.xlu0 %v830, 80
          %v836 = vpop.permute.xlu0 %835
          %838 = vxpose.xlu0.b32.start [1/16] %v836, 128
          %839 = vxpose.xlu0.b32.cont [2/16] 0.0, 128
          %840 = vxpose.xlu0.b32.cont [3/16] 0.0, 128
          %841 = vxpose.xlu0.b32.cont [4/16] 0.0, 128
          %842 = vxpose.xlu0.b32.cont [5/16] 0.0, 128
          %843 = vxpose.xlu0.b32.cont [6/16] 0.0, 128
          %844 = vxpose.xlu0.b32.cont [7/16] 0.0, 128
          %845 = vxpose.xlu0.b32.cont [8/16] 0.0, 128
          %846 = vxpose.xlu0.b32.cont [9/16] 0.0, 128
          %847 = vxpose.xlu0.b32.cont [10/16] 0.0, 128
          %848 = vxpose.xlu0.b32.cont [11/16] 0.0, 128
          %849 = vxpose.xlu0.b32.cont [12/16] 0.0, 128
          %850 = vxpose.xlu0.b32.cont [13/16] 0.0, 128
          %851 = vxpose.xlu0.b32.cont [14/16] 0.0, 128
          %852 = vxpose.xlu0.b32.cont [15/16] 0.0, 128
          %853 = vxpose.xlu0.b32.end [16/16] 0.0, 128
          %v854 = vpop.trf.xlu0
          %v855 = vpop.trf.xlu0
          %v856 = vpop.trf.xlu0
          %v857 = vpop.trf.xlu0
          %v858 = vpop.trf.xlu0
          %v859 = vpop.trf.xlu0
          %v860 = vpop.trf.xlu0
          %v861 = vpop.trf.xlu0
          %v862 = vpop.trf.xlu0
          %v863 = vpop.trf.xlu0
          %v864 = vpop.trf.xlu0
          %v865 = vpop.trf.xlu0
          %v866 = vpop.trf.xlu0
          %v867 = vpop.trf.xlu0
          %v868 = vpop.trf.xlu0
          %v869 = vpop.trf.xlu0
          %871 = vrot.lane.b32.xlu0 %v831, 80
          %v872 = vpop.permute.xlu0 %871
          %v874 = vsel %vm271, %v854, 0
          %v877 = vsel %vm271, %v855, 0
          %v879 = vsel %vm275, %v872, 0
          %881 = vmatprep.subr.mxu0 0.0
          %882 = vmatpush1.msra.mxu0 0.0
          %883 = vmatprep.subr.mxu0 0.0
          %884 = vmatpush1.msra.mxu0 0.0
          %885 = vmatprep.subr.mxu0 0.0
          %886 = vmatpush1.msra.mxu0 0.0
          %887 = vmatprep.subr.mxu0 0.0
          %888 = vmatpush1.msra.mxu0 0.0
          %889 = vmatprep.subr.mxu0 0.0
          %890 = vmatpush1.msra.mxu0 0.0
          %891 = vmatprep.subr.mxu0 0.0
          %892 = vmatpush1.msra.mxu0 0.0
          %893 = vmatprep.subr.mxu0 0.0
          %894 = vmatpush1.msra.mxu0 0.0
          %895 = vmatprep.subr.mxu0 0.0
          %896 = vmatpush1.msra.mxu0 0.0
          %897 = vmatprep.subr.mxu0 0.0
          %898 = vmatpush1.msra.mxu0 0.0
          %899 = vmatprep.subr.mxu0 0.0
          %900 = vmatpush1.msra.mxu0 0.0
          %901 = vmatprep.subr.mxu0 0.0
          %902 = vmatpush1.msra.mxu0 0.0
          %903 = vmatprep.subr.mxu0 0.0
          %904 = vmatpush1.msra.mxu0 0.0
          %905 = vmatprep.subr.mxu0 0.0
          %906 = vmatpush1.msra.mxu0 0.0
          %907 = vmatprep.subr.mxu0 0.0
          %908 = vmatpush1.msra.mxu0 0.0
          %909 = vmatprep.subr.mxu0 0.0
          %910 = vmatpush1.msra.mxu0 0.0
          %911 = vmatprep.subr.mxu0 0.0
          %912 = vmatpush1.msra.mxu0 %v879
          %913 = vmatprep.subr.mxu0 0.0
          %914 = vmatpush2.msra.mxu0 0.0
          %915 = vmatprep.subr.mxu0 0.0
          %916 = vmatpush2.msra.mxu0 0.0
          %917 = vmatprep.subr.mxu0 0.0
          %918 = vmatpush2.msra.mxu0 0.0
          %919 = vmatprep.subr.mxu0 0.0
          %920 = vmatpush2.msra.mxu0 0.0
          %921 = vmatprep.subr.mxu0 0.0
          %922 = vmatpush2.msra.mxu0 0.0
          %923 = vmatprep.subr.mxu0 0.0
          %924 = vmatpush2.msra.mxu0 0.0
          %925 = vmatprep.subr.mxu0 0.0
          %926 = vmatpush2.msra.mxu0 0.0
          %927 = vmatprep.subr.mxu0 0.0
          %928 = vmatpush2.msra.mxu0 0.0
          %929 = vmatprep.subr.mxu0 0.0
          %930 = vmatpush2.msra.mxu0 0.0
          %931 = vmatprep.subr.mxu0 0.0
          %932 = vmatpush2.msra.mxu0 0.0
          %933 = vmatprep.subr.mxu0 0.0
          %934 = vmatpush2.msra.mxu0 0.0
          %935 = vmatprep.subr.mxu0 0.0
          %936 = vmatpush2.msra.mxu0 0.0
          %937 = vmatprep.subr.mxu0 0.0
          %938 = vmatpush2.msra.mxu0 0.0
          %939 = vmatprep.subr.mxu0 0.0
          %940 = vmatpush2.msra.mxu0 0.0
          %941 = vmatprep.subr.mxu0 0.0
          %942 = vmatpush2.msra.mxu0 0.0
          %943 = vmatprep.subr.mxu0 0.0
          %944 = vmatpush2.msra.mxu0 0.0
          %945 = vmatprep.mubr.f32.mxu0 0.0
          %946 = vmatmul.mubr.f32.gmra.mxu0 %v874
          %v947 = vpop.f32.mrf.mxu0
          %v948 = vadd.f32 0.0, %v947
          %v949 = vpop.f32.mrf.mxu0
          %950 = vmatprep.mubr.f32.mxu0 0.0
          %951 = vmatmul.mubr.f32.gmra.mxu0 %v877
          %v952 = vpop.f32.mrf.mxu0
          %v953 = vadd.f32 0.0, %v952
          %v954 = vpop.f32.mrf.mxu0
          %955 = vdwg.mxu0
          %v956 = vadd.f32 %v832, %v948
          %v957 = vadd.f32 %v833, %v953
          %958 = vst.msk [vmem:[#allocation2] sm:$0xff] %vm567, %v956
          %959 = vst.msk [vmem:[#allocation2 + $0x8] sm:$0xff] %vm567, %v957
          %v960 = vld [vmem:[#allocation3] sm:$0xf]
          %v961 = vld [vmem:[%s443] sm:$0xf]
          %v962 = vld [vmem:[#allocation2] sm:$0xff]
          %v963 = vld [vmem:[#allocation2 + $0x8] sm:$0xff]
          %965 = vrot.lane.b32.xlu0 %v960, 64
          %v966 = vpop.permute.xlu0 %965
          %968 = vxpose.xlu0.b32.start [1/16] %v966, 128
          %969 = vxpose.xlu0.b32.cont [2/16] 0.0, 128
          %970 = vxpose.xlu0.b32.cont [3/16] 0.0, 128
          %971 = vxpose.xlu0.b32.cont [4/16] 0.0, 128
          %972 = vxpose.xlu0.b32.cont [5/16] 0.0, 128
          %973 = vxpose.xlu0.b32.cont [6/16] 0.0, 128
          %974 = vxpose.xlu0.b32.cont [7/16] 0.0, 128
          %975 = vxpose.xlu0.b32.cont [8/16] 0.0, 128
          %976 = vxpose.xlu0.b32.cont [9/16] 0.0, 128
          %977 = vxpose.xlu0.b32.cont [10/16] 0.0, 128
          %978 = vxpose.xlu0.b32.cont [11/16] 0.0, 128
          %979 = vxpose.xlu0.b32.cont [12/16] 0.0, 128
          %980 = vxpose.xlu0.b32.cont [13/16] 0.0, 128
          %981 = vxpose.xlu0.b32.cont [14/16] 0.0, 128
          %982 = vxpose.xlu0.b32.cont [15/16] 0.0, 128
          %983 = vxpose.xlu0.b32.end [16/16] 0.0, 128
          %v984 = vpop.trf.xlu0
          %v985 = vpop.trf.xlu0
          %v986 = vpop.trf.xlu0
          %v987 = vpop.trf.xlu0
          %v988 = vpop.trf.xlu0
          %v989 = vpop.trf.xlu0
          %v990 = vpop.trf.xlu0
          %v991 = vpop.trf.xlu0
          %v992 = vpop.trf.xlu0
          %v993 = vpop.trf.xlu0
          %v994 = vpop.trf.xlu0
          %v995 = vpop.trf.xlu0
          %v996 = vpop.trf.xlu0
          %v997 = vpop.trf.xlu0
          %v998 = vpop.trf.xlu0
          %v999 = vpop.trf.xlu0
          %1001 = vrot.lane.b32.xlu0 %v961, 64
          %v1002 = vpop.permute.xlu0 %1001
          %v1004 = vsel %vm271, %v984, 0
          %v1007 = vsel %vm271, %v985, 0
          %v1009 = vsel %vm275, %v1002, 0
          %1011 = vmatprep.subr.mxu0 0.0
          %1012 = vmatpush1.msra.mxu0 0.0
          %1013 = vmatprep.subr.mxu0 0.0
          %1014 = vmatpush1.msra.mxu0 0.0
          %1015 = vmatprep.subr.mxu0 0.0
          %1016 = vmatpush1.msra.mxu0 0.0
          %1017 = vmatprep.subr.mxu0 0.0
          %1018 = vmatpush1.msra.mxu0 0.0
          %1019 = vmatprep.subr.mxu0 0.0
          %1020 = vmatpush1.msra.mxu0 0.0
          %1021 = vmatprep.subr.mxu0 0.0
          %1022 = vmatpush1.msra.mxu0 0.0
          %1023 = vmatprep.subr.mxu0 0.0
          %1024 = vmatpush1.msra.mxu0 0.0
          %1025 = vmatprep.subr.mxu0 0.0
          %1026 = vmatpush1.msra.mxu0 0.0
          %1027 = vmatprep.subr.mxu0 0.0
          %1028 = vmatpush1.msra.mxu0 0.0
          %1029 = vmatprep.subr.mxu0 0.0
          %1030 = vmatpush1.msra.mxu0 0.0
          %1031 = vmatprep.subr.mxu0 0.0
          %1032 = vmatpush1.msra.mxu0 0.0
          %1033 = vmatprep.subr.mxu0 0.0
          %1034 = vmatpush1.msra.mxu0 0.0
          %1035 = vmatprep.subr.mxu0 0.0
          %1036 = vmatpush1.msra.mxu0 0.0
          %1037 = vmatprep.subr.mxu0 0.0
          %1038 = vmatpush1.msra.mxu0 0.0
          %1039 = vmatprep.subr.mxu0 0.0
          %1040 = vmatpush1.msra.mxu0 0.0
          %1041 = vmatprep.subr.mxu0 0.0
          %1042 = vmatpush1.msra.mxu0 %v1009
          %1043 = vmatprep.subr.mxu0 0.0
          %1044 = vmatpush2.msra.mxu0 0.0
          %1045 = vmatprep.subr.mxu0 0.0
          %1046 = vmatpush2.msra.mxu0 0.0
          %1047 = vmatprep.subr.mxu0 0.0
          %1048 = vmatpush2.msra.mxu0 0.0
          %1049 = vmatprep.subr.mxu0 0.0
          %1050 = vmatpush2.msra.mxu0 0.0
          %1051 = vmatprep.subr.mxu0 0.0
          %1052 = vmatpush2.msra.mxu0 0.0
          %1053 = vmatprep.subr.mxu0 0.0
          %1054 = vmatpush2.msra.mxu0 0.0
          %1055 = vmatprep.subr.mxu0 0.0
          %1056 = vmatpush2.msra.mxu0 0.0
          %1057 = vmatprep.subr.mxu0 0.0
          %1058 = vmatpush2.msra.mxu0 0.0
          %1059 = vmatprep.subr.mxu0 0.0
          %1060 = vmatpush2.msra.mxu0 0.0
          %1061 = vmatprep.subr.mxu0 0.0
          %1062 = vmatpush2.msra.mxu0 0.0
          %1063 = vmatprep.subr.mxu0 0.0
          %1064 = vmatpush2.msra.mxu0 0.0
          %1065 = vmatprep.subr.mxu0 0.0
          %1066 = vmatpush2.msra.mxu0 0.0
          %1067 = vmatprep.subr.mxu0 0.0
          %1068 = vmatpush2.msra.mxu0 0.0
          %1069 = vmatprep.subr.mxu0 0.0
          %1070 = vmatpush2.msra.mxu0 0.0
          %1071 = vmatprep.subr.mxu0 0.0
          %1072 = vmatpush2.msra.mxu0 0.0
          %1073 = vmatprep.subr.mxu0 0.0
          %1074 = vmatpush2.msra.mxu0 0.0
          %1075 = vmatprep.mubr.f32.mxu0 0.0
          %1076 = vmatmul.mubr.f32.gmra.mxu0 %v1004
          %v1077 = vpop.f32.mrf.mxu0
          %v1078 = vadd.f32 0.0, %v1077
          %v1079 = vpop.f32.mrf.mxu0
          %1080 = vmatprep.mubr.f32.mxu0 0.0
          %1081 = vmatmul.mubr.f32.gmra.mxu0 %v1007
          %v1082 = vpop.f32.mrf.mxu0
          %v1083 = vadd.f32 0.0, %v1082
          %v1084 = vpop.f32.mrf.mxu0
          %1085 = vdwg.mxu0
          %v1086 = vadd.f32 %v962, %v1078
          %v1087 = vadd.f32 %v963, %v1083
          %1088 = vst.msk [vmem:[#allocation2] sm:$0xff] %vm567, %v1086
          %1089 = vst.msk [vmem:[#allocation2 + $0x8] sm:$0xff] %vm567, %v1087
          %v1090 = vld [vmem:[#allocation3] sm:$0xf]
          %v1091 = vld [vmem:[%s443] sm:$0xf]
          %v1092 = vld [vmem:[#allocation2] sm:$0xff]
          %v1093 = vld [vmem:[#allocation2 + $0x8] sm:$0xff]
          %1095 = vrot.lane.b32.xlu0 %v1090, 48
          %v1096 = vpop.permute.xlu0 %1095
          %1098 = vxpose.xlu0.b32.start [1/16] %v1096, 128
          %1099 = vxpose.xlu0.b32.cont [2/16] 0.0, 128
          %1100 = vxpose.xlu0.b32.cont [3/16] 0.0, 128
          %1101 = vxpose.xlu0.b32.cont [4/16] 0.0, 128
          %1102 = vxpose.xlu0.b32.cont [5/16] 0.0, 128
          %1103 = vxpose.xlu0.b32.cont [6/16] 0.0, 128
          %1104 = vxpose.xlu0.b32.cont [7/16] 0.0, 128
          %1105 = vxpose.xlu0.b32.cont [8/16] 0.0, 128
          %1106 = vxpose.xlu0.b32.cont [9/16] 0.0, 128
          %1107 = vxpose.xlu0.b32.cont [10/16] 0.0, 128
          %1108 = vxpose.xlu0.b32.cont [11/16] 0.0, 128
          %1109 = vxpose.xlu0.b32.cont [12/16] 0.0, 128
          %1110 = vxpose.xlu0.b32.cont [13/16] 0.0, 128
          %1111 = vxpose.xlu0.b32.cont [14/16] 0.0, 128
          %1112 = vxpose.xlu0.b32.cont [15/16] 0.0, 128
          %1113 = vxpose.xlu0.b32.end [16/16] 0.0, 128
          %v1114 = vpop.trf.xlu0
          %v1115 = vpop.trf.xlu0
          %v1116 = vpop.trf.xlu0
          %v1117 = vpop.trf.xlu0
          %v1118 = vpop.trf.xlu0
          %v1119 = vpop.trf.xlu0
          %v1120 = vpop.trf.xlu0
          %v1121 = vpop.trf.xlu0
          %v1122 = vpop.trf.xlu0
          %v1123 = vpop.trf.xlu0
          %v1124 = vpop.trf.xlu0
          %v1125 = vpop.trf.xlu0
          %v1126 = vpop.trf.xlu0
          %v1127 = vpop.trf.xlu0
          %v1128 = vpop.trf.xlu0
          %v1129 = vpop.trf.xlu0
          %1131 = vrot.lane.b32.xlu0 %v1091, 48
          %v1132 = vpop.permute.xlu0 %1131
          %v1134 = vsel %vm271, %v1114, 0
          %v1137 = vsel %vm271, %v1115, 0
          %v1139 = vsel %vm275, %v1132, 0
          %1141 = vmatprep.subr.mxu0 0.0
          %1142 = vmatpush1.msra.mxu0 0.0
          %1143 = vmatprep.subr.mxu0 0.0
          %1144 = vmatpush1.msra.mxu0 0.0
          %1145 = vmatprep.subr.mxu0 0.0
          %1146 = vmatpush1.msra.mxu0 0.0
          %1147 = vmatprep.subr.mxu0 0.0
          %1148 = vmatpush1.msra.mxu0 0.0
          %1149 = vmatprep.subr.mxu0 0.0
          %1150 = vmatpush1.msra.mxu0 0.0
          %1151 = vmatprep.subr.mxu0 0.0
          %1152 = vmatpush1.msra.mxu0 0.0
          %1153 = vmatprep.subr.mxu0 0.0
          %1154 = vmatpush1.msra.mxu0 0.0
          %1155 = vmatprep.subr.mxu0 0.0
          %1156 = vmatpush1.msra.mxu0 0.0
          %1157 = vmatprep.subr.mxu0 0.0
          %1158 = vmatpush1.msra.mxu0 0.0
          %1159 = vmatprep.subr.mxu0 0.0
          %1160 = vmatpush1.msra.mxu0 0.0
          %1161 = vmatprep.subr.mxu0 0.0
          %1162 = vmatpush1.msra.mxu0 0.0
          %1163 = vmatprep.subr.mxu0 0.0
          %1164 = vmatpush1.msra.mxu0 0.0
          %1165 = vmatprep.subr.mxu0 0.0
          %1166 = vmatpush1.msra.mxu0 0.0
          %1167 = vmatprep.subr.mxu0 0.0
          %1168 = vmatpush1.msra.mxu0 0.0
          %1169 = vmatprep.subr.mxu0 0.0
          %1170 = vmatpush1.msra.mxu0 0.0
          %1171 = vmatprep.subr.mxu0 0.0
          %1172 = vmatpush1.msra.mxu0 %v1139
          %1173 = vmatprep.subr.mxu0 0.0
          %1174 = vmatpush2.msra.mxu0 0.0
          %1175 = vmatprep.subr.mxu0 0.0
          %1176 = vmatpush2.msra.mxu0 0.0
          %1177 = vmatprep.subr.mxu0 0.0
          %1178 = vmatpush2.msra.mxu0 0.0
          %1179 = vmatprep.subr.mxu0 0.0
          %1180 = vmatpush2.msra.mxu0 0.0
          %1181 = vmatprep.subr.mxu0 0.0
          %1182 = vmatpush2.msra.mxu0 0.0
          %1183 = vmatprep.subr.mxu0 0.0
          %1184 = vmatpush2.msra.mxu0 0.0
          %1185 = vmatprep.subr.mxu0 0.0
          %1186 = vmatpush2.msra.mxu0 0.0
          %1187 = vmatprep.subr.mxu0 0.0
          %1188 = vmatpush2.msra.mxu0 0.0
          %1189 = vmatprep.subr.mxu0 0.0
          %1190 = vmatpush2.msra.mxu0 0.0
          %1191 = vmatprep.subr.mxu0 0.0
          %1192 = vmatpush2.msra.mxu0 0.0
          %1193 = vmatprep.subr.mxu0 0.0
          %1194 = vmatpush2.msra.mxu0 0.0
          %1195 = vmatprep.subr.mxu0 0.0
          %1196 = vmatpush2.msra.mxu0 0.0
          %1197 = vmatprep.subr.mxu0 0.0
          %1198 = vmatpush2.msra.mxu0 0.0
          %1199 = vmatprep.subr.mxu0 0.0
          %1200 = vmatpush2.msra.mxu0 0.0
          %1201 = vmatprep.subr.mxu0 0.0
          %1202 = vmatpush2.msra.mxu0 0.0
          %1203 = vmatprep.subr.mxu0 0.0
          %1204 = vmatpush2.msra.mxu0 0.0
          %1205 = vmatprep.mubr.f32.mxu0 0.0
          %1206 = vmatmul.mubr.f32.gmra.mxu0 %v1134
          %v1207 = vpop.f32.mrf.mxu0
          %v1208 = vadd.f32 0.0, %v1207
          %v1209 = vpop.f32.mrf.mxu0
          %1210 = vmatprep.mubr.f32.mxu0 0.0
          %1211 = vmatmul.mubr.f32.gmra.mxu0 %v1137
          %v1212 = vpop.f32.mrf.mxu0
          %v1213 = vadd.f32 0.0, %v1212
          %v1214 = vpop.f32.mrf.mxu0
          %1215 = vdwg.mxu0
          %v1216 = vadd.f32 %v1092, %v1208
          %v1217 = vadd.f32 %v1093, %v1213
          %1218 = vst.msk [vmem:[#allocation2] sm:$0xff] %vm567, %v1216
          %1219 = vst.msk [vmem:[#allocation2 + $0x8] sm:$0xff] %vm567, %v1217
          %v1220 = vld [vmem:[#allocation3] sm:$0xf]
          %v1221 = vld [vmem:[%s443] sm:$0xf]
          %v1222 = vld [vmem:[#allocation2] sm:$0xff]
          %v1223 = vld [vmem:[#allocation2 + $0x8] sm:$0xff]
          %1225 = vrot.lane.b32.xlu0 %v1220, 32
          %v1226 = vpop.permute.xlu0 %1225
          %1228 = vxpose.xlu0.b32.start [1/16] %v1226, 128
          %1229 = vxpose.xlu0.b32.cont [2/16] 0.0, 128
          %1230 = vxpose.xlu0.b32.cont [3/16] 0.0, 128
          %1231 = vxpose.xlu0.b32.cont [4/16] 0.0, 128
          %1232 = vxpose.xlu0.b32.cont [5/16] 0.0, 128
          %1233 = vxpose.xlu0.b32.cont [6/16] 0.0, 128
          %1234 = vxpose.xlu0.b32.cont [7/16] 0.0, 128
          %1235 = vxpose.xlu0.b32.cont [8/16] 0.0, 128
          %1236 = vxpose.xlu0.b32.cont [9/16] 0.0, 128
          %1237 = vxpose.xlu0.b32.cont [10/16] 0.0, 128
          %1238 = vxpose.xlu0.b32.cont [11/16] 0.0, 128
          %1239 = vxpose.xlu0.b32.cont [12/16] 0.0, 128
          %1240 = vxpose.xlu0.b32.cont [13/16] 0.0, 128
          %1241 = vxpose.xlu0.b32.cont [14/16] 0.0, 128
          %1242 = vxpose.xlu0.b32.cont [15/16] 0.0, 128
          %1243 = vxpose.xlu0.b32.end [16/16] 0.0, 128
          %v1244 = vpop.trf.xlu0
          %v1245 = vpop.trf.xlu0
          %v1246 = vpop.trf.xlu0
          %v1247 = vpop.trf.xlu0
          %v1248 = vpop.trf.xlu0
          %v1249 = vpop.trf.xlu0
          %v1250 = vpop.trf.xlu0
          %v1251 = vpop.trf.xlu0
          %v1252 = vpop.trf.xlu0
          %v1253 = vpop.trf.xlu0
          %v1254 = vpop.trf.xlu0
          %v1255 = vpop.trf.xlu0
          %v1256 = vpop.trf.xlu0
          %v1257 = vpop.trf.xlu0
          %v1258 = vpop.trf.xlu0
          %v1259 = vpop.trf.xlu0
          %1261 = vrot.lane.b32.xlu0 %v1221, 32
          %v1262 = vpop.permute.xlu0 %1261
          %v1264 = vsel %vm271, %v1244, 0
          %v1267 = vsel %vm271, %v1245, 0
          %v1269 = vsel %vm275, %v1262, 0
          %1271 = vmatprep.subr.mxu0 0.0
          %1272 = vmatpush1.msra.mxu0 0.0
          %1273 = vmatprep.subr.mxu0 0.0
          %1274 = vmatpush1.msra.mxu0 0.0
          %1275 = vmatprep.subr.mxu0 0.0
          %1276 = vmatpush1.msra.mxu0 0.0
          %1277 = vmatprep.subr.mxu0 0.0
          %1278 = vmatpush1.msra.mxu0 0.0
          %1279 = vmatprep.subr.mxu0 0.0
          %1280 = vmatpush1.msra.mxu0 0.0
          %1281 = vmatprep.subr.mxu0 0.0
          %1282 = vmatpush1.msra.mxu0 0.0
          %1283 = vmatprep.subr.mxu0 0.0
          %1284 = vmatpush1.msra.mxu0 0.0
          %1285 = vmatprep.subr.mxu0 0.0
          %1286 = vmatpush1.msra.mxu0 0.0
          %1287 = vmatprep.subr.mxu0 0.0
          %1288 = vmatpush1.msra.mxu0 0.0
          %1289 = vmatprep.subr.mxu0 0.0
          %1290 = vmatpush1.msra.mxu0 0.0
          %1291 = vmatprep.subr.mxu0 0.0
          %1292 = vmatpush1.msra.mxu0 0.0
          %1293 = vmatprep.subr.mxu0 0.0
          %1294 = vmatpush1.msra.mxu0 0.0
          %1295 = vmatprep.subr.mxu0 0.0
          %1296 = vmatpush1.msra.mxu0 0.0
          %1297 = vmatprep.subr.mxu0 0.0
          %1298 = vmatpush1.msra.mxu0 0.0
          %1299 = vmatprep.subr.mxu0 0.0
          %1300 = vmatpush1.msra.mxu0 0.0
          %1301 = vmatprep.subr.mxu0 0.0
          %1302 = vmatpush1.msra.mxu0 %v1269
          %1303 = vmatprep.subr.mxu0 0.0
          %1304 = vmatpush2.msra.mxu0 0.0
          %1305 = vmatprep.subr.mxu0 0.0
          %1306 = vmatpush2.msra.mxu0 0.0
          %1307 = vmatprep.subr.mxu0 0.0
          %1308 = vmatpush2.msra.mxu0 0.0
          %1309 = vmatprep.subr.mxu0 0.0
          %1310 = vmatpush2.msra.mxu0 0.0
          %1311 = vmatprep.subr.mxu0 0.0
          %1312 = vmatpush2.msra.mxu0 0.0
          %1313 = vmatprep.subr.mxu0 0.0
          %1314 = vmatpush2.msra.mxu0 0.0
          %1315 = vmatprep.subr.mxu0 0.0
          %1316 = vmatpush2.msra.mxu0 0.0
          %1317 = vmatprep.subr.mxu0 0.0
          %1318 = vmatpush2.msra.mxu0 0.0
          %1319 = vmatprep.subr.mxu0 0.0
          %1320 = vmatpush2.msra.mxu0 0.0
          %1321 = vmatprep.subr.mxu0 0.0
          %1322 = vmatpush2.msra.mxu0 0.0
          %1323 = vmatprep.subr.mxu0 0.0
          %1324 = vmatpush2.msra.mxu0 0.0
          %1325 = vmatprep.subr.mxu0 0.0
          %1326 = vmatpush2.msra.mxu0 0.0
          %1327 = vmatprep.subr.mxu0 0.0
          %1328 = vmatpush2.msra.mxu0 0.0
          %1329 = vmatprep.subr.mxu0 0.0
          %1330 = vmatpush2.msra.mxu0 0.0
          %1331 = vmatprep.subr.mxu0 0.0
          %1332 = vmatpush2.msra.mxu0 0.0
          %1333 = vmatprep.subr.mxu0 0.0
          %1334 = vmatpush2.msra.mxu0 0.0
          %1335 = vmatprep.mubr.f32.mxu0 0.0
          %1336 = vmatmul.mubr.f32.gmra.mxu0 %v1264
          %v1337 = vpop.f32.mrf.mxu0
          %v1338 = vadd.f32 0.0, %v1337
          %v1339 = vpop.f32.mrf.mxu0
          %1340 = vmatprep.mubr.f32.mxu0 0.0
          %1341 = vmatmul.mubr.f32.gmra.mxu0 %v1267
          %v1342 = vpop.f32.mrf.mxu0
          %v1343 = vadd.f32 0.0, %v1342
          %v1344 = vpop.f32.mrf.mxu0
          %1345 = vdwg.mxu0
          %v1346 = vadd.f32 %v1222, %v1338
          %v1347 = vadd.f32 %v1223, %v1343
          %1348 = vst.msk [vmem:[#allocation2] sm:$0xff] %vm567, %v1346
          %1349 = vst.msk [vmem:[#allocation2 + $0x8] sm:$0xff] %vm567, %v1347
          %v1350 = vld [vmem:[#allocation3] sm:$0xf]
          %v1351 = vld [vmem:[%s443] sm:$0xf]
          %v1352 = vld [vmem:[#allocation2] sm:$0xff]
          %v1353 = vld [vmem:[#allocation2 + $0x8] sm:$0xff]
          %1355 = vrot.lane.b32.xlu0 %v1350, 16
          %v1356 = vpop.permute.xlu0 %1355
          %1358 = vxpose.xlu0.b32.start [1/16] %v1356, 128
          %1359 = vxpose.xlu0.b32.cont [2/16] 0.0, 128
          %1360 = vxpose.xlu0.b32.cont [3/16] 0.0, 128
          %1361 = vxpose.xlu0.b32.cont [4/16] 0.0, 128
          %1362 = vxpose.xlu0.b32.cont [5/16] 0.0, 128
          %1363 = vxpose.xlu0.b32.cont [6/16] 0.0, 128
          %1364 = vxpose.xlu0.b32.cont [7/16] 0.0, 128
          %1365 = vxpose.xlu0.b32.cont [8/16] 0.0, 128
          %1366 = vxpose.xlu0.b32.cont [9/16] 0.0, 128
          %1367 = vxpose.xlu0.b32.cont [10/16] 0.0, 128
          %1368 = vxpose.xlu0.b32.cont [11/16] 0.0, 128
          %1369 = vxpose.xlu0.b32.cont [12/16] 0.0, 128
          %1370 = vxpose.xlu0.b32.cont [13/16] 0.0, 128
          %1371 = vxpose.xlu0.b32.cont [14/16] 0.0, 128
          %1372 = vxpose.xlu0.b32.cont [15/16] 0.0, 128
          %1373 = vxpose.xlu0.b32.end [16/16] 0.0, 128
          %v1374 = vpop.trf.xlu0
          %v1375 = vpop.trf.xlu0
          %v1376 = vpop.trf.xlu0
          %v1377 = vpop.trf.xlu0
          %v1378 = vpop.trf.xlu0
          %v1379 = vpop.trf.xlu0
          %v1380 = vpop.trf.xlu0
          %v1381 = vpop.trf.xlu0
          %v1382 = vpop.trf.xlu0
          %v1383 = vpop.trf.xlu0
          %v1384 = vpop.trf.xlu0
          %v1385 = vpop.trf.xlu0
          %v1386 = vpop.trf.xlu0
          %v1387 = vpop.trf.xlu0
          %v1388 = vpop.trf.xlu0
          %v1389 = vpop.trf.xlu0
          %1391 = vrot.lane.b32.xlu0 %v1351, 16
          %v1392 = vpop.permute.xlu0 %1391
          %v1394 = vsel %vm271, %v1374, 0
          %v1397 = vsel %vm271, %v1375, 0
          %v1399 = vsel %vm275, %v1392, 0
          %1401 = vmatprep.subr.mxu0 0.0
          %1402 = vmatpush1.msra.mxu0 0.0
          %1403 = vmatprep.subr.mxu0 0.0
          %1404 = vmatpush1.msra.mxu0 0.0
          %1405 = vmatprep.subr.mxu0 0.0
          %1406 = vmatpush1.msra.mxu0 0.0
          %1407 = vmatprep.subr.mxu0 0.0
          %1408 = vmatpush1.msra.mxu0 0.0
          %1409 = vmatprep.subr.mxu0 0.0
          %1410 = vmatpush1.msra.mxu0 0.0
          %1411 = vmatprep.subr.mxu0 0.0
          %1412 = vmatpush1.msra.mxu0 0.0
          %1413 = vmatprep.subr.mxu0 0.0
          %1414 = vmatpush1.msra.mxu0 0.0
          %1415 = vmatprep.subr.mxu0 0.0
          %1416 = vmatpush1.msra.mxu0 0.0
          %1417 = vmatprep.subr.mxu0 0.0
          %1418 = vmatpush1.msra.mxu0 0.0
          %1419 = vmatprep.subr.mxu0 0.0
          %1420 = vmatpush1.msra.mxu0 0.0
          %1421 = vmatprep.subr.mxu0 0.0
          %1422 = vmatpush1.msra.mxu0 0.0
          %1423 = vmatprep.subr.mxu0 0.0
          %1424 = vmatpush1.msra.mxu0 0.0
          %1425 = vmatprep.subr.mxu0 0.0
          %1426 = vmatpush1.msra.mxu0 0.0
          %1427 = vmatprep.subr.mxu0 0.0
          %1428 = vmatpush1.msra.mxu0 0.0
          %1429 = vmatprep.subr.mxu0 0.0
          %1430 = vmatpush1.msra.mxu0 0.0
          %1431 = vmatprep.subr.mxu0 0.0
          %1432 = vmatpush1.msra.mxu0 %v1399
          %1433 = vmatprep.subr.mxu0 0.0
          %1434 = vmatpush2.msra.mxu0 0.0
          %1435 = vmatprep.subr.mxu0 0.0
          %1436 = vmatpush2.msra.mxu0 0.0
          %1437 = vmatprep.subr.mxu0 0.0
          %1438 = vmatpush2.msra.mxu0 0.0
          %1439 = vmatprep.subr.mxu0 0.0
          %1440 = vmatpush2.msra.mxu0 0.0
          %1441 = vmatprep.subr.mxu0 0.0
          %1442 = vmatpush2.msra.mxu0 0.0
          %1443 = vmatprep.subr.mxu0 0.0
          %1444 = vmatpush2.msra.mxu0 0.0
          %1445 = vmatprep.subr.mxu0 0.0
          %1446 = vmatpush2.msra.mxu0 0.0
          %1447 = vmatprep.subr.mxu0 0.0
          %1448 = vmatpush2.msra.mxu0 0.0
          %1449 = vmatprep.subr.mxu0 0.0
          %1450 = vmatpush2.msra.mxu0 0.0
          %1451 = vmatprep.subr.mxu0 0.0
          %1452 = vmatpush2.msra.mxu0 0.0
          %1453 = vmatprep.subr.mxu0 0.0
          %1454 = vmatpush2.msra.mxu0 0.0
          %1455 = vmatprep.subr.mxu0 0.0
          %1456 = vmatpush2.msra.mxu0 0.0
          %1457 = vmatprep.subr.mxu0 0.0
          %1458 = vmatpush2.msra.mxu0 0.0
          %1459 = vmatprep.subr.mxu0 0.0
          %1460 = vmatpush2.msra.mxu0 0.0
          %1461 = vmatprep.subr.mxu0 0.0
          %1462 = vmatpush2.msra.mxu0 0.0
          %1463 = vmatprep.subr.mxu0 0.0
          %1464 = vmatpush2.msra.mxu0 0.0
          %1465 = vmatprep.mubr.f32.mxu0 0.0
          %1466 = vmatmul.mubr.f32.gmra.mxu0 %v1394
          %v1467 = vpop.f32.mrf.mxu0
          %v1468 = vadd.f32 0.0, %v1467
          %v1469 = vpop.f32.mrf.mxu0
          %1470 = vmatprep.mubr.f32.mxu0 0.0
          %1471 = vmatmul.mubr.f32.gmra.mxu0 %v1397
          %v1472 = vpop.f32.mrf.mxu0
          %v1473 = vadd.f32 0.0, %v1472
          %v1474 = vpop.f32.mrf.mxu0
          %1475 = vdwg.mxu0
          %v1476 = vadd.f32 %v1352, %v1468
          %v1477 = vadd.f32 %v1353, %v1473
          %1478 = vst.msk [vmem:[#allocation2] sm:$0xff] %vm567, %v1476
          %1479 = vst.msk [vmem:[#allocation2 + $0x8] sm:$0xff] %vm567, %v1477
          %v1480 = vld [vmem:[#allocation3 + $0x4] sm:$0xf]
          %v1481 = vld [vmem:[%s443 + $0x4] sm:$0xf]
          %v1482 = vld [vmem:[#allocation2] sm:$0xff]
          %v1483 = vld [vmem:[#allocation2 + $0x8] sm:$0xff]
          %1484 = vxpose.xlu0.b32.start [1/16] %v1480, 128
          %1485 = vxpose.xlu0.b32.cont [2/16] 0.0, 128
          %1486 = vxpose.xlu0.b32.cont [3/16] 0.0, 128
          %1487 = vxpose.xlu0.b32.cont [4/16] 0.0, 128
          %1488 = vxpose.xlu0.b32.cont [5/16] 0.0, 128
          %1489 = vxpose.xlu0.b32.cont [6/16] 0.0, 128
          %1490 = vxpose.xlu0.b32.cont [7/16] 0.0, 128
          %1491 = vxpose.xlu0.b32.cont [8/16] 0.0, 128
          %1492 = vxpose.xlu0.b32.cont [9/16] 0.0, 128
          %1493 = vxpose.xlu0.b32.cont [10/16] 0.0, 128
          %1494 = vxpose.xlu0.b32.cont [11/16] 0.0, 128
          %1495 = vxpose.xlu0.b32.cont [12/16] 0.0, 128
          %1496 = vxpose.xlu0.b32.cont [13/16] 0.0, 128
          %1497 = vxpose.xlu0.b32.cont [14/16] 0.0, 128
          %1498 = vxpose.xlu0.b32.cont [15/16] 0.0, 128
          %1499 = vxpose.xlu0.b32.end [16/16] 0.0, 128
          %v1500 = vpop.trf.xlu0
          %v1501 = vpop.trf.xlu0
          %v1502 = vpop.trf.xlu0
          %v1503 = vpop.trf.xlu0
          %v1504 = vpop.trf.xlu0
          %v1505 = vpop.trf.xlu0
          %v1506 = vpop.trf.xlu0
          %v1507 = vpop.trf.xlu0
          %v1508 = vpop.trf.xlu0
          %v1509 = vpop.trf.xlu0
          %v1510 = vpop.trf.xlu0
          %v1511 = vpop.trf.xlu0
          %v1512 = vpop.trf.xlu0
          %v1513 = vpop.trf.xlu0
          %v1514 = vpop.trf.xlu0
          %v1515 = vpop.trf.xlu0
          %v1517 = vsel %vm271, %v1500, 0
          %v1520 = vsel %vm271, %v1501, 0
          %v1523 = vsel %vm275, %v1481, 0
          %1525 = vmatprep.subr.mxu0 0.0
          %1526 = vmatpush1.msra.mxu0 0.0
          %1527 = vmatprep.subr.mxu0 0.0
          %1528 = vmatpush1.msra.mxu0 0.0
          %1529 = vmatprep.subr.mxu0 0.0
          %1530 = vmatpush1.msra.mxu0 0.0
          %1531 = vmatprep.subr.mxu0 0.0
          %1532 = vmatpush1.msra.mxu0 0.0
          %1533 = vmatprep.subr.mxu0 0.0
          %1534 = vmatpush1.msra.mxu0 0.0
          %1535 = vmatprep.subr.mxu0 0.0
          %1536 = vmatpush1.msra.mxu0 0.0
          %1537 = vmatprep.subr.mxu0 0.0
          %1538 = vmatpush1.msra.mxu0 0.0
          %1539 = vmatprep.subr.mxu0 0.0
          %1540 = vmatpush1.msra.mxu0 0.0
          %1541 = vmatprep.subr.mxu0 0.0
          %1542 = vmatpush1.msra.mxu0 0.0
          %1543 = vmatprep.subr.mxu0 0.0
          %1544 = vmatpush1.msra.mxu0 0.0
          %1545 = vmatprep.subr.mxu0 0.0
          %1546 = vmatpush1.msra.mxu0 0.0
          %1547 = vmatprep.subr.mxu0 0.0
          %1548 = vmatpush1.msra.mxu0 0.0
          %1549 = vmatprep.subr.mxu0 0.0
          %1550 = vmatpush1.msra.mxu0 0.0
          %1551 = vmatprep.subr.mxu0 0.0
          %1552 = vmatpush1.msra.mxu0 0.0
          %1553 = vmatprep.subr.mxu0 0.0
          %1554 = vmatpush1.msra.mxu0 0.0
          %1555 = vmatprep.subr.mxu0 0.0
          %1556 = vmatpush1.msra.mxu0 %v1523
          %1557 = vmatprep.subr.mxu0 0.0
          %1558 = vmatpush2.msra.mxu0 0.0
          %1559 = vmatprep.subr.mxu0 0.0
          %1560 = vmatpush2.msra.mxu0 0.0
          %1561 = vmatprep.subr.mxu0 0.0
          %1562 = vmatpush2.msra.mxu0 0.0
          %1563 = vmatprep.subr.mxu0 0.0
          %1564 = vmatpush2.msra.mxu0 0.0
          %1565 = vmatprep.subr.mxu0 0.0
          %1566 = vmatpush2.msra.mxu0 0.0
          %1567 = vmatprep.subr.mxu0 0.0
          %1568 = vmatpush2.msra.mxu0 0.0
          %1569 = vmatprep.subr.mxu0 0.0
          %1570 = vmatpush2.msra.mxu0 0.0
          %1571 = vmatprep.subr.mxu0 0.0
          %1572 = vmatpush2.msra.mxu0 0.0
          %1573 = vmatprep.subr.mxu0 0.0
          %1574 = vmatpush2.msra.mxu0 0.0
          %1575 = vmatprep.subr.mxu0 0.0
          %1576 = vmatpush2.msra.mxu0 0.0
          %1577 = vmatprep.subr.mxu0 0.0
          %1578 = vmatpush2.msra.mxu0 0.0
          %1579 = vmatprep.subr.mxu0 0.0
          %1580 = vmatpush2.msra.mxu0 0.0
          %1581 = vmatprep.subr.mxu0 0.0
          %1582 = vmatpush2.msra.mxu0 0.0
          %1583 = vmatprep.subr.mxu0 0.0
          %1584 = vmatpush2.msra.mxu0 0.0
          %1585 = vmatprep.subr.mxu0 0.0
          %1586 = vmatpush2.msra.mxu0 0.0
          %1587 = vmatprep.subr.mxu0 0.0
          %1588 = vmatpush2.msra.mxu0 0.0
          %1589 = vmatprep.mubr.f32.mxu0 0.0
          %1590 = vmatmul.mubr.f32.gmra.mxu0 %v1517
          %v1591 = vpop.f32.mrf.mxu0
          %v1592 = vadd.f32 0.0, %v1591
          %v1593 = vpop.f32.mrf.mxu0
          %1594 = vmatprep.mubr.f32.mxu0 0.0
          %1595 = vmatmul.mubr.f32.gmra.mxu0 %v1520
          %v1596 = vpop.f32.mrf.mxu0
          %v1597 = vadd.f32 0.0, %v1596
          %v1598 = vpop.f32.mrf.mxu0
          %1599 = vdwg.mxu0
          %v1600 = vadd.f32 %v1482, %v1592
          %v1601 = vadd.f32 %v1483, %v1597
          %1602 = vst.msk [vmem:[#allocation2] sm:$0xff] %vm567, %v1600
          %1603 = vst.msk [vmem:[#allocation2 + $0x8] sm:$0xff] %vm567, %v1601
          %v1604 = vld [vmem:[#allocation3 + $0x4] sm:$0xf]
          %v1605 = vld [vmem:[%s443 + $0x4] sm:$0xf]
          %v1606 = vld [vmem:[#allocation2] sm:$0xff]
          %v1607 = vld [vmem:[#allocation2 + $0x8] sm:$0xff]
          %1609 = vrot.lane.b32.xlu0 %v1604, 112
          %v1610 = vpop.permute.xlu0 %1609
          %1612 = vxpose.xlu0.b32.start [1/16] %v1610, 128
          %1613 = vxpose.xlu0.b32.cont [2/16] 0.0, 128
          %1614 = vxpose.xlu0.b32.cont [3/16] 0.0, 128
          %1615 = vxpose.xlu0.b32.cont [4/16] 0.0, 128
          %1616 = vxpose.xlu0.b32.cont [5/16] 0.0, 128
          %1617 = vxpose.xlu0.b32.cont [6/16] 0.0, 128
          %1618 = vxpose.xlu0.b32.cont [7/16] 0.0, 128
          %1619 = vxpose.xlu0.b32.cont [8/16] 0.0, 128
          %1620 = vxpose.xlu0.b32.cont [9/16] 0.0, 128
          %1621 = vxpose.xlu0.b32.cont [10/16] 0.0, 128
          %1622 = vxpose.xlu0.b32.cont [11/16] 0.0, 128
          %1623 = vxpose.xlu0.b32.cont [12/16] 0.0, 128
          %1624 = vxpose.xlu0.b32.cont [13/16] 0.0, 128
          %1625 = vxpose.xlu0.b32.cont [14/16] 0.0, 128
          %1626 = vxpose.xlu0.b32.cont [15/16] 0.0, 128
          %1627 = vxpose.xlu0.b32.end [16/16] 0.0, 128
          %v1628 = vpop.trf.xlu0
          %v1629 = vpop.trf.xlu0
          %v1630 = vpop.trf.xlu0
          %v1631 = vpop.trf.xlu0
          %v1632 = vpop.trf.xlu0
          %v1633 = vpop.trf.xlu0
          %v1634 = vpop.trf.xlu0
          %v1635 = vpop.trf.xlu0
          %v1636 = vpop.trf.xlu0
          %v1637 = vpop.trf.xlu0
          %v1638 = vpop.trf.xlu0
          %v1639 = vpop.trf.xlu0
          %v1640 = vpop.trf.xlu0
          %v1641 = vpop.trf.xlu0
          %v1642 = vpop.trf.xlu0
          %v1643 = vpop.trf.xlu0
          %1645 = vrot.lane.b32.xlu0 %v1605, 112
          %v1646 = vpop.permute.xlu0 %1645
          %v1648 = vsel %vm271, %v1628, 0
          %v1651 = vsel %vm271, %v1629, 0
          %v1653 = vsel %vm275, %v1646, 0
          %1655 = vmatprep.subr.mxu0 0.0
          %1656 = vmatpush1.msra.mxu0 0.0
          %1657 = vmatprep.subr.mxu0 0.0
          %1658 = vmatpush1.msra.mxu0 0.0
          %1659 = vmatprep.subr.mxu0 0.0
          %1660 = vmatpush1.msra.mxu0 0.0
          %1661 = vmatprep.subr.mxu0 0.0
          %1662 = vmatpush1.msra.mxu0 0.0
          %1663 = vmatprep.subr.mxu0 0.0
          %1664 = vmatpush1.msra.mxu0 0.0
          %1665 = vmatprep.subr.mxu0 0.0
          %1666 = vmatpush1.msra.mxu0 0.0
          %1667 = vmatprep.subr.mxu0 0.0
          %1668 = vmatpush1.msra.mxu0 0.0
          %1669 = vmatprep.subr.mxu0 0.0
          %1670 = vmatpush1.msra.mxu0 0.0
          %1671 = vmatprep.subr.mxu0 0.0
          %1672 = vmatpush1.msra.mxu0 0.0
          %1673 = vmatprep.subr.mxu0 0.0
          %1674 = vmatpush1.msra.mxu0 0.0
          %1675 = vmatprep.subr.mxu0 0.0
          %1676 = vmatpush1.msra.mxu0 0.0
          %1677 = vmatprep.subr.mxu0 0.0
          %1678 = vmatpush1.msra.mxu0 0.0
          %1679 = vmatprep.subr.mxu0 0.0
          %1680 = vmatpush1.msra.mxu0 0.0
          %1681 = vmatprep.subr.mxu0 0.0
          %1682 = vmatpush1.msra.mxu0 0.0
          %1683 = vmatprep.subr.mxu0 0.0
          %1684 = vmatpush1.msra.mxu0 0.0
          %1685 = vmatprep.subr.mxu0 0.0
          %1686 = vmatpush1.msra.mxu0 %v1653
          %1687 = vmatprep.subr.mxu0 0.0
          %1688 = vmatpush2.msra.mxu0 0.0
          %1689 = vmatprep.subr.mxu0 0.0
          %1690 = vmatpush2.msra.mxu0 0.0
          %1691 = vmatprep.subr.mxu0 0.0
          %1692 = vmatpush2.msra.mxu0 0.0
          %1693 = vmatprep.subr.mxu0 0.0
          %1694 = vmatpush2.msra.mxu0 0.0
          %1695 = vmatprep.subr.mxu0 0.0
          %1696 = vmatpush2.msra.mxu0 0.0
          %1697 = vmatprep.subr.mxu0 0.0
          %1698 = vmatpush2.msra.mxu0 0.0
          %1699 = vmatprep.subr.mxu0 0.0
          %1700 = vmatpush2.msra.mxu0 0.0
          %1701 = vmatprep.subr.mxu0 0.0
          %1702 = vmatpush2.msra.mxu0 0.0
          %1703 = vmatprep.subr.mxu0 0.0
          %1704 = vmatpush2.msra.mxu0 0.0
          %1705 = vmatprep.subr.mxu0 0.0
          %1706 = vmatpush2.msra.mxu0 0.0
          %1707 = vmatprep.subr.mxu0 0.0
          %1708 = vmatpush2.msra.mxu0 0.0
          %1709 = vmatprep.subr.mxu0 0.0
          %1710 = vmatpush2.msra.mxu0 0.0
          %1711 = vmatprep.subr.mxu0 0.0
          %1712 = vmatpush2.msra.mxu0 0.0
          %1713 = vmatprep.subr.mxu0 0.0
          %1714 = vmatpush2.msra.mxu0 0.0
          %1715 = vmatprep.subr.mxu0 0.0
          %1716 = vmatpush2.msra.mxu0 0.0
          %1717 = vmatprep.subr.mxu0 0.0
          %1718 = vmatpush2.msra.mxu0 0.0
          %1719 = vmatprep.mubr.f32.mxu0 0.0
          %1720 = vmatmul.mubr.f32.gmra.mxu0 %v1648
          %v1721 = vpop.f32.mrf.mxu0
          %v1722 = vadd.f32 0.0, %v1721
          %v1723 = vpop.f32.mrf.mxu0
          %1724 = vmatprep.mubr.f32.mxu0 0.0
          %1725 = vmatmul.mubr.f32.gmra.mxu0 %v1651
          %v1726 = vpop.f32.mrf.mxu0
          %v1727 = vadd.f32 0.0, %v1726
          %v1728 = vpop.f32.mrf.mxu0
          %1729 = vdwg.mxu0
          %v1730 = vadd.f32 %v1606, %v1722
          %v1731 = vadd.f32 %v1607, %v1727
          %1732 = vst.msk [vmem:[#allocation2] sm:$0xff] %vm567, %v1730
          %1733 = vst.msk [vmem:[#allocation2 + $0x8] sm:$0xff] %vm567, %v1731
          %v1734 = vld [vmem:[#allocation3 + $0x4] sm:$0xf]
          %v1735 = vld [vmem:[%s443 + $0x4] sm:$0xf]
          %v1736 = vld [vmem:[#allocation2] sm:$0xff]
          %v1737 = vld [vmem:[#allocation2 + $0x8] sm:$0xff]
          %1739 = vrot.lane.b32.xlu0 %v1734, 96
          %v1740 = vpop.permute.xlu0 %1739
          %1742 = vxpose.xlu0.b32.start [1/16] %v1740, 128
          %1743 = vxpose.xlu0.b32.cont [2/16] 0.0, 128
          %1744 = vxpose.xlu0.b32.cont [3/16] 0.0, 128
          %1745 = vxpose.xlu0.b32.cont [4/16] 0.0, 128
          %1746 = vxpose.xlu0.b32.cont [5/16] 0.0, 128
          %1747 = vxpose.xlu0.b32.cont [6/16] 0.0, 128
          %1748 = vxpose.xlu0.b32.cont [7/16] 0.0, 128
          %1749 = vxpose.xlu0.b32.cont [8/16] 0.0, 128
          %1750 = vxpose.xlu0.b32.cont [9/16] 0.0, 128
          %1751 = vxpose.xlu0.b32.cont [10/16] 0.0, 128
          %1752 = vxpose.xlu0.b32.cont [11/16] 0.0, 128
          %1753 = vxpose.xlu0.b32.cont [12/16] 0.0, 128
          %1754 = vxpose.xlu0.b32.cont [13/16] 0.0, 128
          %1755 = vxpose.xlu0.b32.cont [14/16] 0.0, 128
          %1756 = vxpose.xlu0.b32.cont [15/16] 0.0, 128
          %1757 = vxpose.xlu0.b32.end [16/16] 0.0, 128
          %v1758 = vpop.trf.xlu0
          %v1759 = vpop.trf.xlu0
          %v1760 = vpop.trf.xlu0
          %v1761 = vpop.trf.xlu0
          %v1762 = vpop.trf.xlu0
          %v1763 = vpop.trf.xlu0
          %v1764 = vpop.trf.xlu0
          %v1765 = vpop.trf.xlu0
          %v1766 = vpop.trf.xlu0
          %v1767 = vpop.trf.xlu0
          %v1768 = vpop.trf.xlu0
          %v1769 = vpop.trf.xlu0
          %v1770 = vpop.trf.xlu0
          %v1771 = vpop.trf.xlu0
          %v1772 = vpop.trf.xlu0
          %v1773 = vpop.trf.xlu0
          %1775 = vrot.lane.b32.xlu0 %v1735, 96
          %v1776 = vpop.permute.xlu0 %1775
          %v1778 = vsel %vm271, %v1758, 0
          %v1781 = vsel %vm271, %v1759, 0
          %v1783 = vsel %vm275, %v1776, 0
          %1785 = vmatprep.subr.mxu0 0.0
          %1786 = vmatpush1.msra.mxu0 0.0
          %1787 = vmatprep.subr.mxu0 0.0
          %1788 = vmatpush1.msra.mxu0 0.0
          %1789 = vmatprep.subr.mxu0 0.0
          %1790 = vmatpush1.msra.mxu0 0.0
          %1791 = vmatprep.subr.mxu0 0.0
          %1792 = vmatpush1.msra.mxu0 0.0
          %1793 = vmatprep.subr.mxu0 0.0
          %1794 = vmatpush1.msra.mxu0 0.0
          %1795 = vmatprep.subr.mxu0 0.0
          %1796 = vmatpush1.msra.mxu0 0.0
          %1797 = vmatprep.subr.mxu0 0.0
          %1798 = vmatpush1.msra.mxu0 0.0
          %1799 = vmatprep.subr.mxu0 0.0
          %1800 = vmatpush1.msra.mxu0 0.0
          %1801 = vmatprep.subr.mxu0 0.0
          %1802 = vmatpush1.msra.mxu0 0.0
          %1803 = vmatprep.subr.mxu0 0.0
          %1804 = vmatpush1.msra.mxu0 0.0
          %1805 = vmatprep.subr.mxu0 0.0
          %1806 = vmatpush1.msra.mxu0 0.0
          %1807 = vmatprep.subr.mxu0 0.0
          %1808 = vmatpush1.msra.mxu0 0.0
          %1809 = vmatprep.subr.mxu0 0.0
          %1810 = vmatpush1.msra.mxu0 0.0
          %1811 = vmatprep.subr.mxu0 0.0
          %1812 = vmatpush1.msra.mxu0 0.0
          %1813 = vmatprep.subr.mxu0 0.0
          %1814 = vmatpush1.msra.mxu0 0.0
          %1815 = vmatprep.subr.mxu0 0.0
          %1816 = vmatpush1.msra.mxu0 %v1783
          %1817 = vmatprep.subr.mxu0 0.0
          %1818 = vmatpush2.msra.mxu0 0.0
          %1819 = vmatprep.subr.mxu0 0.0
          %1820 = vmatpush2.msra.mxu0 0.0
          %1821 = vmatprep.subr.mxu0 0.0
          %1822 = vmatpush2.msra.mxu0 0.0
          %1823 = vmatprep.subr.mxu0 0.0
          %1824 = vmatpush2.msra.mxu0 0.0
          %1825 = vmatprep.subr.mxu0 0.0
          %1826 = vmatpush2.msra.mxu0 0.0
          %1827 = vmatprep.subr.mxu0 0.0
          %1828 = vmatpush2.msra.mxu0 0.0
          %1829 = vmatprep.subr.mxu0 0.0
          %1830 = vmatpush2.msra.mxu0 0.0
          %1831 = vmatprep.subr.mxu0 0.0
          %1832 = vmatpush2.msra.mxu0 0.0
          %1833 = vmatprep.subr.mxu0 0.0
          %1834 = vmatpush2.msra.mxu0 0.0
          %1835 = vmatprep.subr.mxu0 0.0
          %1836 = vmatpush2.msra.mxu0 0.0
          %1837 = vmatprep.subr.mxu0 0.0
          %1838 = vmatpush2.msra.mxu0 0.0
          %1839 = vmatprep.subr.mxu0 0.0
          %1840 = vmatpush2.msra.mxu0 0.0
          %1841 = vmatprep.subr.mxu0 0.0
          %1842 = vmatpush2.msra.mxu0 0.0
          %1843 = vmatprep.subr.mxu0 0.0
          %1844 = vmatpush2.msra.mxu0 0.0
          %1845 = vmatprep.subr.mxu0 0.0
          %1846 = vmatpush2.msra.mxu0 0.0
          %1847 = vmatprep.subr.mxu0 0.0
          %1848 = vmatpush2.msra.mxu0 0.0
          %1849 = vmatprep.mubr.f32.mxu0 0.0
          %1850 = vmatmul.mubr.f32.gmra.mxu0 %v1778
          %v1851 = vpop.f32.mrf.mxu0
          %v1852 = vadd.f32 0.0, %v1851
          %v1853 = vpop.f32.mrf.mxu0
          %1854 = vmatprep.mubr.f32.mxu0 0.0
          %1855 = vmatmul.mubr.f32.gmra.mxu0 %v1781
          %v1856 = vpop.f32.mrf.mxu0
          %v1857 = vadd.f32 0.0, %v1856
          %v1858 = vpop.f32.mrf.mxu0
          %1859 = vdwg.mxu0
          %v1860 = vadd.f32 %v1736, %v1852
          %v1861 = vadd.f32 %v1737, %v1857
          %1862 = vst.msk [vmem:[#allocation2] sm:$0xff] %vm567, %v1860
          %1863 = vst.msk [vmem:[#allocation2 + $0x8] sm:$0xff] %vm567, %v1861
          %v1864 = vld [vmem:[#allocation3 + $0x4] sm:$0xf]
          %v1865 = vld [vmem:[%s443 + $0x4] sm:$0xf]
          %v1866 = vld [vmem:[#allocation2] sm:$0xff]
          %v1867 = vld [vmem:[#allocation2 + $0x8] sm:$0xff]
          %1869 = vrot.lane.b32.xlu0 %v1864, 80
          %v1870 = vpop.permute.xlu0 %1869
          %1872 = vxpose.xlu0.b32.start [1/16] %v1870, 128
          %1873 = vxpose.xlu0.b32.cont [2/16] 0.0, 128
          %1874 = vxpose.xlu0.b32.cont [3/16] 0.0, 128
          %1875 = vxpose.xlu0.b32.cont [4/16] 0.0, 128
          %1876 = vxpose.xlu0.b32.cont [5/16] 0.0, 128
          %1877 = vxpose.xlu0.b32.cont [6/16] 0.0, 128
          %1878 = vxpose.xlu0.b32.cont [7/16] 0.0, 128
          %1879 = vxpose.xlu0.b32.cont [8/16] 0.0, 128
          %1880 = vxpose.xlu0.b32.cont [9/16] 0.0, 128
          %1881 = vxpose.xlu0.b32.cont [10/16] 0.0, 128
          %1882 = vxpose.xlu0.b32.cont [11/16] 0.0, 128
          %1883 = vxpose.xlu0.b32.cont [12/16] 0.0, 128
          %1884 = vxpose.xlu0.b32.cont [13/16] 0.0, 128
          %1885 = vxpose.xlu0.b32.cont [14/16] 0.0, 128
          %1886 = vxpose.xlu0.b32.cont [15/16] 0.0, 128
          %1887 = vxpose.xlu0.b32.end [16/16] 0.0, 128
          %v1888 = vpop.trf.xlu0
          %v1889 = vpop.trf.xlu0
          %v1890 = vpop.trf.xlu0
          %v1891 = vpop.trf.xlu0
          %v1892 = vpop.trf.xlu0
          %v1893 = vpop.trf.xlu0
          %v1894 = vpop.trf.xlu0
          %v1895 = vpop.trf.xlu0
          %v1896 = vpop.trf.xlu0
          %v1897 = vpop.trf.xlu0
          %v1898 = vpop.trf.xlu0
          %v1899 = vpop.trf.xlu0
          %v1900 = vpop.trf.xlu0
          %v1901 = vpop.trf.xlu0
          %v1902 = vpop.trf.xlu0
          %v1903 = vpop.trf.xlu0
          %1905 = vrot.lane.b32.xlu0 %v1865, 80
          %v1906 = vpop.permute.xlu0 %1905
          %v1908 = vsel %vm271, %v1888, 0
          %v1911 = vsel %vm271, %v1889, 0
          %v1913 = vsel %vm275, %v1906, 0
          %1915 = vmatprep.subr.mxu0 0.0
          %1916 = vmatpush1.msra.mxu0 0.0
          %1917 = vmatprep.subr.mxu0 0.0
          %1918 = vmatpush1.msra.mxu0 0.0
          %1919 = vmatprep.subr.mxu0 0.0
          %1920 = vmatpush1.msra.mxu0 0.0
          %1921 = vmatprep.subr.mxu0 0.0
          %1922 = vmatpush1.msra.mxu0 0.0
          %1923 = vmatprep.subr.mxu0 0.0
          %1924 = vmatpush1.msra.mxu0 0.0
          %1925 = vmatprep.subr.mxu0 0.0
          %1926 = vmatpush1.msra.mxu0 0.0
          %1927 = vmatprep.subr.mxu0 0.0
          %1928 = vmatpush1.msra.mxu0 0.0
          %1929 = vmatprep.subr.mxu0 0.0
          %1930 = vmatpush1.msra.mxu0 0.0
          %1931 = vmatprep.subr.mxu0 0.0
          %1932 = vmatpush1.msra.mxu0 0.0
          %1933 = vmatprep.subr.mxu0 0.0
          %1934 = vmatpush1.msra.mxu0 0.0
          %1935 = vmatprep.subr.mxu0 0.0
          %1936 = vmatpush1.msra.mxu0 0.0
          %1937 = vmatprep.subr.mxu0 0.0
          %1938 = vmatpush1.msra.mxu0 0.0
          %1939 = vmatprep.subr.mxu0 0.0
          %1940 = vmatpush1.msra.mxu0 0.0
          %1941 = vmatprep.subr.mxu0 0.0
          %1942 = vmatpush1.msra.mxu0 0.0
          %1943 = vmatprep.subr.mxu0 0.0
          %1944 = vmatpush1.msra.mxu0 0.0
          %1945 = vmatprep.subr.mxu0 0.0
          %1946 = vmatpush1.msra.mxu0 %v1913
          %1947 = vmatprep.subr.mxu0 0.0
          %1948 = vmatpush2.msra.mxu0 0.0
          %1949 = vmatprep.subr.mxu0 0.0
          %1950 = vmatpush2.msra.mxu0 0.0
          %1951 = vmatprep.subr.mxu0 0.0
          %1952 = vmatpush2.msra.mxu0 0.0
          %1953 = vmatprep.subr.mxu0 0.0
          %1954 = vmatpush2.msra.mxu0 0.0
          %1955 = vmatprep.subr.mxu0 0.0
          %1956 = vmatpush2.msra.mxu0 0.0
          %1957 = vmatprep.subr.mxu0 0.0
          %1958 = vmatpush2.msra.mxu0 0.0
          %1959 = vmatprep.subr.mxu0 0.0
          %1960 = vmatpush2.msra.mxu0 0.0
          %1961 = vmatprep.subr.mxu0 0.0
          %1962 = vmatpush2.msra.mxu0 0.0
          %1963 = vmatprep.subr.mxu0 0.0
          %1964 = vmatpush2.msra.mxu0 0.0
          %1965 = vmatprep.subr.mxu0 0.0
          %1966 = vmatpush2.msra.mxu0 0.0
          %1967 = vmatprep.subr.mxu0 0.0
          %1968 = vmatpush2.msra.mxu0 0.0
          %1969 = vmatprep.subr.mxu0 0.0
          %1970 = vmatpush2.msra.mxu0 0.0
          %1971 = vmatprep.subr.mxu0 0.0
          %1972 = vmatpush2.msra.mxu0 0.0
          %1973 = vmatprep.subr.mxu0 0.0
          %1974 = vmatpush2.msra.mxu0 0.0
          %1975 = vmatprep.subr.mxu0 0.0
          %1976 = vmatpush2.msra.mxu0 0.0
          %1977 = vmatprep.subr.mxu0 0.0
          %1978 = vmatpush2.msra.mxu0 0.0
          %1979 = vmatprep.mubr.f32.mxu0 0.0
          %1980 = vmatmul.mubr.f32.gmra.mxu0 %v1908
          %v1981 = vpop.f32.mrf.mxu0
          %v1982 = vadd.f32 0.0, %v1981
          %v1983 = vpop.f32.mrf.mxu0
          %1984 = vmatprep.mubr.f32.mxu0 0.0
          %1985 = vmatmul.mubr.f32.gmra.mxu0 %v1911
          %v1986 = vpop.f32.mrf.mxu0
          %v1987 = vadd.f32 0.0, %v1986
          %v1988 = vpop.f32.mrf.mxu0
          %1989 = vdwg.mxu0
          %v1990 = vadd.f32 %v1866, %v1982
          %v1991 = vadd.f32 %v1867, %v1987
          %1992 = vst.msk [vmem:[#allocation2] sm:$0xff] %vm567, %v1990
          %1993 = vst.msk [vmem:[#allocation2 + $0x8] sm:$0xff] %vm567, %v1991
          %v1994 = vld [vmem:[#allocation3 + $0x4] sm:$0xf]
          %v1995 = vld [vmem:[%s443 + $0x4] sm:$0xf]
          %v1996 = vld [vmem:[#allocation2] sm:$0xff]
          %v1997 = vld [vmem:[#allocation2 + $0x8] sm:$0xff]
          %1999 = vrot.lane.b32.xlu0 %v1994, 64
          %v2000 = vpop.permute.xlu0 %1999
          %2002 = vxpose.xlu0.b32.start [1/16] %v2000, 128
          %2003 = vxpose.xlu0.b32.cont [2/16] 0.0, 128
          %2004 = vxpose.xlu0.b32.cont [3/16] 0.0, 128
          %2005 = vxpose.xlu0.b32.cont [4/16] 0.0, 128
          %2006 = vxpose.xlu0.b32.cont [5/16] 0.0, 128
          %2007 = vxpose.xlu0.b32.cont [6/16] 0.0, 128
          %2008 = vxpose.xlu0.b32.cont [7/16] 0.0, 128
          %2009 = vxpose.xlu0.b32.cont [8/16] 0.0, 128
          %2010 = vxpose.xlu0.b32.cont [9/16] 0.0, 128
          %2011 = vxpose.xlu0.b32.cont [10/16] 0.0, 128
          %2012 = vxpose.xlu0.b32.cont [11/16] 0.0, 128
          %2013 = vxpose.xlu0.b32.cont [12/16] 0.0, 128
          %2014 = vxpose.xlu0.b32.cont [13/16] 0.0, 128
          %2015 = vxpose.xlu0.b32.cont [14/16] 0.0, 128
          %2016 = vxpose.xlu0.b32.cont [15/16] 0.0, 128
          %2017 = vxpose.xlu0.b32.end [16/16] 0.0, 128
          %v2018 = vpop.trf.xlu0
          %v2019 = vpop.trf.xlu0
          %v2020 = vpop.trf.xlu0
          %v2021 = vpop.trf.xlu0
          %v2022 = vpop.trf.xlu0
          %v2023 = vpop.trf.xlu0
          %v2024 = vpop.trf.xlu0
          %v2025 = vpop.trf.xlu0
          %v2026 = vpop.trf.xlu0
          %v2027 = vpop.trf.xlu0
          %v2028 = vpop.trf.xlu0
          %v2029 = vpop.trf.xlu0
          %v2030 = vpop.trf.xlu0
          %v2031 = vpop.trf.xlu0
          %v2032 = vpop.trf.xlu0
          %v2033 = vpop.trf.xlu0
          %2035 = vrot.lane.b32.xlu0 %v1995, 64
          %v2036 = vpop.permute.xlu0 %2035
          %v2038 = vsel %vm271, %v2018, 0
          %v2041 = vsel %vm271, %v2019, 0
          %v2043 = vsel %vm275, %v2036, 0
          %2045 = vmatprep.subr.mxu0 0.0
          %2046 = vmatpush1.msra.mxu0 0.0
          %2047 = vmatprep.subr.mxu0 0.0
          %2048 = vmatpush1.msra.mxu0 0.0
          %2049 = vmatprep.subr.mxu0 0.0
          %2050 = vmatpush1.msra.mxu0 0.0
          %2051 = vmatprep.subr.mxu0 0.0
          %2052 = vmatpush1.msra.mxu0 0.0
          %2053 = vmatprep.subr.mxu0 0.0
          %2054 = vmatpush1.msra.mxu0 0.0
          %2055 = vmatprep.subr.mxu0 0.0
          %2056 = vmatpush1.msra.mxu0 0.0
          %2057 = vmatprep.subr.mxu0 0.0
          %2058 = vmatpush1.msra.mxu0 0.0
          %2059 = vmatprep.subr.mxu0 0.0
          %2060 = vmatpush1.msra.mxu0 0.0
          %2061 = vmatprep.subr.mxu0 0.0
          %2062 = vmatpush1.msra.mxu0 0.0
          %2063 = vmatprep.subr.mxu0 0.0
          %2064 = vmatpush1.msra.mxu0 0.0
          %2065 = vmatprep.subr.mxu0 0.0
          %2066 = vmatpush1.msra.mxu0 0.0
          %2067 = vmatprep.subr.mxu0 0.0
          %2068 = vmatpush1.msra.mxu0 0.0
          %2069 = vmatprep.subr.mxu0 0.0
          %2070 = vmatpush1.msra.mxu0 0.0
          %2071 = vmatprep.subr.mxu0 0.0
          %2072 = vmatpush1.msra.mxu0 0.0
          %2073 = vmatprep.subr.mxu0 0.0
          %2074 = vmatpush1.msra.mxu0 0.0
          %2075 = vmatprep.subr.mxu0 0.0
          %2076 = vmatpush1.msra.mxu0 %v2043
          %2077 = vmatprep.subr.mxu0 0.0
          %2078 = vmatpush2.msra.mxu0 0.0
          %2079 = vmatprep.subr.mxu0 0.0
          %2080 = vmatpush2.msra.mxu0 0.0
          %2081 = vmatprep.subr.mxu0 0.0
          %2082 = vmatpush2.msra.mxu0 0.0
          %2083 = vmatprep.subr.mxu0 0.0
          %2084 = vmatpush2.msra.mxu0 0.0
          %2085 = vmatprep.subr.mxu0 0.0
          %2086 = vmatpush2.msra.mxu0 0.0
          %2087 = vmatprep.subr.mxu0 0.0
          %2088 = vmatpush2.msra.mxu0 0.0
          %2089 = vmatprep.subr.mxu0 0.0
          %2090 = vmatpush2.msra.mxu0 0.0
          %2091 = vmatprep.subr.mxu0 0.0
          %2092 = vmatpush2.msra.mxu0 0.0
          %2093 = vmatprep.subr.mxu0 0.0
          %2094 = vmatpush2.msra.mxu0 0.0
          %2095 = vmatprep.subr.mxu0 0.0
          %2096 = vmatpush2.msra.mxu0 0.0
          %2097 = vmatprep.subr.mxu0 0.0
          %2098 = vmatpush2.msra.mxu0 0.0
          %2099 = vmatprep.subr.mxu0 0.0
          %2100 = vmatpush2.msra.mxu0 0.0
          %2101 = vmatprep.subr.mxu0 0.0
          %2102 = vmatpush2.msra.mxu0 0.0
          %2103 = vmatprep.subr.mxu0 0.0
          %2104 = vmatpush2.msra.mxu0 0.0
          %2105 = vmatprep.subr.mxu0 0.0
          %2106 = vmatpush2.msra.mxu0 0.0
          %2107 = vmatprep.subr.mxu0 0.0
          %2108 = vmatpush2.msra.mxu0 0.0
          %2109 = vmatprep.mubr.f32.mxu0 0.0
          %2110 = vmatmul.mubr.f32.gmra.mxu0 %v2038
          %v2111 = vpop.f32.mrf.mxu0
          %v2112 = vadd.f32 0.0, %v2111
          %v2113 = vpop.f32.mrf.mxu0
          %2114 = vmatprep.mubr.f32.mxu0 0.0
          %2115 = vmatmul.mubr.f32.gmra.mxu0 %v2041
          %v2116 = vpop.f32.mrf.mxu0
          %v2117 = vadd.f32 0.0, %v2116
          %v2118 = vpop.f32.mrf.mxu0
          %2119 = vdwg.mxu0
          %v2120 = vadd.f32 %v1996, %v2112
          %v2121 = vadd.f32 %v1997, %v2117
          %2122 = vst.msk [vmem:[#allocation2] sm:$0xff] %vm567, %v2120
          %2123 = vst.msk [vmem:[#allocation2 + $0x8] sm:$0xff] %vm567, %v2121
          %v2124 = vld [vmem:[#allocation3 + $0x4] sm:$0xf]
          %v2125 = vld [vmem:[%s443 + $0x4] sm:$0xf]
          %v2126 = vld [vmem:[#allocation2] sm:$0xff]
          %v2127 = vld [vmem:[#allocation2 + $0x8] sm:$0xff]
          %2129 = vrot.lane.b32.xlu0 %v2124, 48
          %v2130 = vpop.permute.xlu0 %2129
          %2132 = vxpose.xlu0.b32.start [1/16] %v2130, 128
          %2133 = vxpose.xlu0.b32.cont [2/16] 0.0, 128
          %2134 = vxpose.xlu0.b32.cont [3/16] 0.0, 128
          %2135 = vxpose.xlu0.b32.cont [4/16] 0.0, 128
          %2136 = vxpose.xlu0.b32.cont [5/16] 0.0, 128
          %2137 = vxpose.xlu0.b32.cont [6/16] 0.0, 128
          %2138 = vxpose.xlu0.b32.cont [7/16] 0.0, 128
          %2139 = vxpose.xlu0.b32.cont [8/16] 0.0, 128
          %2140 = vxpose.xlu0.b32.cont [9/16] 0.0, 128
          %2141 = vxpose.xlu0.b32.cont [10/16] 0.0, 128
          %2142 = vxpose.xlu0.b32.cont [11/16] 0.0, 128
          %2143 = vxpose.xlu0.b32.cont [12/16] 0.0, 128
          %2144 = vxpose.xlu0.b32.cont [13/16] 0.0, 128
          %2145 = vxpose.xlu0.b32.cont [14/16] 0.0, 128
          %2146 = vxpose.xlu0.b32.cont [15/16] 0.0, 128
          %2147 = vxpose.xlu0.b32.end [16/16] 0.0, 128
          %v2148 = vpop.trf.xlu0
          %v2149 = vpop.trf.xlu0
          %v2150 = vpop.trf.xlu0
          %v2151 = vpop.trf.xlu0
          %v2152 = vpop.trf.xlu0
          %v2153 = vpop.trf.xlu0
          %v2154 = vpop.trf.xlu0
          %v2155 = vpop.trf.xlu0
          %v2156 = vpop.trf.xlu0
          %v2157 = vpop.trf.xlu0
          %v2158 = vpop.trf.xlu0
          %v2159 = vpop.trf.xlu0
          %v2160 = vpop.trf.xlu0
          %v2161 = vpop.trf.xlu0
          %v2162 = vpop.trf.xlu0
          %v2163 = vpop.trf.xlu0
          %2165 = vrot.lane.b32.xlu0 %v2125, 48
          %v2166 = vpop.permute.xlu0 %2165
          %v2168 = vsel %vm271, %v2148, 0
          %v2171 = vsel %vm271, %v2149, 0
          %v2173 = vsel %vm275, %v2166, 0
          %2175 = vmatprep.subr.mxu0 0.0
          %2176 = vmatpush1.msra.mxu0 0.0
          %2177 = vmatprep.subr.mxu0 0.0
          %2178 = vmatpush1.msra.mxu0 0.0
          %2179 = vmatprep.subr.mxu0 0.0
          %2180 = vmatpush1.msra.mxu0 0.0
          %2181 = vmatprep.subr.mxu0 0.0
          %2182 = vmatpush1.msra.mxu0 0.0
          %2183 = vmatprep.subr.mxu0 0.0
          %2184 = vmatpush1.msra.mxu0 0.0
          %2185 = vmatprep.subr.mxu0 0.0
          %2186 = vmatpush1.msra.mxu0 0.0
          %2187 = vmatprep.subr.mxu0 0.0
          %2188 = vmatpush1.msra.mxu0 0.0
          %2189 = vmatprep.subr.mxu0 0.0
          %2190 = vmatpush1.msra.mxu0 0.0
          %2191 = vmatprep.subr.mxu0 0.0
          %2192 = vmatpush1.msra.mxu0 0.0
          %2193 = vmatprep.subr.mxu0 0.0
          %2194 = vmatpush1.msra.mxu0 0.0
          %2195 = vmatprep.subr.mxu0 0.0
          %2196 = vmatpush1.msra.mxu0 0.0
          %2197 = vmatprep.subr.mxu0 0.0
          %2198 = vmatpush1.msra.mxu0 0.0
          %2199 = vmatprep.subr.mxu0 0.0
          %2200 = vmatpush1.msra.mxu0 0.0
          %2201 = vmatprep.subr.mxu0 0.0
          %2202 = vmatpush1.msra.mxu0 0.0
          %2203 = vmatprep.subr.mxu0 0.0
          %2204 = vmatpush1.msra.mxu0 0.0
          %2205 = vmatprep.subr.mxu0 0.0
          %2206 = vmatpush1.msra.mxu0 %v2173
          %2207 = vmatprep.subr.mxu0 0.0
          %2208 = vmatpush2.msra.mxu0 0.0
          %2209 = vmatprep.subr.mxu0 0.0
          %2210 = vmatpush2.msra.mxu0 0.0
          %2211 = vmatprep.subr.mxu0 0.0
          %2212 = vmatpush2.msra.mxu0 0.0
          %2213 = vmatprep.subr.mxu0 0.0
          %2214 = vmatpush2.msra.mxu0 0.0
          %2215 = vmatprep.subr.mxu0 0.0
          %2216 = vmatpush2.msra.mxu0 0.0
          %2217 = vmatprep.subr.mxu0 0.0
          %2218 = vmatpush2.msra.mxu0 0.0
          %2219 = vmatprep.subr.mxu0 0.0
          %2220 = vmatpush2.msra.mxu0 0.0
          %2221 = vmatprep.subr.mxu0 0.0
          %2222 = vmatpush2.msra.mxu0 0.0
          %2223 = vmatprep.subr.mxu0 0.0
          %2224 = vmatpush2.msra.mxu0 0.0
          %2225 = vmatprep.subr.mxu0 0.0
          %2226 = vmatpush2.msra.mxu0 0.0
          %2227 = vmatprep.subr.mxu0 0.0
          %2228 = vmatpush2.msra.mxu0 0.0
          %2229 = vmatprep.subr.mxu0 0.0
          %2230 = vmatpush2.msra.mxu0 0.0
          %2231 = vmatprep.subr.mxu0 0.0
          %2232 = vmatpush2.msra.mxu0 0.0
          %2233 = vmatprep.subr.mxu0 0.0
          %2234 = vmatpush2.msra.mxu0 0.0
          %2235 = vmatprep.subr.mxu0 0.0
          %2236 = vmatpush2.msra.mxu0 0.0
          %2237 = vmatprep.subr.mxu0 0.0
          %2238 = vmatpush2.msra.mxu0 0.0
          %2239 = vmatprep.mubr.f32.mxu0 0.0
          %2240 = vmatmul.mubr.f32.gmra.mxu0 %v2168
          %v2241 = vpop.f32.mrf.mxu0
          %v2242 = vadd.f32 0.0, %v2241
          %v2243 = vpop.f32.mrf.mxu0
          %2244 = vmatprep.mubr.f32.mxu0 0.0
          %2245 = vmatmul.mubr.f32.gmra.mxu0 %v2171
          %v2246 = vpop.f32.mrf.mxu0
          %v2247 = vadd.f32 0.0, %v2246
          %v2248 = vpop.f32.mrf.mxu0
          %2249 = vdwg.mxu0
          %v2250 = vadd.f32 %v2126, %v2242
          %v2251 = vadd.f32 %v2127, %v2247
          %2252 = vst.msk [vmem:[#allocation2] sm:$0xff] %vm567, %v2250
          %2253 = vst.msk [vmem:[#allocation2 + $0x8] sm:$0xff] %vm567, %v2251
          %v2254 = vld [vmem:[#allocation3 + $0x4] sm:$0xf]
          %v2255 = vld [vmem:[%s443 + $0x4] sm:$0xf]
          %v2256 = vld [vmem:[#allocation2] sm:$0xff]
          %v2257 = vld [vmem:[#allocation2 + $0x8] sm:$0xff]
          %2259 = vrot.lane.b32.xlu0 %v2254, 32
          %v2260 = vpop.permute.xlu0 %2259
          %2262 = vxpose.xlu0.b32.start [1/16] %v2260, 128
          %2263 = vxpose.xlu0.b32.cont [2/16] 0.0, 128
          %2264 = vxpose.xlu0.b32.cont [3/16] 0.0, 128
          %2265 = vxpose.xlu0.b32.cont [4/16] 0.0, 128
          %2266 = vxpose.xlu0.b32.cont [5/16] 0.0, 128
          %2267 = vxpose.xlu0.b32.cont [6/16] 0.0, 128
          %2268 = vxpose.xlu0.b32.cont [7/16] 0.0, 128
          %2269 = vxpose.xlu0.b32.cont [8/16] 0.0, 128
          %2270 = vxpose.xlu0.b32.cont [9/16] 0.0, 128
          %2271 = vxpose.xlu0.b32.cont [10/16] 0.0, 128
          %2272 = vxpose.xlu0.b32.cont [11/16] 0.0, 128
          %2273 = vxpose.xlu0.b32.cont [12/16] 0.0, 128
          %2274 = vxpose.xlu0.b32.cont [13/16] 0.0, 128
          %2275 = vxpose.xlu0.b32.cont [14/16] 0.0, 128
          %2276 = vxpose.xlu0.b32.cont [15/16] 0.0, 128
          %2277 = vxpose.xlu0.b32.end [16/16] 0.0, 128
          %v2278 = vpop.trf.xlu0
          %v2279 = vpop.trf.xlu0
          %v2280 = vpop.trf.xlu0
          %v2281 = vpop.trf.xlu0
          %v2282 = vpop.trf.xlu0
          %v2283 = vpop.trf.xlu0
          %v2284 = vpop.trf.xlu0
          %v2285 = vpop.trf.xlu0
          %v2286 = vpop.trf.xlu0
          %v2287 = vpop.trf.xlu0
          %v2288 = vpop.trf.xlu0
          %v2289 = vpop.trf.xlu0
          %v2290 = vpop.trf.xlu0
          %v2291 = vpop.trf.xlu0
          %v2292 = vpop.trf.xlu0
          %v2293 = vpop.trf.xlu0
          %2295 = vrot.lane.b32.xlu0 %v2255, 32
          %v2296 = vpop.permute.xlu0 %2295
          %v2298 = vsel %vm271, %v2278, 0
          %v2301 = vsel %vm271, %v2279, 0
          %v2303 = vsel %vm275, %v2296, 0
          %2305 = vmatprep.subr.mxu0 0.0
          %2306 = vmatpush1.msra.mxu0 0.0
          %2307 = vmatprep.subr.mxu0 0.0
          %2308 = vmatpush1.msra.mxu0 0.0
          %2309 = vmatprep.subr.mxu0 0.0
          %2310 = vmatpush1.msra.mxu0 0.0
          %2311 = vmatprep.subr.mxu0 0.0
          %2312 = vmatpush1.msra.mxu0 0.0
          %2313 = vmatprep.subr.mxu0 0.0
          %2314 = vmatpush1.msra.mxu0 0.0
          %2315 = vmatprep.subr.mxu0 0.0
          %2316 = vmatpush1.msra.mxu0 0.0
          %2317 = vmatprep.subr.mxu0 0.0
          %2318 = vmatpush1.msra.mxu0 0.0
          %2319 = vmatprep.subr.mxu0 0.0
          %2320 = vmatpush1.msra.mxu0 0.0
          %2321 = vmatprep.subr.mxu0 0.0
          %2322 = vmatpush1.msra.mxu0 0.0
          %2323 = vmatprep.subr.mxu0 0.0
          %2324 = vmatpush1.msra.mxu0 0.0
          %2325 = vmatprep.subr.mxu0 0.0
          %2326 = vmatpush1.msra.mxu0 0.0
          %2327 = vmatprep.subr.mxu0 0.0
          %2328 = vmatpush1.msra.mxu0 0.0
          %2329 = vmatprep.subr.mxu0 0.0
          %2330 = vmatpush1.msra.mxu0 0.0
          %2331 = vmatprep.subr.mxu0 0.0
          %2332 = vmatpush1.msra.mxu0 0.0
          %2333 = vmatprep.subr.mxu0 0.0
          %2334 = vmatpush1.msra.mxu0 0.0
          %2335 = vmatprep.subr.mxu0 0.0
          %2336 = vmatpush1.msra.mxu0 %v2303
          %2337 = vmatprep.subr.mxu0 0.0
          %2338 = vmatpush2.msra.mxu0 0.0
          %2339 = vmatprep.subr.mxu0 0.0
          %2340 = vmatpush2.msra.mxu0 0.0
          %2341 = vmatprep.subr.mxu0 0.0
          %2342 = vmatpush2.msra.mxu0 0.0
          %2343 = vmatprep.subr.mxu0 0.0
          %2344 = vmatpush2.msra.mxu0 0.0
          %2345 = vmatprep.subr.mxu0 0.0
          %2346 = vmatpush2.msra.mxu0 0.0
          %2347 = vmatprep.subr.mxu0 0.0
          %2348 = vmatpush2.msra.mxu0 0.0
          %2349 = vmatprep.subr.mxu0 0.0
          %2350 = vmatpush2.msra.mxu0 0.0
          %2351 = vmatprep.subr.mxu0 0.0
          %2352 = vmatpush2.msra.mxu0 0.0
          %2353 = vmatprep.subr.mxu0 0.0
          %2354 = vmatpush2.msra.mxu0 0.0
          %2355 = vmatprep.subr.mxu0 0.0
          %2356 = vmatpush2.msra.mxu0 0.0
          %2357 = vmatprep.subr.mxu0 0.0
          %2358 = vmatpush2.msra.mxu0 0.0
          %2359 = vmatprep.subr.mxu0 0.0
          %2360 = vmatpush2.msra.mxu0 0.0
          %2361 = vmatprep.subr.mxu0 0.0
          %2362 = vmatpush2.msra.mxu0 0.0
          %2363 = vmatprep.subr.mxu0 0.0
          %2364 = vmatpush2.msra.mxu0 0.0
          %2365 = vmatprep.subr.mxu0 0.0
          %2366 = vmatpush2.msra.mxu0 0.0
          %2367 = vmatprep.subr.mxu0 0.0
          %2368 = vmatpush2.msra.mxu0 0.0
          %2369 = vmatprep.mubr.f32.mxu0 0.0
          %2370 = vmatmul.mubr.f32.gmra.mxu0 %v2298
          %v2371 = vpop.f32.mrf.mxu0
          %v2372 = vadd.f32 0.0, %v2371
          %v2373 = vpop.f32.mrf.mxu0
          %2374 = vmatprep.mubr.f32.mxu0 0.0
          %2375 = vmatmul.mubr.f32.gmra.mxu0 %v2301
          %v2376 = vpop.f32.mrf.mxu0
          %v2377 = vadd.f32 0.0, %v2376
          %v2378 = vpop.f32.mrf.mxu0
          %2379 = vdwg.mxu0
          %v2380 = vadd.f32 %v2256, %v2372
          %v2381 = vadd.f32 %v2257, %v2377
          %2382 = vst.msk [vmem:[#allocation2] sm:$0xff] %vm567, %v2380
          %2383 = vst.msk [vmem:[#allocation2 + $0x8] sm:$0xff] %vm567, %v2381
          %v2384 = vld [vmem:[#allocation3 + $0x4] sm:$0xf]
          %v2385 = vld [vmem:[%s443 + $0x4] sm:$0xf]
          %v2386 = vld [vmem:[#allocation2] sm:$0xff]
          %v2387 = vld [vmem:[#allocation2 + $0x8] sm:$0xff]
          %2389 = vrot.lane.b32.xlu0 %v2384, 16
          %v2390 = vpop.permute.xlu0 %2389
          %2392 = vxpose.xlu0.b32.start [1/16] %v2390, 128
          %2393 = vxpose.xlu0.b32.cont [2/16] 0.0, 128
          %2394 = vxpose.xlu0.b32.cont [3/16] 0.0, 128
          %2395 = vxpose.xlu0.b32.cont [4/16] 0.0, 128
          %2396 = vxpose.xlu0.b32.cont [5/16] 0.0, 128
          %2397 = vxpose.xlu0.b32.cont [6/16] 0.0, 128
          %2398 = vxpose.xlu0.b32.cont [7/16] 0.0, 128
          %2399 = vxpose.xlu0.b32.cont [8/16] 0.0, 128
          %2400 = vxpose.xlu0.b32.cont [9/16] 0.0, 128
          %2401 = vxpose.xlu0.b32.cont [10/16] 0.0, 128
          %2402 = vxpose.xlu0.b32.cont [11/16] 0.0, 128
          %2403 = vxpose.xlu0.b32.cont [12/16] 0.0, 128
          %2404 = vxpose.xlu0.b32.cont [13/16] 0.0, 128
          %2405 = vxpose.xlu0.b32.cont [14/16] 0.0, 128
          %2406 = vxpose.xlu0.b32.cont [15/16] 0.0, 128
          %2407 = vxpose.xlu0.b32.end [16/16] 0.0, 128
          %v2408 = vpop.trf.xlu0
          %v2409 = vpop.trf.xlu0
          %v2410 = vpop.trf.xlu0
          %v2411 = vpop.trf.xlu0
          %v2412 = vpop.trf.xlu0
          %v2413 = vpop.trf.xlu0
          %v2414 = vpop.trf.xlu0
          %v2415 = vpop.trf.xlu0
          %v2416 = vpop.trf.xlu0
          %v2417 = vpop.trf.xlu0
          %v2418 = vpop.trf.xlu0
          %v2419 = vpop.trf.xlu0
          %v2420 = vpop.trf.xlu0
          %v2421 = vpop.trf.xlu0
          %v2422 = vpop.trf.xlu0
          %v2423 = vpop.trf.xlu0
          %2425 = vrot.lane.b32.xlu0 %v2385, 16
          %v2426 = vpop.permute.xlu0 %2425
          %v2428 = vsel %vm271, %v2408, 0
          %v2431 = vsel %vm271, %v2409, 0
          %v2433 = vsel %vm275, %v2426, 0
          %2435 = vmatprep.subr.mxu0 0.0
          %2436 = vmatpush1.msra.mxu0 0.0
          %2437 = vmatprep.subr.mxu0 0.0
          %2438 = vmatpush1.msra.mxu0 0.0
          %2439 = vmatprep.subr.mxu0 0.0
          %2440 = vmatpush1.msra.mxu0 0.0
          %2441 = vmatprep.subr.mxu0 0.0
          %2442 = vmatpush1.msra.mxu0 0.0
          %2443 = vmatprep.subr.mxu0 0.0
          %2444 = vmatpush1.msra.mxu0 0.0
          %2445 = vmatprep.subr.mxu0 0.0
          %2446 = vmatpush1.msra.mxu0 0.0
          %2447 = vmatprep.subr.mxu0 0.0
          %2448 = vmatpush1.msra.mxu0 0.0
          %2449 = vmatprep.subr.mxu0 0.0
          %2450 = vmatpush1.msra.mxu0 0.0
          %2451 = vmatprep.subr.mxu0 0.0
          %2452 = vmatpush1.msra.mxu0 0.0
          %2453 = vmatprep.subr.mxu0 0.0
          %2454 = vmatpush1.msra.mxu0 0.0
          %2455 = vmatprep.subr.mxu0 0.0
          %2456 = vmatpush1.msra.mxu0 0.0
          %2457 = vmatprep.subr.mxu0 0.0
          %2458 = vmatpush1.msra.mxu0 0.0
          %2459 = vmatprep.subr.mxu0 0.0
          %2460 = vmatpush1.msra.mxu0 0.0
          %2461 = vmatprep.subr.mxu0 0.0
          %2462 = vmatpush1.msra.mxu0 0.0
          %2463 = vmatprep.subr.mxu0 0.0
          %2464 = vmatpush1.msra.mxu0 0.0
          %2465 = vmatprep.subr.mxu0 0.0
          %2466 = vmatpush1.msra.mxu0 %v2433
          %2467 = vmatprep.subr.mxu0 0.0
          %2468 = vmatpush2.msra.mxu0 0.0
          %2469 = vmatprep.subr.mxu0 0.0
          %2470 = vmatpush2.msra.mxu0 0.0
          %2471 = vmatprep.subr.mxu0 0.0
          %2472 = vmatpush2.msra.mxu0 0.0
          %2473 = vmatprep.subr.mxu0 0.0
          %2474 = vmatpush2.msra.mxu0 0.0
          %2475 = vmatprep.subr.mxu0 0.0
          %2476 = vmatpush2.msra.mxu0 0.0
          %2477 = vmatprep.subr.mxu0 0.0
          %2478 = vmatpush2.msra.mxu0 0.0
          %2479 = vmatprep.subr.mxu0 0.0
          %2480 = vmatpush2.msra.mxu0 0.0
          %2481 = vmatprep.subr.mxu0 0.0
          %2482 = vmatpush2.msra.mxu0 0.0
          %2483 = vmatprep.subr.mxu0 0.0
          %2484 = vmatpush2.msra.mxu0 0.0
          %2485 = vmatprep.subr.mxu0 0.0
          %2486 = vmatpush2.msra.mxu0 0.0
          %2487 = vmatprep.subr.mxu0 0.0
          %2488 = vmatpush2.msra.mxu0 0.0
          %2489 = vmatprep.subr.mxu0 0.0
          %2490 = vmatpush2.msra.mxu0 0.0
          %2491 = vmatprep.subr.mxu0 0.0
          %2492 = vmatpush2.msra.mxu0 0.0
          %2493 = vmatprep.subr.mxu0 0.0
          %2494 = vmatpush2.msra.mxu0 0.0
          %2495 = vmatprep.subr.mxu0 0.0
          %2496 = vmatpush2.msra.mxu0 0.0
          %2497 = vmatprep.subr.mxu0 0.0
          %2498 = vmatpush2.msra.mxu0 0.0
          %2499 = vmatprep.mubr.f32.mxu0 0.0
          %2500 = vmatmul.mubr.f32.gmra.mxu0 %v2428
          %v2501 = vpop.f32.mrf.mxu0
          %v2502 = vadd.f32 0.0, %v2501
          %v2503 = vpop.f32.mrf.mxu0
          %2504 = vmatprep.mubr.f32.mxu0 0.0
          %2505 = vmatmul.mubr.f32.gmra.mxu0 %v2431
          %v2506 = vpop.f32.mrf.mxu0
          %v2507 = vadd.f32 0.0, %v2506
          %v2508 = vpop.f32.mrf.mxu0
          %2509 = vdwg.mxu0
          %v2510 = vadd.f32 %v2386, %v2502
          %v2511 = vadd.f32 %v2387, %v2507
          %2512 = vst.msk [vmem:[#allocation2] sm:$0xff] %vm567, %v2510
          %2513 = vst.msk [vmem:[#allocation2 + $0x8] sm:$0xff] %vm567, %v2511
          // Predicated region
          $region49: #{tpu_custom_call.1} parent=43 // pred_check
            %p2514 = pneg %p255
          $region50: #{tpu_custom_call.1} parent=43 // pred_check_branch
            %2516 = sbr.rel (%p2514) target = $region52
          $region51: #{tpu_custom_call.1} parent=43 // pred_region
            %v2517 = vld [vmem:[#allocation2] sm:$0xff]
            %v2518 = vld [vmem:[#allocation2 + $0x8] sm:$0xff]
            %v2519 = vsel %vm567, %v2517, -inf
            %2520 = vmax.xlane.f32.xlu0 %v2519
            %v2521 = vpop.xlane.xlu0 %2520
            %v2522 = vsel %vm567, %v2518, -inf
            %2523 = vmax.xlane.f32.xlu0 %v2522
            %v2524 = vpop.xlane.xlu0 %2523
            %v2525 = vsub.f32 %v2517, %v2521
            %v2526 = vsub.f32 %v2518, %v2524
            %v2527 = vmul.f32 %v2525, 1.442695
            %v2528 = vpow.pop %v2527
            %v2529 = vmul.f32 %v2526, 1.442695
            %v2530 = vpow.pop %v2529
            %v2531 = vsel %vm567, %v2528, 0.0
            %2532 = vadd.xlane.f32.xlu0 %v2531
            %v2533 = vpop.xlane.xlu0 %2532
            %v2534 = vsel %vm567, %v2530, 0.0
            %2535 = vadd.xlane.f32.xlu0 %v2534
            %v2536 = vpop.xlane.xlu0 %2535
            %v2537 = vrcp.pop %v2533
            %v2538 = vrcp.pop %v2536
            %v2539 = vmul.f32 %v2528, %v2537
            %v2540 = vmul.f32 %v2530, %v2538
            %2541 = vst.msk [vmem:[#allocation2] sm:$0xff] %vm567, %v2539
            %2542 = vst.msk [vmem:[#allocation2 + $0x8] sm:$0xff] %vm567, %v2540
          $region52: #{tpu_custom_call.1} parent=43 // pred_fallthru
            _
        $region44: #{tpu_custom_call.1} parent=35 // pred_fallthru
          _
        %p2543 = scmp.eq.s32.totalorder %s26, 1
        // Predicated region
        $region53: #{tpu_custom_call.1} parent=35 // pred_check
          %p2544 = pneg %p2543
        $region54: #{tpu_custom_call.1} parent=35 // pred_check_branch
          %2546 = sbr.rel (%p2544) target = $region56
        $region55: #{tpu_custom_call.1} parent=35 // pred_region
          %v2547 = vld [vmem:[#allocation2] sm:$0xff]
          %v2548 = vld [vmem:[#allocation2 + $0x8] sm:$0xff]
          %s2549 = scalar_lea.vmem [#allocation5], 8
          %v2550 = vld [vmem:[%s2549] sm:$0xf]
          %s2551 = scalar_lea.vmem %s2, 8
          %v2552 = vld [vmem:[%s2551] sm:$0xf]
          %2554 = vset.pattern.permute.xlu0 0
          %2555 = vperm.xlu0 %2554, %v2552
          %v2556 = vpop.permute.xlu0 %2555
          %v2559 = vcombine.high %v250, %v250
          %vm2560 = vcmask 31744
          %v2562 = vsel %vm2560, %v2550, 0
          %vm2564 = vcmask 1043456
          %v2565 = vsel %vm2564, %v250, 0
          %v2567 = vsel %vm2564, %v2559, 0
          %2569 = vmatprep.subr.mxu0 0.0
          %2570 = vmatpush1.msra.mxu0 0.0
          %2571 = vmatprep.subr.mxu0 0.0
          %2572 = vmatpush1.msra.mxu0 0.0
          %2573 = vmatprep.subr.mxu0 0.0
          %2574 = vmatpush1.msra.mxu0 0.0
          %2575 = vmatprep.subr.mxu0 0.0
          %2576 = vmatpush1.msra.mxu0 0.0
          %2577 = vmatprep.subr.mxu0 0.0
          %2578 = vmatpush1.msra.mxu0 0.0
          %2579 = vmatprep.subr.mxu0 0.0
          %2580 = vmatpush1.msra.mxu0 0.0
          %2581 = vmatprep.subr.mxu0 0.0
          %2582 = vmatpush1.msra.mxu0 0.0
          %2583 = vmatprep.subr.mxu0 0.0
          %2584 = vmatpush1.msra.mxu0 0.0
          %2585 = vmatprep.subr.mxu0 0.0
          %2586 = vmatpush1.msra.mxu0 0.0
          %2587 = vmatprep.subr.mxu0 0.0
          %2588 = vmatpush1.msra.mxu0 0.0
          %2589 = vmatprep.subr.mxu0 0.0
          %2590 = vmatpush1.msra.mxu0 0.0
          %2591 = vmatprep.subr.mxu0 0.0
          %2592 = vmatpush1.msra.mxu0 0.0
          %2593 = vmatprep.subr.mxu0 0.0
          %2594 = vmatpush1.msra.mxu0 0.0
          %2595 = vmatprep.subr.mxu0 0.0
          %2596 = vmatpush1.msra.mxu0 0.0
          %2597 = vmatprep.subr.mxu0 0.0
          %2598 = vmatpush1.msra.mxu0 0.0
          %2599 = vmatprep.subr.mxu0 %v2567
          %2600 = vmatpush1.msra.mxu0 %v2565
          %2601 = vmatprep.subr.mxu0 0.0
          %2602 = vmatpush2.msra.mxu0 0.0
          %2603 = vmatprep.subr.mxu0 0.0
          %2604 = vmatpush2.msra.mxu0 0.0
          %2605 = vmatprep.subr.mxu0 0.0
          %2606 = vmatpush2.msra.mxu0 0.0
          %2607 = vmatprep.subr.mxu0 0.0
          %2608 = vmatpush2.msra.mxu0 0.0
          %2609 = vmatprep.subr.mxu0 0.0
          %2610 = vmatpush2.msra.mxu0 0.0
          %2611 = vmatprep.subr.mxu0 0.0
          %2612 = vmatpush2.msra.mxu0 0.0
          %2613 = vmatprep.subr.mxu0 0.0
          %2614 = vmatpush2.msra.mxu0 0.0
          %2615 = vmatprep.subr.mxu0 0.0
          %2616 = vmatpush2.msra.mxu0 0.0
          %2617 = vmatprep.subr.mxu0 0.0
          %2618 = vmatpush2.msra.mxu0 0.0
          %2619 = vmatprep.subr.mxu0 0.0
          %2620 = vmatpush2.msra.mxu0 0.0
          %2621 = vmatprep.subr.mxu0 0.0
          %2622 = vmatpush2.msra.mxu0 0.0
          %2623 = vmatprep.subr.mxu0 0.0
          %2624 = vmatpush2.msra.mxu0 0.0
          %2625 = vmatprep.subr.mxu0 0.0
          %2626 = vmatpush2.msra.mxu0 0.0
          %2627 = vmatprep.subr.mxu0 0.0
          %2628 = vmatpush2.msra.mxu0 0.0
          %2629 = vmatprep.subr.mxu0 0.0
          %2630 = vmatpush2.msra.mxu0 0.0
          %2631 = vmatprep.subr.mxu0 0.0
          %2632 = vmatpush2.msra.mxu0 0.0
          %2633 = vmatprep.mubr.f32.mxu0 0.0
          %2634 = vmatmul.mubr.f32.gmra.mxu0 %v2562
          %v2635 = vpop.f32.mrf.mxu0
          %v2636 = vadd.f32 %v2556, %v2635
          %v2637 = vpop.f32.mrf.mxu0
          %v2638 = vadd.f32 %v2556, %v2637
          %2639 = vdwg.mxu0
          %v2642 = vcombine.low %v2636, %v2638
          %2644 = vst [vmem:[#allocation3] sm:$0xff] %v2642
          %s2645 = sld [smem:[#allocation4]]
          %v2646 = vld [vmem:[#allocation3] sm:$0xf]
          %vm2647 = vcmask 130048
          %v2649 = vsel %vm2647, %v2646, 0
          %v2652 = vsel %vm2647, %v2547, 0
          %v2655 = vsel %vm2647, %v2548, 0
          %2657 = vmatprep.subr.mxu0 0.0
          %2658 = vmatpush1.xpose.msra.mxu0 0.0
          %2659 = vmatprep.subr.mxu0 0.0
          %2660 = vmatpush1.xpose.msra.mxu0 0.0
          %2661 = vmatprep.subr.mxu0 0.0
          %2662 = vmatpush1.xpose.msra.mxu0 0.0
          %2663 = vmatprep.subr.mxu0 0.0
          %2664 = vmatpush1.xpose.msra.mxu0 0.0
          %2665 = vmatprep.subr.mxu0 0.0
          %2666 = vmatpush1.xpose.msra.mxu0 0.0
          %2667 = vmatprep.subr.mxu0 0.0
          %2668 = vmatpush1.xpose.msra.mxu0 0.0
          %2669 = vmatprep.subr.mxu0 0.0
          %2670 = vmatpush1.xpose.msra.mxu0 0.0
          %2671 = vmatprep.subr.mxu0 0.0
          %2672 = vmatpush1.xpose.msra.mxu0 0.0
          %2673 = vmatprep.subr.mxu0 0.0
          %2674 = vmatpush1.xpose.msra.mxu0 0.0
          %2675 = vmatprep.subr.mxu0 0.0
          %2676 = vmatpush1.xpose.msra.mxu0 0.0
          %2677 = vmatprep.subr.mxu0 0.0
          %2678 = vmatpush1.xpose.msra.mxu0 0.0
          %2679 = vmatprep.subr.mxu0 0.0
          %2680 = vmatpush1.xpose.msra.mxu0 0.0
          %2681 = vmatprep.subr.mxu0 0.0
          %2682 = vmatpush1.xpose.msra.mxu0 0.0
          %2683 = vmatprep.subr.mxu0 0.0
          %2684 = vmatpush1.xpose.msra.mxu0 0.0
          %2685 = vmatprep.subr.mxu0 0.0
          %2686 = vmatpush1.xpose.msra.mxu0 %v2655
          %2687 = vmatprep.subr.mxu0 0.0
          %2688 = vmatpush1.xpose.msra.mxu0 %v2652
          %2689 = vmatprep.subr.mxu0 0.0
          %2690 = vmatpush2.xpose.msra.mxu0 0.0
          %2691 = vmatprep.subr.mxu0 0.0
          %2692 = vmatpush2.xpose.msra.mxu0 0.0
          %2693 = vmatprep.subr.mxu0 0.0
          %2694 = vmatpush2.xpose.msra.mxu0 0.0
          %2695 = vmatprep.subr.mxu0 0.0
          %2696 = vmatpush2.xpose.msra.mxu0 0.0
          %2697 = vmatprep.subr.mxu0 0.0
          %2698 = vmatpush2.xpose.msra.mxu0 0.0
          %2699 = vmatprep.subr.mxu0 0.0
          %2700 = vmatpush2.xpose.msra.mxu0 0.0
          %2701 = vmatprep.subr.mxu0 0.0
          %2702 = vmatpush2.xpose.msra.mxu0 0.0
          %2703 = vmatprep.subr.mxu0 0.0
          %2704 = vmatpush2.xpose.msra.mxu0 0.0
          %2705 = vmatprep.subr.mxu0 0.0
          %2706 = vmatpush2.xpose.msra.mxu0 0.0
          %2707 = vmatprep.subr.mxu0 0.0
          %2708 = vmatpush2.xpose.msra.mxu0 0.0
          %2709 = vmatprep.subr.mxu0 0.0
          %2710 = vmatpush2.xpose.msra.mxu0 0.0
          %2711 = vmatprep.subr.mxu0 0.0
          %2712 = vmatpush2.xpose.msra.mxu0 0.0
          %2713 = vmatprep.subr.mxu0 0.0
          %2714 = vmatpush2.xpose.msra.mxu0 0.0
          %2715 = vmatprep.subr.mxu0 0.0
          %2716 = vmatpush2.xpose.msra.mxu0 0.0
          %2717 = vmatprep.subr.mxu0 0.0
          %2718 = vmatpush2.xpose.msra.mxu0 0.0
          %2719 = vmatprep.subr.mxu0 0.0
          %2720 = vmatpush2.xpose.msra.mxu0 0.0
          %2721 = vmatprep.mubr.f32.mxu0 0.0
          %2722 = vmatmul.mubr.f32.gmra.mxu0 %v2649
          %v2723 = vpop.f32.mrf.mxu0
          %v2724 = vadd.f32 0.0, %v2723
          %v2725 = vpop.f32.mrf.mxu0
          %2726 = vdwg.mxu0
          %v2727 = vld [vmem:[%s247] sm:$0xf]
          %v2728 = vstv %s2645
          %v2729 = vmul.f32 %v2728, %v2724
          %v2730 = vadd.f32 %v2729, %v2727
          %vm2731 = vcmask 125952
          %2732 = vst.msk [vmem:[%s238] sm:$0xf] %vm2731, %v2730
          %v2733 = vld [vmem:[#allocation3] sm:$0xf]
          %2735 = vrot.lane.b32.xlu0 %v2733, 112
          %v2736 = vpop.permute.xlu0 %2735
          %v2737 = vsel %vm2647, %v2736, 0
          %2739 = vmatprep.subr.mxu0 0.0
          %2740 = vmatpush1.xpose.msra.mxu0 0.0
          %2741 = vmatprep.subr.mxu0 0.0
          %2742 = vmatpush1.xpose.msra.mxu0 0.0
          %2743 = vmatprep.subr.mxu0 0.0
          %2744 = vmatpush1.xpose.msra.mxu0 0.0
          %2745 = vmatprep.subr.mxu0 0.0
          %2746 = vmatpush1.xpose.msra.mxu0 0.0
          %2747 = vmatprep.subr.mxu0 0.0
          %2748 = vmatpush1.xpose.msra.mxu0 0.0
          %2749 = vmatprep.subr.mxu0 0.0
          %2750 = vmatpush1.xpose.msra.mxu0 0.0
          %2751 = vmatprep.subr.mxu0 0.0
          %2752 = vmatpush1.xpose.msra.mxu0 0.0
          %2753 = vmatprep.subr.mxu0 0.0
          %2754 = vmatpush1.xpose.msra.mxu0 0.0
          %2755 = vmatprep.subr.mxu0 0.0
          %2756 = vmatpush1.xpose.msra.mxu0 0.0
          %2757 = vmatprep.subr.mxu0 0.0
          %2758 = vmatpush1.xpose.msra.mxu0 0.0
          %2759 = vmatprep.subr.mxu0 0.0
          %2760 = vmatpush1.xpose.msra.mxu0 0.0
          %2761 = vmatprep.subr.mxu0 0.0
          %2762 = vmatpush1.xpose.msra.mxu0 0.0
          %2763 = vmatprep.subr.mxu0 0.0
          %2764 = vmatpush1.xpose.msra.mxu0 0.0
          %2765 = vmatprep.subr.mxu0 0.0
          %2766 = vmatpush1.xpose.msra.mxu0 0.0
          %2767 = vmatprep.subr.mxu0 0.0
          %2768 = vmatpush1.xpose.msra.mxu0 %v2655
          %2769 = vmatprep.subr.mxu0 0.0
          %2770 = vmatpush1.xpose.msra.mxu0 %v2652
          %2771 = vmatprep.subr.mxu0 0.0
          %2772 = vmatpush2.xpose.msra.mxu0 0.0
          %2773 = vmatprep.subr.mxu0 0.0
          %2774 = vmatpush2.xpose.msra.mxu0 0.0
          %2775 = vmatprep.subr.mxu0 0.0
          %2776 = vmatpush2.xpose.msra.mxu0 0.0
          %2777 = vmatprep.subr.mxu0 0.0
          %2778 = vmatpush2.xpose.msra.mxu0 0.0
          %2779 = vmatprep.subr.mxu0 0.0
          %2780 = vmatpush2.xpose.msra.mxu0 0.0
          %2781 = vmatprep.subr.mxu0 0.0
          %2782 = vmatpush2.xpose.msra.mxu0 0.0
          %2783 = vmatprep.subr.mxu0 0.0
          %2784 = vmatpush2.xpose.msra.mxu0 0.0
          %2785 = vmatprep.subr.mxu0 0.0
          %2786 = vmatpush2.xpose.msra.mxu0 0.0
          %2787 = vmatprep.subr.mxu0 0.0
          %2788 = vmatpush2.xpose.msra.mxu0 0.0
          %2789 = vmatprep.subr.mxu0 0.0
          %2790 = vmatpush2.xpose.msra.mxu0 0.0
          %2791 = vmatprep.subr.mxu0 0.0
          %2792 = vmatpush2.xpose.msra.mxu0 0.0
          %2793 = vmatprep.subr.mxu0 0.0
          %2794 = vmatpush2.xpose.msra.mxu0 0.0
          %2795 = vmatprep.subr.mxu0 0.0
          %2796 = vmatpush2.xpose.msra.mxu0 0.0
          %2797 = vmatprep.subr.mxu0 0.0
          %2798 = vmatpush2.xpose.msra.mxu0 0.0
          %2799 = vmatprep.subr.mxu0 0.0
          %2800 = vmatpush2.xpose.msra.mxu0 0.0
          %2801 = vmatprep.subr.mxu0 0.0
          %2802 = vmatpush2.xpose.msra.mxu0 0.0
          %2803 = vmatprep.mubr.f32.mxu0 0.0
          %2804 = vmatmul.mubr.f32.gmra.mxu0 %v2737
          %v2805 = vpop.f32.mrf.mxu0
          %v2806 = vadd.f32 0.0, %v2805
          %v2807 = vpop.f32.mrf.mxu0
          %2808 = vdwg.mxu0
          %v2809 = vld [vmem:[%s247] sm:$0xf]
          %v2810 = vmul.f32 %v2728, %v2806
          %2812 = vrot.lane.b32.xlu0 %v2809, 112
          %v2813 = vpop.permute.xlu0 %2812
          %v2815 = vadd.f32 %v2810, %v2813
          %2817 = vrot.lane.b32.xlu0 %v2815, 16
          %v2818 = vpop.permute.xlu0 %2817
          %vm2820 = vcmask 257152
          %2821 = vst.msk [vmem:[%s238] sm:$0xf] %vm2820, %v2818
          %v2822 = vld [vmem:[#allocation3] sm:$0xf]
          %2824 = vrot.lane.b32.xlu0 %v2822, 96
          %v2825 = vpop.permute.xlu0 %2824
          %v2826 = vsel %vm2647, %v2825, 0
          %2828 = vmatprep.subr.mxu0 0.0
          %2829 = vmatpush1.xpose.msra.mxu0 0.0
          %2830 = vmatprep.subr.mxu0 0.0
          %2831 = vmatpush1.xpose.msra.mxu0 0.0
          %2832 = vmatprep.subr.mxu0 0.0
          %2833 = vmatpush1.xpose.msra.mxu0 0.0
          %2834 = vmatprep.subr.mxu0 0.0
          %2835 = vmatpush1.xpose.msra.mxu0 0.0
          %2836 = vmatprep.subr.mxu0 0.0
          %2837 = vmatpush1.xpose.msra.mxu0 0.0
          %2838 = vmatprep.subr.mxu0 0.0
          %2839 = vmatpush1.xpose.msra.mxu0 0.0
          %2840 = vmatprep.subr.mxu0 0.0
          %2841 = vmatpush1.xpose.msra.mxu0 0.0
          %2842 = vmatprep.subr.mxu0 0.0
          %2843 = vmatpush1.xpose.msra.mxu0 0.0
          %2844 = vmatprep.subr.mxu0 0.0
          %2845 = vmatpush1.xpose.msra.mxu0 0.0
          %2846 = vmatprep.subr.mxu0 0.0
          %2847 = vmatpush1.xpose.msra.mxu0 0.0
          %2848 = vmatprep.subr.mxu0 0.0
          %2849 = vmatpush1.xpose.msra.mxu0 0.0
          %2850 = vmatprep.subr.mxu0 0.0
          %2851 = vmatpush1.xpose.msra.mxu0 0.0
          %2852 = vmatprep.subr.mxu0 0.0
          %2853 = vmatpush1.xpose.msra.mxu0 0.0
          %2854 = vmatprep.subr.mxu0 0.0
          %2855 = vmatpush1.xpose.msra.mxu0 0.0
          %2856 = vmatprep.subr.mxu0 0.0
          %2857 = vmatpush1.xpose.msra.mxu0 %v2655
          %2858 = vmatprep.subr.mxu0 0.0
          %2859 = vmatpush1.xpose.msra.mxu0 %v2652
          %2860 = vmatprep.subr.mxu0 0.0
          %2861 = vmatpush2.xpose.msra.mxu0 0.0
          %2862 = vmatprep.subr.mxu0 0.0
          %2863 = vmatpush2.xpose.msra.mxu0 0.0
          %2864 = vmatprep.subr.mxu0 0.0
          %2865 = vmatpush2.xpose.msra.mxu0 0.0
          %2866 = vmatprep.subr.mxu0 0.0
          %2867 = vmatpush2.xpose.msra.mxu0 0.0
          %2868 = vmatprep.subr.mxu0 0.0
          %2869 = vmatpush2.xpose.msra.mxu0 0.0
          %2870 = vmatprep.subr.mxu0 0.0
          %2871 = vmatpush2.xpose.msra.mxu0 0.0
          %2872 = vmatprep.subr.mxu0 0.0
          %2873 = vmatpush2.xpose.msra.mxu0 0.0
          %2874 = vmatprep.subr.mxu0 0.0
          %2875 = vmatpush2.xpose.msra.mxu0 0.0
          %2876 = vmatprep.subr.mxu0 0.0
          %2877 = vmatpush2.xpose.msra.mxu0 0.0
          %2878 = vmatprep.subr.mxu0 0.0
          %2879 = vmatpush2.xpose.msra.mxu0 0.0
          %2880 = vmatprep.subr.mxu0 0.0
          %2881 = vmatpush2.xpose.msra.mxu0 0.0
          %2882 = vmatprep.subr.mxu0 0.0
          %2883 = vmatpush2.xpose.msra.mxu0 0.0
          %2884 = vmatprep.subr.mxu0 0.0
          %2885 = vmatpush2.xpose.msra.mxu0 0.0
          %2886 = vmatprep.subr.mxu0 0.0
          %2887 = vmatpush2.xpose.msra.mxu0 0.0
          %2888 = vmatprep.subr.mxu0 0.0
          %2889 = vmatpush2.xpose.msra.mxu0 0.0
          %2890 = vmatprep.subr.mxu0 0.0
          %2891 = vmatpush2.xpose.msra.mxu0 0.0
          %2892 = vmatprep.mubr.f32.mxu0 0.0
          %2893 = vmatmul.mubr.f32.gmra.mxu0 %v2826
          %v2894 = vpop.f32.mrf.mxu0
          %v2895 = vadd.f32 0.0, %v2894
          %v2896 = vpop.f32.mrf.mxu0
          %2897 = vdwg.mxu0
          %v2898 = vld [vmem:[%s247] sm:$0xf]
          %v2899 = vmul.f32 %v2728, %v2895
          %2901 = vrot.lane.b32.xlu0 %v2898, 96
          %v2902 = vpop.permute.xlu0 %2901
          %v2904 = vadd.f32 %v2899, %v2902
          %2906 = vrot.lane.b32.xlu0 %v2904, 32
          %v2907 = vpop.permute.xlu0 %2906
          %vm2909 = vcmask 388352
          %2910 = vst.msk [vmem:[%s238] sm:$0xf] %vm2909, %v2907
          %v2911 = vld [vmem:[#allocation3] sm:$0xf]
          %2913 = vrot.lane.b32.xlu0 %v2911, 80
          %v2914 = vpop.permute.xlu0 %2913
          %v2915 = vsel %vm2647, %v2914, 0
          %2917 = vmatprep.subr.mxu0 0.0
          %2918 = vmatpush1.xpose.msra.mxu0 0.0
          %2919 = vmatprep.subr.mxu0 0.0
          %2920 = vmatpush1.xpose.msra.mxu0 0.0
          %2921 = vmatprep.subr.mxu0 0.0
          %2922 = vmatpush1.xpose.msra.mxu0 0.0
          %2923 = vmatprep.subr.mxu0 0.0
          %2924 = vmatpush1.xpose.msra.mxu0 0.0
          %2925 = vmatprep.subr.mxu0 0.0
          %2926 = vmatpush1.xpose.msra.mxu0 0.0
          %2927 = vmatprep.subr.mxu0 0.0
          %2928 = vmatpush1.xpose.msra.mxu0 0.0
          %2929 = vmatprep.subr.mxu0 0.0
          %2930 = vmatpush1.xpose.msra.mxu0 0.0
          %2931 = vmatprep.subr.mxu0 0.0
          %2932 = vmatpush1.xpose.msra.mxu0 0.0
          %2933 = vmatprep.subr.mxu0 0.0
          %2934 = vmatpush1.xpose.msra.mxu0 0.0
          %2935 = vmatprep.subr.mxu0 0.0
          %2936 = vmatpush1.xpose.msra.mxu0 0.0
          %2937 = vmatprep.subr.mxu0 0.0
          %2938 = vmatpush1.xpose.msra.mxu0 0.0
          %2939 = vmatprep.subr.mxu0 0.0
          %2940 = vmatpush1.xpose.msra.mxu0 0.0
          %2941 = vmatprep.subr.mxu0 0.0
          %2942 = vmatpush1.xpose.msra.mxu0 0.0
          %2943 = vmatprep.subr.mxu0 0.0
          %2944 = vmatpush1.xpose.msra.mxu0 0.0
          %2945 = vmatprep.subr.mxu0 0.0
          %2946 = vmatpush1.xpose.msra.mxu0 %v2655
          %2947 = vmatprep.subr.mxu0 0.0
          %2948 = vmatpush1.xpose.msra.mxu0 %v2652
          %2949 = vmatprep.subr.mxu0 0.0
          %2950 = vmatpush2.xpose.msra.mxu0 0.0
          %2951 = vmatprep.subr.mxu0 0.0
          %2952 = vmatpush2.xpose.msra.mxu0 0.0
          %2953 = vmatprep.subr.mxu0 0.0
          %2954 = vmatpush2.xpose.msra.mxu0 0.0
          %2955 = vmatprep.subr.mxu0 0.0
          %2956 = vmatpush2.xpose.msra.mxu0 0.0
          %2957 = vmatprep.subr.mxu0 0.0
          %2958 = vmatpush2.xpose.msra.mxu0 0.0
          %2959 = vmatprep.subr.mxu0 0.0
          %2960 = vmatpush2.xpose.msra.mxu0 0.0
          %2961 = vmatprep.subr.mxu0 0.0
          %2962 = vmatpush2.xpose.msra.mxu0 0.0
          %2963 = vmatprep.subr.mxu0 0.0
          %2964 = vmatpush2.xpose.msra.mxu0 0.0
          %2965 = vmatprep.subr.mxu0 0.0
          %2966 = vmatpush2.xpose.msra.mxu0 0.0
          %2967 = vmatprep.subr.mxu0 0.0
          %2968 = vmatpush2.xpose.msra.mxu0 0.0
          %2969 = vmatprep.subr.mxu0 0.0
          %2970 = vmatpush2.xpose.msra.mxu0 0.0
          %2971 = vmatprep.subr.mxu0 0.0
          %2972 = vmatpush2.xpose.msra.mxu0 0.0
          %2973 = vmatprep.subr.mxu0 0.0
          %2974 = vmatpush2.xpose.msra.mxu0 0.0
          %2975 = vmatprep.subr.mxu0 0.0
          %2976 = vmatpush2.xpose.msra.mxu0 0.0
          %2977 = vmatprep.subr.mxu0 0.0
          %2978 = vmatpush2.xpose.msra.mxu0 0.0
          %2979 = vmatprep.subr.mxu0 0.0
          %2980 = vmatpush2.xpose.msra.mxu0 0.0
          %2981 = vmatprep.mubr.f32.mxu0 0.0
          %2982 = vmatmul.mubr.f32.gmra.mxu0 %v2915
          %v2983 = vpop.f32.mrf.mxu0
          %v2984 = vadd.f32 0.0, %v2983
          %v2985 = vpop.f32.mrf.mxu0
          %2986 = vdwg.mxu0
          %v2987 = vld [vmem:[%s247] sm:$0xf]
          %v2988 = vmul.f32 %v2728, %v2984
          %2990 = vrot.lane.b32.xlu0 %v2987, 80
          %v2991 = vpop.permute.xlu0 %2990
          %v2993 = vadd.f32 %v2988, %v2991
          %2995 = vrot.lane.b32.xlu0 %v2993, 48
          %v2996 = vpop.permute.xlu0 %2995
          %vm2998 = vcmask 519552
          %2999 = vst.msk [vmem:[%s238] sm:$0xf] %vm2998, %v2996
          %v3000 = vld [vmem:[#allocation3] sm:$0xf]
          %3002 = vrot.lane.b32.xlu0 %v3000, 64
          %v3003 = vpop.permute.xlu0 %3002
          %v3004 = vsel %vm2647, %v3003, 0
          %3006 = vmatprep.subr.mxu0 0.0
          %3007 = vmatpush1.xpose.msra.mxu0 0.0
          %3008 = vmatprep.subr.mxu0 0.0
          %3009 = vmatpush1.xpose.msra.mxu0 0.0
          %3010 = vmatprep.subr.mxu0 0.0
          %3011 = vmatpush1.xpose.msra.mxu0 0.0
          %3012 = vmatprep.subr.mxu0 0.0
          %3013 = vmatpush1.xpose.msra.mxu0 0.0
          %3014 = vmatprep.subr.mxu0 0.0
          %3015 = vmatpush1.xpose.msra.mxu0 0.0
          %3016 = vmatprep.subr.mxu0 0.0
          %3017 = vmatpush1.xpose.msra.mxu0 0.0
          %3018 = vmatprep.subr.mxu0 0.0
          %3019 = vmatpush1.xpose.msra.mxu0 0.0
          %3020 = vmatprep.subr.mxu0 0.0
          %3021 = vmatpush1.xpose.msra.mxu0 0.0
          %3022 = vmatprep.subr.mxu0 0.0
          %3023 = vmatpush1.xpose.msra.mxu0 0.0
          %3024 = vmatprep.subr.mxu0 0.0
          %3025 = vmatpush1.xpose.msra.mxu0 0.0
          %3026 = vmatprep.subr.mxu0 0.0
          %3027 = vmatpush1.xpose.msra.mxu0 0.0
          %3028 = vmatprep.subr.mxu0 0.0
          %3029 = vmatpush1.xpose.msra.mxu0 0.0
          %3030 = vmatprep.subr.mxu0 0.0
          %3031 = vmatpush1.xpose.msra.mxu0 0.0
          %3032 = vmatprep.subr.mxu0 0.0
          %3033 = vmatpush1.xpose.msra.mxu0 0.0
          %3034 = vmatprep.subr.mxu0 0.0
          %3035 = vmatpush1.xpose.msra.mxu0 %v2655
          %3036 = vmatprep.subr.mxu0 0.0
          %3037 = vmatpush1.xpose.msra.mxu0 %v2652
          %3038 = vmatprep.subr.mxu0 0.0
          %3039 = vmatpush2.xpose.msra.mxu0 0.0
          %3040 = vmatprep.subr.mxu0 0.0
          %3041 = vmatpush2.xpose.msra.mxu0 0.0
          %3042 = vmatprep.subr.mxu0 0.0
          %3043 = vmatpush2.xpose.msra.mxu0 0.0
          %3044 = vmatprep.subr.mxu0 0.0
          %3045 = vmatpush2.xpose.msra.mxu0 0.0
          %3046 = vmatprep.subr.mxu0 0.0
          %3047 = vmatpush2.xpose.msra.mxu0 0.0
          %3048 = vmatprep.subr.mxu0 0.0
          %3049 = vmatpush2.xpose.msra.mxu0 0.0
          %3050 = vmatprep.subr.mxu0 0.0
          %3051 = vmatpush2.xpose.msra.mxu0 0.0
          %3052 = vmatprep.subr.mxu0 0.0
          %3053 = vmatpush2.xpose.msra.mxu0 0.0
          %3054 = vmatprep.subr.mxu0 0.0
          %3055 = vmatpush2.xpose.msra.mxu0 0.0
          %3056 = vmatprep.subr.mxu0 0.0
          %3057 = vmatpush2.xpose.msra.mxu0 0.0
          %3058 = vmatprep.subr.mxu0 0.0
          %3059 = vmatpush2.xpose.msra.mxu0 0.0
          %3060 = vmatprep.subr.mxu0 0.0
          %3061 = vmatpush2.xpose.msra.mxu0 0.0
          %3062 = vmatprep.subr.mxu0 0.0
          %3063 = vmatpush2.xpose.msra.mxu0 0.0
          %3064 = vmatprep.subr.mxu0 0.0
          %3065 = vmatpush2.xpose.msra.mxu0 0.0
          %3066 = vmatprep.subr.mxu0 0.0
          %3067 = vmatpush2.xpose.msra.mxu0 0.0
          %3068 = vmatprep.subr.mxu0 0.0
          %3069 = vmatpush2.xpose.msra.mxu0 0.0
          %3070 = vmatprep.mubr.f32.mxu0 0.0
          %3071 = vmatmul.mubr.f32.gmra.mxu0 %v3004
          %v3072 = vpop.f32.mrf.mxu0
          %v3073 = vadd.f32 0.0, %v3072
          %v3074 = vpop.f32.mrf.mxu0
          %3075 = vdwg.mxu0
          %v3076 = vld [vmem:[%s247] sm:$0xf]
          %v3077 = vmul.f32 %v2728, %v3073
          %3079 = vrot.lane.b32.xlu0 %v3076, 64
          %v3080 = vpop.permute.xlu0 %3079
          %v3082 = vadd.f32 %v3077, %v3080
          %3084 = vrot.lane.b32.xlu0 %v3082, 64
          %v3085 = vpop.permute.xlu0 %3084
          %vm3087 = vcmask 650752
          %3088 = vst.msk [vmem:[%s238] sm:$0xf] %vm3087, %v3085
          %v3089 = vld [vmem:[#allocation3] sm:$0xf]
          %3091 = vrot.lane.b32.xlu0 %v3089, 48
          %v3092 = vpop.permute.xlu0 %3091
          %v3093 = vsel %vm2647, %v3092, 0
          %3095 = vmatprep.subr.mxu0 0.0
          %3096 = vmatpush1.xpose.msra.mxu0 0.0
          %3097 = vmatprep.subr.mxu0 0.0
          %3098 = vmatpush1.xpose.msra.mxu0 0.0
          %3099 = vmatprep.subr.mxu0 0.0
          %3100 = vmatpush1.xpose.msra.mxu0 0.0
          %3101 = vmatprep.subr.mxu0 0.0
          %3102 = vmatpush1.xpose.msra.mxu0 0.0
          %3103 = vmatprep.subr.mxu0 0.0
          %3104 = vmatpush1.xpose.msra.mxu0 0.0
          %3105 = vmatprep.subr.mxu0 0.0
          %3106 = vmatpush1.xpose.msra.mxu0 0.0
          %3107 = vmatprep.subr.mxu0 0.0
          %3108 = vmatpush1.xpose.msra.mxu0 0.0
          %3109 = vmatprep.subr.mxu0 0.0
          %3110 = vmatpush1.xpose.msra.mxu0 0.0
          %3111 = vmatprep.subr.mxu0 0.0
          %3112 = vmatpush1.xpose.msra.mxu0 0.0
          %3113 = vmatprep.subr.mxu0 0.0
          %3114 = vmatpush1.xpose.msra.mxu0 0.0
          %3115 = vmatprep.subr.mxu0 0.0
          %3116 = vmatpush1.xpose.msra.mxu0 0.0
          %3117 = vmatprep.subr.mxu0 0.0
          %3118 = vmatpush1.xpose.msra.mxu0 0.0
          %3119 = vmatprep.subr.mxu0 0.0
          %3120 = vmatpush1.xpose.msra.mxu0 0.0
          %3121 = vmatprep.subr.mxu0 0.0
          %3122 = vmatpush1.xpose.msra.mxu0 0.0
          %3123 = vmatprep.subr.mxu0 0.0
          %3124 = vmatpush1.xpose.msra.mxu0 %v2655
          %3125 = vmatprep.subr.mxu0 0.0
          %3126 = vmatpush1.xpose.msra.mxu0 %v2652
          %3127 = vmatprep.subr.mxu0 0.0
          %3128 = vmatpush2.xpose.msra.mxu0 0.0
          %3129 = vmatprep.subr.mxu0 0.0
          %3130 = vmatpush2.xpose.msra.mxu0 0.0
          %3131 = vmatprep.subr.mxu0 0.0
          %3132 = vmatpush2.xpose.msra.mxu0 0.0
          %3133 = vmatprep.subr.mxu0 0.0
          %3134 = vmatpush2.xpose.msra.mxu0 0.0
          %3135 = vmatprep.subr.mxu0 0.0
          %3136 = vmatpush2.xpose.msra.mxu0 0.0
          %3137 = vmatprep.subr.mxu0 0.0
          %3138 = vmatpush2.xpose.msra.mxu0 0.0
          %3139 = vmatprep.subr.mxu0 0.0
          %3140 = vmatpush2.xpose.msra.mxu0 0.0
          %3141 = vmatprep.subr.mxu0 0.0
          %3142 = vmatpush2.xpose.msra.mxu0 0.0
          %3143 = vmatprep.subr.mxu0 0.0
          %3144 = vmatpush2.xpose.msra.mxu0 0.0
          %3145 = vmatprep.subr.mxu0 0.0
          %3146 = vmatpush2.xpose.msra.mxu0 0.0
          %3147 = vmatprep.subr.mxu0 0.0
          %3148 = vmatpush2.xpose.msra.mxu0 0.0
          %3149 = vmatprep.subr.mxu0 0.0
          %3150 = vmatpush2.xpose.msra.mxu0 0.0
          %3151 = vmatprep.subr.mxu0 0.0
          %3152 = vmatpush2.xpose.msra.mxu0 0.0
          %3153 = vmatprep.subr.mxu0 0.0
          %3154 = vmatpush2.xpose.msra.mxu0 0.0
          %3155 = vmatprep.subr.mxu0 0.0
          %3156 = vmatpush2.xpose.msra.mxu0 0.0
          %3157 = vmatprep.subr.mxu0 0.0
          %3158 = vmatpush2.xpose.msra.mxu0 0.0
          %3159 = vmatprep.mubr.f32.mxu0 0.0
          %3160 = vmatmul.mubr.f32.gmra.mxu0 %v3093
          %v3161 = vpop.f32.mrf.mxu0
          %v3162 = vadd.f32 0.0, %v3161
          %v3163 = vpop.f32.mrf.mxu0
          %3164 = vdwg.mxu0
          %v3165 = vld [vmem:[%s247] sm:$0xf]
          %v3166 = vmul.f32 %v2728, %v3162
          %3168 = vrot.lane.b32.xlu0 %v3165, 48
          %v3169 = vpop.permute.xlu0 %3168
          %v3171 = vadd.f32 %v3166, %v3169
          %3173 = vrot.lane.b32.xlu0 %v3171, 80
          %v3174 = vpop.permute.xlu0 %3173
          %vm3176 = vcmask 781952
          %3177 = vst.msk [vmem:[%s238] sm:$0xf] %vm3176, %v3174
          %v3178 = vld [vmem:[#allocation3] sm:$0xf]
          %3180 = vrot.lane.b32.xlu0 %v3178, 32
          %v3181 = vpop.permute.xlu0 %3180
          %v3182 = vsel %vm2647, %v3181, 0
          %3184 = vmatprep.subr.mxu0 0.0
          %3185 = vmatpush1.xpose.msra.mxu0 0.0
          %3186 = vmatprep.subr.mxu0 0.0
          %3187 = vmatpush1.xpose.msra.mxu0 0.0
          %3188 = vmatprep.subr.mxu0 0.0
          %3189 = vmatpush1.xpose.msra.mxu0 0.0
          %3190 = vmatprep.subr.mxu0 0.0
          %3191 = vmatpush1.xpose.msra.mxu0 0.0
          %3192 = vmatprep.subr.mxu0 0.0
          %3193 = vmatpush1.xpose.msra.mxu0 0.0
          %3194 = vmatprep.subr.mxu0 0.0
          %3195 = vmatpush1.xpose.msra.mxu0 0.0
          %3196 = vmatprep.subr.mxu0 0.0
          %3197 = vmatpush1.xpose.msra.mxu0 0.0
          %3198 = vmatprep.subr.mxu0 0.0
          %3199 = vmatpush1.xpose.msra.mxu0 0.0
          %3200 = vmatprep.subr.mxu0 0.0
          %3201 = vmatpush1.xpose.msra.mxu0 0.0
          %3202 = vmatprep.subr.mxu0 0.0
          %3203 = vmatpush1.xpose.msra.mxu0 0.0
          %3204 = vmatprep.subr.mxu0 0.0
          %3205 = vmatpush1.xpose.msra.mxu0 0.0
          %3206 = vmatprep.subr.mxu0 0.0
          %3207 = vmatpush1.xpose.msra.mxu0 0.0
          %3208 = vmatprep.subr.mxu0 0.0
          %3209 = vmatpush1.xpose.msra.mxu0 0.0
          %3210 = vmatprep.subr.mxu0 0.0
          %3211 = vmatpush1.xpose.msra.mxu0 0.0
          %3212 = vmatprep.subr.mxu0 0.0
          %3213 = vmatpush1.xpose.msra.mxu0 %v2655
          %3214 = vmatprep.subr.mxu0 0.0
          %3215 = vmatpush1.xpose.msra.mxu0 %v2652
          %3216 = vmatprep.subr.mxu0 0.0
          %3217 = vmatpush2.xpose.msra.mxu0 0.0
          %3218 = vmatprep.subr.mxu0 0.0
          %3219 = vmatpush2.xpose.msra.mxu0 0.0
          %3220 = vmatprep.subr.mxu0 0.0
          %3221 = vmatpush2.xpose.msra.mxu0 0.0
          %3222 = vmatprep.subr.mxu0 0.0
          %3223 = vmatpush2.xpose.msra.mxu0 0.0
          %3224 = vmatprep.subr.mxu0 0.0
          %3225 = vmatpush2.xpose.msra.mxu0 0.0
          %3226 = vmatprep.subr.mxu0 0.0
          %3227 = vmatpush2.xpose.msra.mxu0 0.0
          %3228 = vmatprep.subr.mxu0 0.0
          %3229 = vmatpush2.xpose.msra.mxu0 0.0
          %3230 = vmatprep.subr.mxu0 0.0
          %3231 = vmatpush2.xpose.msra.mxu0 0.0
          %3232 = vmatprep.subr.mxu0 0.0
          %3233 = vmatpush2.xpose.msra.mxu0 0.0
          %3234 = vmatprep.subr.mxu0 0.0
          %3235 = vmatpush2.xpose.msra.mxu0 0.0
          %3236 = vmatprep.subr.mxu0 0.0
          %3237 = vmatpush2.xpose.msra.mxu0 0.0
          %3238 = vmatprep.subr.mxu0 0.0
          %3239 = vmatpush2.xpose.msra.mxu0 0.0
          %3240 = vmatprep.subr.mxu0 0.0
          %3241 = vmatpush2.xpose.msra.mxu0 0.0
          %3242 = vmatprep.subr.mxu0 0.0
          %3243 = vmatpush2.xpose.msra.mxu0 0.0
          %3244 = vmatprep.subr.mxu0 0.0
          %3245 = vmatpush2.xpose.msra.mxu0 0.0
          %3246 = vmatprep.subr.mxu0 0.0
          %3247 = vmatpush2.xpose.msra.mxu0 0.0
          %3248 = vmatprep.mubr.f32.mxu0 0.0
          %3249 = vmatmul.mubr.f32.gmra.mxu0 %v3182
          %v3250 = vpop.f32.mrf.mxu0
          %v3251 = vadd.f32 0.0, %v3250
          %v3252 = vpop.f32.mrf.mxu0
          %3253 = vdwg.mxu0
          %v3254 = vld [vmem:[%s247] sm:$0xf]
          %v3255 = vmul.f32 %v2728, %v3251
          %3257 = vrot.lane.b32.xlu0 %v3254, 32
          %v3258 = vpop.permute.xlu0 %3257
          %v3260 = vadd.f32 %v3255, %v3258
          %3262 = vrot.lane.b32.xlu0 %v3260, 96
          %v3263 = vpop.permute.xlu0 %3262
          %vm3265 = vcmask 913152
          %3266 = vst.msk [vmem:[%s238] sm:$0xf] %vm3265, %v3263
          %v3267 = vld [vmem:[#allocation3] sm:$0xf]
          %3269 = vrot.lane.b32.xlu0 %v3267, 16
          %v3270 = vpop.permute.xlu0 %3269
          %v3271 = vsel %vm2647, %v3270, 0
          %3273 = vmatprep.subr.mxu0 0.0
          %3274 = vmatpush1.xpose.msra.mxu0 0.0
          %3275 = vmatprep.subr.mxu0 0.0
          %3276 = vmatpush1.xpose.msra.mxu0 0.0
          %3277 = vmatprep.subr.mxu0 0.0
          %3278 = vmatpush1.xpose.msra.mxu0 0.0
          %3279 = vmatprep.subr.mxu0 0.0
          %3280 = vmatpush1.xpose.msra.mxu0 0.0
          %3281 = vmatprep.subr.mxu0 0.0
          %3282 = vmatpush1.xpose.msra.mxu0 0.0
          %3283 = vmatprep.subr.mxu0 0.0
          %3284 = vmatpush1.xpose.msra.mxu0 0.0
          %3285 = vmatprep.subr.mxu0 0.0
          %3286 = vmatpush1.xpose.msra.mxu0 0.0
          %3287 = vmatprep.subr.mxu0 0.0
          %3288 = vmatpush1.xpose.msra.mxu0 0.0
          %3289 = vmatprep.subr.mxu0 0.0
          %3290 = vmatpush1.xpose.msra.mxu0 0.0
          %3291 = vmatprep.subr.mxu0 0.0
          %3292 = vmatpush1.xpose.msra.mxu0 0.0
          %3293 = vmatprep.subr.mxu0 0.0
          %3294 = vmatpush1.xpose.msra.mxu0 0.0
          %3295 = vmatprep.subr.mxu0 0.0
          %3296 = vmatpush1.xpose.msra.mxu0 0.0
          %3297 = vmatprep.subr.mxu0 0.0
          %3298 = vmatpush1.xpose.msra.mxu0 0.0
          %3299 = vmatprep.subr.mxu0 0.0
          %3300 = vmatpush1.xpose.msra.mxu0 0.0
          %3301 = vmatprep.subr.mxu0 0.0
          %3302 = vmatpush1.xpose.msra.mxu0 %v2655
          %3303 = vmatprep.subr.mxu0 0.0
          %3304 = vmatpush1.xpose.msra.mxu0 %v2652
          %3305 = vmatprep.subr.mxu0 0.0
          %3306 = vmatpush2.xpose.msra.mxu0 0.0
          %3307 = vmatprep.subr.mxu0 0.0
          %3308 = vmatpush2.xpose.msra.mxu0 0.0
          %3309 = vmatprep.subr.mxu0 0.0
          %3310 = vmatpush2.xpose.msra.mxu0 0.0
          %3311 = vmatprep.subr.mxu0 0.0
          %3312 = vmatpush2.xpose.msra.mxu0 0.0
          %3313 = vmatprep.subr.mxu0 0.0
          %3314 = vmatpush2.xpose.msra.mxu0 0.0
          %3315 = vmatprep.subr.mxu0 0.0
          %3316 = vmatpush2.xpose.msra.mxu0 0.0
          %3317 = vmatprep.subr.mxu0 0.0
          %3318 = vmatpush2.xpose.msra.mxu0 0.0
          %3319 = vmatprep.subr.mxu0 0.0
          %3320 = vmatpush2.xpose.msra.mxu0 0.0
          %3321 = vmatprep.subr.mxu0 0.0
          %3322 = vmatpush2.xpose.msra.mxu0 0.0
          %3323 = vmatprep.subr.mxu0 0.0
          %3324 = vmatpush2.xpose.msra.mxu0 0.0
          %3325 = vmatprep.subr.mxu0 0.0
          %3326 = vmatpush2.xpose.msra.mxu0 0.0
          %3327 = vmatprep.subr.mxu0 0.0
          %3328 = vmatpush2.xpose.msra.mxu0 0.0
          %3329 = vmatprep.subr.mxu0 0.0
          %3330 = vmatpush2.xpose.msra.mxu0 0.0
          %3331 = vmatprep.subr.mxu0 0.0
          %3332 = vmatpush2.xpose.msra.mxu0 0.0
          %3333 = vmatprep.subr.mxu0 0.0
          %3334 = vmatpush2.xpose.msra.mxu0 0.0
          %3335 = vmatprep.subr.mxu0 0.0
          %3336 = vmatpush2.xpose.msra.mxu0 0.0
          %3337 = vmatprep.mubr.f32.mxu0 0.0
          %3338 = vmatmul.mubr.f32.gmra.mxu0 %v3271
          %v3339 = vpop.f32.mrf.mxu0
          %v3340 = vadd.f32 0.0, %v3339
          %v3341 = vpop.f32.mrf.mxu0
          %3342 = vdwg.mxu0
          %v3343 = vld [vmem:[%s247] sm:$0xf]
          %v3344 = vmul.f32 %v2728, %v3340
          %3346 = vrot.lane.b32.xlu0 %v3343, 16
          %v3347 = vpop.permute.xlu0 %3346
          %v3349 = vadd.f32 %v3344, %v3347
          %3351 = vrot.lane.b32.xlu0 %v3349, 112
          %v3352 = vpop.permute.xlu0 %3351
          %vm3354 = vcmask 1044352
          %3355 = vst.msk [vmem:[%s238] sm:$0xf] %vm3354, %v3352
          %v3356 = vld [vmem:[#allocation3 + $0x4] sm:$0xf]
          %v3358 = vsel %vm2647, %v3356, 0
          %3360 = vmatprep.subr.mxu0 0.0
          %3361 = vmatpush1.xpose.msra.mxu0 0.0
          %3362 = vmatprep.subr.mxu0 0.0
          %3363 = vmatpush1.xpose.msra.mxu0 0.0
          %3364 = vmatprep.subr.mxu0 0.0
          %3365 = vmatpush1.xpose.msra.mxu0 0.0
          %3366 = vmatprep.subr.mxu0 0.0
          %3367 = vmatpush1.xpose.msra.mxu0 0.0
          %3368 = vmatprep.subr.mxu0 0.0
          %3369 = vmatpush1.xpose.msra.mxu0 0.0
          %3370 = vmatprep.subr.mxu0 0.0
          %3371 = vmatpush1.xpose.msra.mxu0 0.0
          %3372 = vmatprep.subr.mxu0 0.0
          %3373 = vmatpush1.xpose.msra.mxu0 0.0
          %3374 = vmatprep.subr.mxu0 0.0
          %3375 = vmatpush1.xpose.msra.mxu0 0.0
          %3376 = vmatprep.subr.mxu0 0.0
          %3377 = vmatpush1.xpose.msra.mxu0 0.0
          %3378 = vmatprep.subr.mxu0 0.0
          %3379 = vmatpush1.xpose.msra.mxu0 0.0
          %3380 = vmatprep.subr.mxu0 0.0
          %3381 = vmatpush1.xpose.msra.mxu0 0.0
          %3382 = vmatprep.subr.mxu0 0.0
          %3383 = vmatpush1.xpose.msra.mxu0 0.0
          %3384 = vmatprep.subr.mxu0 0.0
          %3385 = vmatpush1.xpose.msra.mxu0 0.0
          %3386 = vmatprep.subr.mxu0 0.0
          %3387 = vmatpush1.xpose.msra.mxu0 0.0
          %3388 = vmatprep.subr.mxu0 0.0
          %3389 = vmatpush1.xpose.msra.mxu0 %v2655
          %3390 = vmatprep.subr.mxu0 0.0
          %3391 = vmatpush1.xpose.msra.mxu0 %v2652
          %3392 = vmatprep.subr.mxu0 0.0
          %3393 = vmatpush2.xpose.msra.mxu0 0.0
          %3394 = vmatprep.subr.mxu0 0.0
          %3395 = vmatpush2.xpose.msra.mxu0 0.0
          %3396 = vmatprep.subr.mxu0 0.0
          %3397 = vmatpush2.xpose.msra.mxu0 0.0
          %3398 = vmatprep.subr.mxu0 0.0
          %3399 = vmatpush2.xpose.msra.mxu0 0.0
          %3400 = vmatprep.subr.mxu0 0.0
          %3401 = vmatpush2.xpose.msra.mxu0 0.0
          %3402 = vmatprep.subr.mxu0 0.0
          %3403 = vmatpush2.xpose.msra.mxu0 0.0
          %3404 = vmatprep.subr.mxu0 0.0
          %3405 = vmatpush2.xpose.msra.mxu0 0.0
          %3406 = vmatprep.subr.mxu0 0.0
          %3407 = vmatpush2.xpose.msra.mxu0 0.0
          %3408 = vmatprep.subr.mxu0 0.0
          %3409 = vmatpush2.xpose.msra.mxu0 0.0
          %3410 = vmatprep.subr.mxu0 0.0
          %3411 = vmatpush2.xpose.msra.mxu0 0.0
          %3412 = vmatprep.subr.mxu0 0.0
          %3413 = vmatpush2.xpose.msra.mxu0 0.0
          %3414 = vmatprep.subr.mxu0 0.0
          %3415 = vmatpush2.xpose.msra.mxu0 0.0
          %3416 = vmatprep.subr.mxu0 0.0
          %3417 = vmatpush2.xpose.msra.mxu0 0.0
          %3418 = vmatprep.subr.mxu0 0.0
          %3419 = vmatpush2.xpose.msra.mxu0 0.0
          %3420 = vmatprep.subr.mxu0 0.0
          %3421 = vmatpush2.xpose.msra.mxu0 0.0
          %3422 = vmatprep.subr.mxu0 0.0
          %3423 = vmatpush2.xpose.msra.mxu0 0.0
          %3424 = vmatprep.mubr.f32.mxu0 0.0
          %3425 = vmatmul.mubr.f32.gmra.mxu0 %v3358
          %v3426 = vpop.f32.mrf.mxu0
          %v3427 = vadd.f32 0.0, %v3426
          %v3428 = vpop.f32.mrf.mxu0
          %3429 = vdwg.mxu0
          %v3430 = vld [vmem:[%s247 + $0x4] sm:$0xf]
          %v3431 = vmul.f32 %v2728, %v3427
          %v3432 = vadd.f32 %v3431, %v3430
          %3433 = vst.msk [vmem:[%s238 + $0x4] sm:$0xf] %vm2731, %v3432
          %v3434 = vld [vmem:[#allocation3 + $0x4] sm:$0xf]
          %3436 = vrot.lane.b32.xlu0 %v3434, 112
          %v3437 = vpop.permute.xlu0 %3436
          %v3438 = vsel %vm2647, %v3437, 0
          %3440 = vmatprep.subr.mxu0 0.0
          %3441 = vmatpush1.xpose.msra.mxu0 0.0
          %3442 = vmatprep.subr.mxu0 0.0
          %3443 = vmatpush1.xpose.msra.mxu0 0.0
          %3444 = vmatprep.subr.mxu0 0.0
          %3445 = vmatpush1.xpose.msra.mxu0 0.0
          %3446 = vmatprep.subr.mxu0 0.0
          %3447 = vmatpush1.xpose.msra.mxu0 0.0
          %3448 = vmatprep.subr.mxu0 0.0
          %3449 = vmatpush1.xpose.msra.mxu0 0.0
          %3450 = vmatprep.subr.mxu0 0.0
          %3451 = vmatpush1.xpose.msra.mxu0 0.0
          %3452 = vmatprep.subr.mxu0 0.0
          %3453 = vmatpush1.xpose.msra.mxu0 0.0
          %3454 = vmatprep.subr.mxu0 0.0
          %3455 = vmatpush1.xpose.msra.mxu0 0.0
          %3456 = vmatprep.subr.mxu0 0.0
          %3457 = vmatpush1.xpose.msra.mxu0 0.0
          %3458 = vmatprep.subr.mxu0 0.0
          %3459 = vmatpush1.xpose.msra.mxu0 0.0
          %3460 = vmatprep.subr.mxu0 0.0
          %3461 = vmatpush1.xpose.msra.mxu0 0.0
          %3462 = vmatprep.subr.mxu0 0.0
          %3463 = vmatpush1.xpose.msra.mxu0 0.0
          %3464 = vmatprep.subr.mxu0 0.0
          %3465 = vmatpush1.xpose.msra.mxu0 0.0
          %3466 = vmatprep.subr.mxu0 0.0
          %3467 = vmatpush1.xpose.msra.mxu0 0.0
          %3468 = vmatprep.subr.mxu0 0.0
          %3469 = vmatpush1.xpose.msra.mxu0 %v2655
          %3470 = vmatprep.subr.mxu0 0.0
          %3471 = vmatpush1.xpose.msra.mxu0 %v2652
          %3472 = vmatprep.subr.mxu0 0.0
          %3473 = vmatpush2.xpose.msra.mxu0 0.0
          %3474 = vmatprep.subr.mxu0 0.0
          %3475 = vmatpush2.xpose.msra.mxu0 0.0
          %3476 = vmatprep.subr.mxu0 0.0
          %3477 = vmatpush2.xpose.msra.mxu0 0.0
          %3478 = vmatprep.subr.mxu0 0.0
          %3479 = vmatpush2.xpose.msra.mxu0 0.0
          %3480 = vmatprep.subr.mxu0 0.0
          %3481 = vmatpush2.xpose.msra.mxu0 0.0
          %3482 = vmatprep.subr.mxu0 0.0
          %3483 = vmatpush2.xpose.msra.mxu0 0.0
          %3484 = vmatprep.subr.mxu0 0.0
          %3485 = vmatpush2.xpose.msra.mxu0 0.0
          %3486 = vmatprep.subr.mxu0 0.0
          %3487 = vmatpush2.xpose.msra.mxu0 0.0
          %3488 = vmatprep.subr.mxu0 0.0
          %3489 = vmatpush2.xpose.msra.mxu0 0.0
          %3490 = vmatprep.subr.mxu0 0.0
          %3491 = vmatpush2.xpose.msra.mxu0 0.0
          %3492 = vmatprep.subr.mxu0 0.0
          %3493 = vmatpush2.xpose.msra.mxu0 0.0
          %3494 = vmatprep.subr.mxu0 0.0
          %3495 = vmatpush2.xpose.msra.mxu0 0.0
          %3496 = vmatprep.subr.mxu0 0.0
          %3497 = vmatpush2.xpose.msra.mxu0 0.0
          %3498 = vmatprep.subr.mxu0 0.0
          %3499 = vmatpush2.xpose.msra.mxu0 0.0
          %3500 = vmatprep.subr.mxu0 0.0
          %3501 = vmatpush2.xpose.msra.mxu0 0.0
          %3502 = vmatprep.subr.mxu0 0.0
          %3503 = vmatpush2.xpose.msra.mxu0 0.0
          %3504 = vmatprep.mubr.f32.mxu0 0.0
          %3505 = vmatmul.mubr.f32.gmra.mxu0 %v3438
          %v3506 = vpop.f32.mrf.mxu0
          %v3507 = vadd.f32 0.0, %v3506
          %v3508 = vpop.f32.mrf.mxu0
          %3509 = vdwg.mxu0
          %v3510 = vld [vmem:[%s247 + $0x4] sm:$0xf]
          %v3511 = vmul.f32 %v2728, %v3507
          %3513 = vrot.lane.b32.xlu0 %v3510, 112
          %v3514 = vpop.permute.xlu0 %3513
          %v3516 = vadd.f32 %v3511, %v3514
          %3518 = vrot.lane.b32.xlu0 %v3516, 16
          %v3519 = vpop.permute.xlu0 %3518
          %3521 = vst.msk [vmem:[%s238 + $0x4] sm:$0xf] %vm2820, %v3519
          %v3522 = vld [vmem:[#allocation3 + $0x4] sm:$0xf]
          %3524 = vrot.lane.b32.xlu0 %v3522, 96
          %v3525 = vpop.permute.xlu0 %3524
          %v3526 = vsel %vm2647, %v3525, 0
          %3528 = vmatprep.subr.mxu0 0.0
          %3529 = vmatpush1.xpose.msra.mxu0 0.0
          %3530 = vmatprep.subr.mxu0 0.0
          %3531 = vmatpush1.xpose.msra.mxu0 0.0
          %3532 = vmatprep.subr.mxu0 0.0
          %3533 = vmatpush1.xpose.msra.mxu0 0.0
          %3534 = vmatprep.subr.mxu0 0.0
          %3535 = vmatpush1.xpose.msra.mxu0 0.0
          %3536 = vmatprep.subr.mxu0 0.0
          %3537 = vmatpush1.xpose.msra.mxu0 0.0
          %3538 = vmatprep.subr.mxu0 0.0
          %3539 = vmatpush1.xpose.msra.mxu0 0.0
          %3540 = vmatprep.subr.mxu0 0.0
          %3541 = vmatpush1.xpose.msra.mxu0 0.0
          %3542 = vmatprep.subr.mxu0 0.0
          %3543 = vmatpush1.xpose.msra.mxu0 0.0
          %3544 = vmatprep.subr.mxu0 0.0
          %3545 = vmatpush1.xpose.msra.mxu0 0.0
          %3546 = vmatprep.subr.mxu0 0.0
          %3547 = vmatpush1.xpose.msra.mxu0 0.0
          %3548 = vmatprep.subr.mxu0 0.0
          %3549 = vmatpush1.xpose.msra.mxu0 0.0
          %3550 = vmatprep.subr.mxu0 0.0
          %3551 = vmatpush1.xpose.msra.mxu0 0.0
          %3552 = vmatprep.subr.mxu0 0.0
          %3553 = vmatpush1.xpose.msra.mxu0 0.0
          %3554 = vmatprep.subr.mxu0 0.0
          %3555 = vmatpush1.xpose.msra.mxu0 0.0
          %3556 = vmatprep.subr.mxu0 0.0
          %3557 = vmatpush1.xpose.msra.mxu0 %v2655
          %3558 = vmatprep.subr.mxu0 0.0
          %3559 = vmatpush1.xpose.msra.mxu0 %v2652
          %3560 = vmatprep.subr.mxu0 0.0
          %3561 = vmatpush2.xpose.msra.mxu0 0.0
          %3562 = vmatprep.subr.mxu0 0.0
          %3563 = vmatpush2.xpose.msra.mxu0 0.0
          %3564 = vmatprep.subr.mxu0 0.0
          %3565 = vmatpush2.xpose.msra.mxu0 0.0
          %3566 = vmatprep.subr.mxu0 0.0
          %3567 = vmatpush2.xpose.msra.mxu0 0.0
          %3568 = vmatprep.subr.mxu0 0.0
          %3569 = vmatpush2.xpose.msra.mxu0 0.0
          %3570 = vmatprep.subr.mxu0 0.0
          %3571 = vmatpush2.xpose.msra.mxu0 0.0
          %3572 = vmatprep.subr.mxu0 0.0
          %3573 = vmatpush2.xpose.msra.mxu0 0.0
          %3574 = vmatprep.subr.mxu0 0.0
          %3575 = vmatpush2.xpose.msra.mxu0 0.0
          %3576 = vmatprep.subr.mxu0 0.0
          %3577 = vmatpush2.xpose.msra.mxu0 0.0
          %3578 = vmatprep.subr.mxu0 0.0
          %3579 = vmatpush2.xpose.msra.mxu0 0.0
          %3580 = vmatprep.subr.mxu0 0.0
          %3581 = vmatpush2.xpose.msra.mxu0 0.0
          %3582 = vmatprep.subr.mxu0 0.0
          %3583 = vmatpush2.xpose.msra.mxu0 0.0
          %3584 = vmatprep.subr.mxu0 0.0
          %3585 = vmatpush2.xpose.msra.mxu0 0.0
          %3586 = vmatprep.subr.mxu0 0.0
          %3587 = vmatpush2.xpose.msra.mxu0 0.0
          %3588 = vmatprep.subr.mxu0 0.0
          %3589 = vmatpush2.xpose.msra.mxu0 0.0
          %3590 = vmatprep.subr.mxu0 0.0
          %3591 = vmatpush2.xpose.msra.mxu0 0.0
          %3592 = vmatprep.mubr.f32.mxu0 0.0
          %3593 = vmatmul.mubr.f32.gmra.mxu0 %v3526
          %v3594 = vpop.f32.mrf.mxu0
          %v3595 = vadd.f32 0.0, %v3594
          %v3596 = vpop.f32.mrf.mxu0
          %3597 = vdwg.mxu0
          %v3598 = vld [vmem:[%s247 + $0x4] sm:$0xf]
          %v3599 = vmul.f32 %v2728, %v3595
          %3601 = vrot.lane.b32.xlu0 %v3598, 96
          %v3602 = vpop.permute.xlu0 %3601
          %v3604 = vadd.f32 %v3599, %v3602
          %3606 = vrot.lane.b32.xlu0 %v3604, 32
          %v3607 = vpop.permute.xlu0 %3606
          %3609 = vst.msk [vmem:[%s238 + $0x4] sm:$0xf] %vm2909, %v3607
          %v3610 = vld [vmem:[#allocation3 + $0x4] sm:$0xf]
          %3612 = vrot.lane.b32.xlu0 %v3610, 80
          %v3613 = vpop.permute.xlu0 %3612
          %v3614 = vsel %vm2647, %v3613, 0
          %3616 = vmatprep.subr.mxu0 0.0
          %3617 = vmatpush1.xpose.msra.mxu0 0.0
          %3618 = vmatprep.subr.mxu0 0.0
          %3619 = vmatpush1.xpose.msra.mxu0 0.0
          %3620 = vmatprep.subr.mxu0 0.0
          %3621 = vmatpush1.xpose.msra.mxu0 0.0
          %3622 = vmatprep.subr.mxu0 0.0
          %3623 = vmatpush1.xpose.msra.mxu0 0.0
          %3624 = vmatprep.subr.mxu0 0.0
          %3625 = vmatpush1.xpose.msra.mxu0 0.0
          %3626 = vmatprep.subr.mxu0 0.0
          %3627 = vmatpush1.xpose.msra.mxu0 0.0
          %3628 = vmatprep.subr.mxu0 0.0
          %3629 = vmatpush1.xpose.msra.mxu0 0.0
          %3630 = vmatprep.subr.mxu0 0.0
          %3631 = vmatpush1.xpose.msra.mxu0 0.0
          %3632 = vmatprep.subr.mxu0 0.0
          %3633 = vmatpush1.xpose.msra.mxu0 0.0
          %3634 = vmatprep.subr.mxu0 0.0
          %3635 = vmatpush1.xpose.msra.mxu0 0.0
          %3636 = vmatprep.subr.mxu0 0.0
          %3637 = vmatpush1.xpose.msra.mxu0 0.0
          %3638 = vmatprep.subr.mxu0 0.0
          %3639 = vmatpush1.xpose.msra.mxu0 0.0
          %3640 = vmatprep.subr.mxu0 0.0
          %3641 = vmatpush1.xpose.msra.mxu0 0.0
          %3642 = vmatprep.subr.mxu0 0.0
          %3643 = vmatpush1.xpose.msra.mxu0 0.0
          %3644 = vmatprep.subr.mxu0 0.0
          %3645 = vmatpush1.xpose.msra.mxu0 %v2655
          %3646 = vmatprep.subr.mxu0 0.0
          %3647 = vmatpush1.xpose.msra.mxu0 %v2652
          %3648 = vmatprep.subr.mxu0 0.0
          %3649 = vmatpush2.xpose.msra.mxu0 0.0
          %3650 = vmatprep.subr.mxu0 0.0
          %3651 = vmatpush2.xpose.msra.mxu0 0.0
          %3652 = vmatprep.subr.mxu0 0.0
          %3653 = vmatpush2.xpose.msra.mxu0 0.0
          %3654 = vmatprep.subr.mxu0 0.0
          %3655 = vmatpush2.xpose.msra.mxu0 0.0
          %3656 = vmatprep.subr.mxu0 0.0
          %3657 = vmatpush2.xpose.msra.mxu0 0.0
          %3658 = vmatprep.subr.mxu0 0.0
          %3659 = vmatpush2.xpose.msra.mxu0 0.0
          %3660 = vmatprep.subr.mxu0 0.0
          %3661 = vmatpush2.xpose.msra.mxu0 0.0
          %3662 = vmatprep.subr.mxu0 0.0
          %3663 = vmatpush2.xpose.msra.mxu0 0.0
          %3664 = vmatprep.subr.mxu0 0.0
          %3665 = vmatpush2.xpose.msra.mxu0 0.0
          %3666 = vmatprep.subr.mxu0 0.0
          %3667 = vmatpush2.xpose.msra.mxu0 0.0
          %3668 = vmatprep.subr.mxu0 0.0
          %3669 = vmatpush2.xpose.msra.mxu0 0.0
          %3670 = vmatprep.subr.mxu0 0.0
          %3671 = vmatpush2.xpose.msra.mxu0 0.0
          %3672 = vmatprep.subr.mxu0 0.0
          %3673 = vmatpush2.xpose.msra.mxu0 0.0
          %3674 = vmatprep.subr.mxu0 0.0
          %3675 = vmatpush2.xpose.msra.mxu0 0.0
          %3676 = vmatprep.subr.mxu0 0.0
          %3677 = vmatpush2.xpose.msra.mxu0 0.0
          %3678 = vmatprep.subr.mxu0 0.0
          %3679 = vmatpush2.xpose.msra.mxu0 0.0
          %3680 = vmatprep.mubr.f32.mxu0 0.0
          %3681 = vmatmul.mubr.f32.gmra.mxu0 %v3614
          %v3682 = vpop.f32.mrf.mxu0
          %v3683 = vadd.f32 0.0, %v3682
          %v3684 = vpop.f32.mrf.mxu0
          %3685 = vdwg.mxu0
          %v3686 = vld [vmem:[%s247 + $0x4] sm:$0xf]
          %v3687 = vmul.f32 %v2728, %v3683
          %3689 = vrot.lane.b32.xlu0 %v3686, 80
          %v3690 = vpop.permute.xlu0 %3689
          %v3692 = vadd.f32 %v3687, %v3690
          %3694 = vrot.lane.b32.xlu0 %v3692, 48
          %v3695 = vpop.permute.xlu0 %3694
          %3697 = vst.msk [vmem:[%s238 + $0x4] sm:$0xf] %vm2998, %v3695
          %v3698 = vld [vmem:[#allocation3 + $0x4] sm:$0xf]
          %3700 = vrot.lane.b32.xlu0 %v3698, 64
          %v3701 = vpop.permute.xlu0 %3700
          %v3702 = vsel %vm2647, %v3701, 0
          %3704 = vmatprep.subr.mxu0 0.0
          %3705 = vmatpush1.xpose.msra.mxu0 0.0
          %3706 = vmatprep.subr.mxu0 0.0
          %3707 = vmatpush1.xpose.msra.mxu0 0.0
          %3708 = vmatprep.subr.mxu0 0.0
          %3709 = vmatpush1.xpose.msra.mxu0 0.0
          %3710 = vmatprep.subr.mxu0 0.0
          %3711 = vmatpush1.xpose.msra.mxu0 0.0
          %3712 = vmatprep.subr.mxu0 0.0
          %3713 = vmatpush1.xpose.msra.mxu0 0.0
          %3714 = vmatprep.subr.mxu0 0.0
          %3715 = vmatpush1.xpose.msra.mxu0 0.0
          %3716 = vmatprep.subr.mxu0 0.0
          %3717 = vmatpush1.xpose.msra.mxu0 0.0
          %3718 = vmatprep.subr.mxu0 0.0
          %3719 = vmatpush1.xpose.msra.mxu0 0.0
          %3720 = vmatprep.subr.mxu0 0.0
          %3721 = vmatpush1.xpose.msra.mxu0 0.0
          %3722 = vmatprep.subr.mxu0 0.0
          %3723 = vmatpush1.xpose.msra.mxu0 0.0
          %3724 = vmatprep.subr.mxu0 0.0
          %3725 = vmatpush1.xpose.msra.mxu0 0.0
          %3726 = vmatprep.subr.mxu0 0.0
          %3727 = vmatpush1.xpose.msra.mxu0 0.0
          %3728 = vmatprep.subr.mxu0 0.0
          %3729 = vmatpush1.xpose.msra.mxu0 0.0
          %3730 = vmatprep.subr.mxu0 0.0
          %3731 = vmatpush1.xpose.msra.mxu0 0.0
          %3732 = vmatprep.subr.mxu0 0.0
          %3733 = vmatpush1.xpose.msra.mxu0 %v2655
          %3734 = vmatprep.subr.mxu0 0.0
          %3735 = vmatpush1.xpose.msra.mxu0 %v2652
          %3736 = vmatprep.subr.mxu0 0.0
          %3737 = vmatpush2.xpose.msra.mxu0 0.0
          %3738 = vmatprep.subr.mxu0 0.0
          %3739 = vmatpush2.xpose.msra.mxu0 0.0
          %3740 = vmatprep.subr.mxu0 0.0
          %3741 = vmatpush2.xpose.msra.mxu0 0.0
          %3742 = vmatprep.subr.mxu0 0.0
          %3743 = vmatpush2.xpose.msra.mxu0 0.0
          %3744 = vmatprep.subr.mxu0 0.0
          %3745 = vmatpush2.xpose.msra.mxu0 0.0
          %3746 = vmatprep.subr.mxu0 0.0
          %3747 = vmatpush2.xpose.msra.mxu0 0.0
          %3748 = vmatprep.subr.mxu0 0.0
          %3749 = vmatpush2.xpose.msra.mxu0 0.0
          %3750 = vmatprep.subr.mxu0 0.0
          %3751 = vmatpush2.xpose.msra.mxu0 0.0
          %3752 = vmatprep.subr.mxu0 0.0
          %3753 = vmatpush2.xpose.msra.mxu0 0.0
          %3754 = vmatprep.subr.mxu0 0.0
          %3755 = vmatpush2.xpose.msra.mxu0 0.0
          %3756 = vmatprep.subr.mxu0 0.0
          %3757 = vmatpush2.xpose.msra.mxu0 0.0
          %3758 = vmatprep.subr.mxu0 0.0
          %3759 = vmatpush2.xpose.msra.mxu0 0.0
          %3760 = vmatprep.subr.mxu0 0.0
          %3761 = vmatpush2.xpose.msra.mxu0 0.0
          %3762 = vmatprep.subr.mxu0 0.0
          %3763 = vmatpush2.xpose.msra.mxu0 0.0
          %3764 = vmatprep.subr.mxu0 0.0
          %3765 = vmatpush2.xpose.msra.mxu0 0.0
          %3766 = vmatprep.subr.mxu0 0.0
          %3767 = vmatpush2.xpose.msra.mxu0 0.0
          %3768 = vmatprep.mubr.f32.mxu0 0.0
          %3769 = vmatmul.mubr.f32.gmra.mxu0 %v3702
          %v3770 = vpop.f32.mrf.mxu0
          %v3771 = vadd.f32 0.0, %v3770
          %v3772 = vpop.f32.mrf.mxu0
          %3773 = vdwg.mxu0
          %v3774 = vld [vmem:[%s247 + $0x4] sm:$0xf]
          %v3775 = vmul.f32 %v2728, %v3771
          %3777 = vrot.lane.b32.xlu0 %v3774, 64
          %v3778 = vpop.permute.xlu0 %3777
          %v3780 = vadd.f32 %v3775, %v3778
          %3782 = vrot.lane.b32.xlu0 %v3780, 64
          %v3783 = vpop.permute.xlu0 %3782
          %3785 = vst.msk [vmem:[%s238 + $0x4] sm:$0xf] %vm3087, %v3783
          %v3786 = vld [vmem:[#allocation3 + $0x4] sm:$0xf]
          %3788 = vrot.lane.b32.xlu0 %v3786, 48
          %v3789 = vpop.permute.xlu0 %3788
          %v3790 = vsel %vm2647, %v3789, 0
          %3792 = vmatprep.subr.mxu0 0.0
          %3793 = vmatpush1.xpose.msra.mxu0 0.0
          %3794 = vmatprep.subr.mxu0 0.0
          %3795 = vmatpush1.xpose.msra.mxu0 0.0
          %3796 = vmatprep.subr.mxu0 0.0
          %3797 = vmatpush1.xpose.msra.mxu0 0.0
          %3798 = vmatprep.subr.mxu0 0.0
          %3799 = vmatpush1.xpose.msra.mxu0 0.0
          %3800 = vmatprep.subr.mxu0 0.0
          %3801 = vmatpush1.xpose.msra.mxu0 0.0
          %3802 = vmatprep.subr.mxu0 0.0
          %3803 = vmatpush1.xpose.msra.mxu0 0.0
          %3804 = vmatprep.subr.mxu0 0.0
          %3805 = vmatpush1.xpose.msra.mxu0 0.0
          %3806 = vmatprep.subr.mxu0 0.0
          %3807 = vmatpush1.xpose.msra.mxu0 0.0
          %3808 = vmatprep.subr.mxu0 0.0
          %3809 = vmatpush1.xpose.msra.mxu0 0.0
          %3810 = vmatprep.subr.mxu0 0.0
          %3811 = vmatpush1.xpose.msra.mxu0 0.0
          %3812 = vmatprep.subr.mxu0 0.0
          %3813 = vmatpush1.xpose.msra.mxu0 0.0
          %3814 = vmatprep.subr.mxu0 0.0
          %3815 = vmatpush1.xpose.msra.mxu0 0.0
          %3816 = vmatprep.subr.mxu0 0.0
          %3817 = vmatpush1.xpose.msra.mxu0 0.0
          %3818 = vmatprep.subr.mxu0 0.0
          %3819 = vmatpush1.xpose.msra.mxu0 0.0
          %3820 = vmatprep.subr.mxu0 0.0
          %3821 = vmatpush1.xpose.msra.mxu0 %v2655
          %3822 = vmatprep.subr.mxu0 0.0
          %3823 = vmatpush1.xpose.msra.mxu0 %v2652
          %3824 = vmatprep.subr.mxu0 0.0
          %3825 = vmatpush2.xpose.msra.mxu0 0.0
          %3826 = vmatprep.subr.mxu0 0.0
          %3827 = vmatpush2.xpose.msra.mxu0 0.0
          %3828 = vmatprep.subr.mxu0 0.0
          %3829 = vmatpush2.xpose.msra.mxu0 0.0
          %3830 = vmatprep.subr.mxu0 0.0
          %3831 = vmatpush2.xpose.msra.mxu0 0.0
          %3832 = vmatprep.subr.mxu0 0.0
          %3833 = vmatpush2.xpose.msra.mxu0 0.0
          %3834 = vmatprep.subr.mxu0 0.0
          %3835 = vmatpush2.xpose.msra.mxu0 0.0
          %3836 = vmatprep.subr.mxu0 0.0
          %3837 = vmatpush2.xpose.msra.mxu0 0.0
          %3838 = vmatprep.subr.mxu0 0.0
          %3839 = vmatpush2.xpose.msra.mxu0 0.0
          %3840 = vmatprep.subr.mxu0 0.0
          %3841 = vmatpush2.xpose.msra.mxu0 0.0
          %3842 = vmatprep.subr.mxu0 0.0
          %3843 = vmatpush2.xpose.msra.mxu0 0.0
          %3844 = vmatprep.subr.mxu0 0.0
          %3845 = vmatpush2.xpose.msra.mxu0 0.0
          %3846 = vmatprep.subr.mxu0 0.0
          %3847 = vmatpush2.xpose.msra.mxu0 0.0
          %3848 = vmatprep.subr.mxu0 0.0
          %3849 = vmatpush2.xpose.msra.mxu0 0.0
          %3850 = vmatprep.subr.mxu0 0.0
          %3851 = vmatpush2.xpose.msra.mxu0 0.0
          %3852 = vmatprep.subr.mxu0 0.0
          %3853 = vmatpush2.xpose.msra.mxu0 0.0
          %3854 = vmatprep.subr.mxu0 0.0
          %3855 = vmatpush2.xpose.msra.mxu0 0.0
          %3856 = vmatprep.mubr.f32.mxu0 0.0
          %3857 = vmatmul.mubr.f32.gmra.mxu0 %v3790
          %v3858 = vpop.f32.mrf.mxu0
          %v3859 = vadd.f32 0.0, %v3858
          %v3860 = vpop.f32.mrf.mxu0
          %3861 = vdwg.mxu0
          %v3862 = vld [vmem:[%s247 + $0x4] sm:$0xf]
          %v3863 = vmul.f32 %v2728, %v3859
          %3865 = vrot.lane.b32.xlu0 %v3862, 48
          %v3866 = vpop.permute.xlu0 %3865
          %v3868 = vadd.f32 %v3863, %v3866
          %3870 = vrot.lane.b32.xlu0 %v3868, 80
          %v3871 = vpop.permute.xlu0 %3870
          %3873 = vst.msk [vmem:[%s238 + $0x4] sm:$0xf] %vm3176, %v3871
          %v3874 = vld [vmem:[#allocation3 + $0x4] sm:$0xf]
          %3876 = vrot.lane.b32.xlu0 %v3874, 32
          %v3877 = vpop.permute.xlu0 %3876
          %v3878 = vsel %vm2647, %v3877, 0
          %3880 = vmatprep.subr.mxu0 0.0
          %3881 = vmatpush1.xpose.msra.mxu0 0.0
          %3882 = vmatprep.subr.mxu0 0.0
          %3883 = vmatpush1.xpose.msra.mxu0 0.0
          %3884 = vmatprep.subr.mxu0 0.0
          %3885 = vmatpush1.xpose.msra.mxu0 0.0
          %3886 = vmatprep.subr.mxu0 0.0
          %3887 = vmatpush1.xpose.msra.mxu0 0.0
          %3888 = vmatprep.subr.mxu0 0.0
          %3889 = vmatpush1.xpose.msra.mxu0 0.0
          %3890 = vmatprep.subr.mxu0 0.0
          %3891 = vmatpush1.xpose.msra.mxu0 0.0
          %3892 = vmatprep.subr.mxu0 0.0
          %3893 = vmatpush1.xpose.msra.mxu0 0.0
          %3894 = vmatprep.subr.mxu0 0.0
          %3895 = vmatpush1.xpose.msra.mxu0 0.0
          %3896 = vmatprep.subr.mxu0 0.0
          %3897 = vmatpush1.xpose.msra.mxu0 0.0
          %3898 = vmatprep.subr.mxu0 0.0
          %3899 = vmatpush1.xpose.msra.mxu0 0.0
          %3900 = vmatprep.subr.mxu0 0.0
          %3901 = vmatpush1.xpose.msra.mxu0 0.0
          %3902 = vmatprep.subr.mxu0 0.0
          %3903 = vmatpush1.xpose.msra.mxu0 0.0
          %3904 = vmatprep.subr.mxu0 0.0
          %3905 = vmatpush1.xpose.msra.mxu0 0.0
          %3906 = vmatprep.subr.mxu0 0.0
          %3907 = vmatpush1.xpose.msra.mxu0 0.0
          %3908 = vmatprep.subr.mxu0 0.0
          %3909 = vmatpush1.xpose.msra.mxu0 %v2655
          %3910 = vmatprep.subr.mxu0 0.0
          %3911 = vmatpush1.xpose.msra.mxu0 %v2652
          %3912 = vmatprep.subr.mxu0 0.0
          %3913 = vmatpush2.xpose.msra.mxu0 0.0
          %3914 = vmatprep.subr.mxu0 0.0
          %3915 = vmatpush2.xpose.msra.mxu0 0.0
          %3916 = vmatprep.subr.mxu0 0.0
          %3917 = vmatpush2.xpose.msra.mxu0 0.0
          %3918 = vmatprep.subr.mxu0 0.0
          %3919 = vmatpush2.xpose.msra.mxu0 0.0
          %3920 = vmatprep.subr.mxu0 0.0
          %3921 = vmatpush2.xpose.msra.mxu0 0.0
          %3922 = vmatprep.subr.mxu0 0.0
          %3923 = vmatpush2.xpose.msra.mxu0 0.0
          %3924 = vmatprep.subr.mxu0 0.0
          %3925 = vmatpush2.xpose.msra.mxu0 0.0
          %3926 = vmatprep.subr.mxu0 0.0
          %3927 = vmatpush2.xpose.msra.mxu0 0.0
          %3928 = vmatprep.subr.mxu0 0.0
          %3929 = vmatpush2.xpose.msra.mxu0 0.0
          %3930 = vmatprep.subr.mxu0 0.0
          %3931 = vmatpush2.xpose.msra.mxu0 0.0
          %3932 = vmatprep.subr.mxu0 0.0
          %3933 = vmatpush2.xpose.msra.mxu0 0.0
          %3934 = vmatprep.subr.mxu0 0.0
          %3935 = vmatpush2.xpose.msra.mxu0 0.0
          %3936 = vmatprep.subr.mxu0 0.0
          %3937 = vmatpush2.xpose.msra.mxu0 0.0
          %3938 = vmatprep.subr.mxu0 0.0
          %3939 = vmatpush2.xpose.msra.mxu0 0.0
          %3940 = vmatprep.subr.mxu0 0.0
          %3941 = vmatpush2.xpose.msra.mxu0 0.0
          %3942 = vmatprep.subr.mxu0 0.0
          %3943 = vmatpush2.xpose.msra.mxu0 0.0
          %3944 = vmatprep.mubr.f32.mxu0 0.0
          %3945 = vmatmul.mubr.f32.gmra.mxu0 %v3878
          %v3946 = vpop.f32.mrf.mxu0
          %v3947 = vadd.f32 0.0, %v3946
          %v3948 = vpop.f32.mrf.mxu0
          %3949 = vdwg.mxu0
          %v3950 = vld [vmem:[%s247 + $0x4] sm:$0xf]
          %v3951 = vmul.f32 %v2728, %v3947
          %3953 = vrot.lane.b32.xlu0 %v3950, 32
          %v3954 = vpop.permute.xlu0 %3953
          %v3956 = vadd.f32 %v3951, %v3954
          %3958 = vrot.lane.b32.xlu0 %v3956, 96
          %v3959 = vpop.permute.xlu0 %3958
          %3961 = vst.msk [vmem:[%s238 + $0x4] sm:$0xf] %vm3265, %v3959
          %v3962 = vld [vmem:[#allocation3 + $0x4] sm:$0xf]
          %3964 = vrot.lane.b32.xlu0 %v3962, 16
          %v3965 = vpop.permute.xlu0 %3964
          %v3966 = vsel %vm2647, %v3965, 0
          %3968 = vmatprep.subr.mxu0 0.0
          %3969 = vmatpush1.xpose.msra.mxu0 0.0
          %3970 = vmatprep.subr.mxu0 0.0
          %3971 = vmatpush1.xpose.msra.mxu0 0.0
          %3972 = vmatprep.subr.mxu0 0.0
          %3973 = vmatpush1.xpose.msra.mxu0 0.0
          %3974 = vmatprep.subr.mxu0 0.0
          %3975 = vmatpush1.xpose.msra.mxu0 0.0
          %3976 = vmatprep.subr.mxu0 0.0
          %3977 = vmatpush1.xpose.msra.mxu0 0.0
          %3978 = vmatprep.subr.mxu0 0.0
          %3979 = vmatpush1.xpose.msra.mxu0 0.0
          %3980 = vmatprep.subr.mxu0 0.0
          %3981 = vmatpush1.xpose.msra.mxu0 0.0
          %3982 = vmatprep.subr.mxu0 0.0
          %3983 = vmatpush1.xpose.msra.mxu0 0.0
          %3984 = vmatprep.subr.mxu0 0.0
          %3985 = vmatpush1.xpose.msra.mxu0 0.0
          %3986 = vmatprep.subr.mxu0 0.0
          %3987 = vmatpush1.xpose.msra.mxu0 0.0
          %3988 = vmatprep.subr.mxu0 0.0
          %3989 = vmatpush1.xpose.msra.mxu0 0.0
          %3990 = vmatprep.subr.mxu0 0.0
          %3991 = vmatpush1.xpose.msra.mxu0 0.0
          %3992 = vmatprep.subr.mxu0 0.0
          %3993 = vmatpush1.xpose.msra.mxu0 0.0
          %3994 = vmatprep.subr.mxu0 0.0
          %3995 = vmatpush1.xpose.msra.mxu0 0.0
          %3996 = vmatprep.subr.mxu0 0.0
          %3997 = vmatpush1.xpose.msra.mxu0 %v2655
          %3998 = vmatprep.subr.mxu0 0.0
          %3999 = vmatpush1.xpose.msra.mxu0 %v2652
          %4000 = vmatprep.subr.mxu0 0.0
          %4001 = vmatpush2.xpose.msra.mxu0 0.0
          %4002 = vmatprep.subr.mxu0 0.0
          %4003 = vmatpush2.xpose.msra.mxu0 0.0
          %4004 = vmatprep.subr.mxu0 0.0
          %4005 = vmatpush2.xpose.msra.mxu0 0.0
          %4006 = vmatprep.subr.mxu0 0.0
          %4007 = vmatpush2.xpose.msra.mxu0 0.0
          %4008 = vmatprep.subr.mxu0 0.0
          %4009 = vmatpush2.xpose.msra.mxu0 0.0
          %4010 = vmatprep.subr.mxu0 0.0
          %4011 = vmatpush2.xpose.msra.mxu0 0.0
          %4012 = vmatprep.subr.mxu0 0.0
          %4013 = vmatpush2.xpose.msra.mxu0 0.0
          %4014 = vmatprep.subr.mxu0 0.0
          %4015 = vmatpush2.xpose.msra.mxu0 0.0
          %4016 = vmatprep.subr.mxu0 0.0
          %4017 = vmatpush2.xpose.msra.mxu0 0.0
          %4018 = vmatprep.subr.mxu0 0.0
          %4019 = vmatpush2.xpose.msra.mxu0 0.0
          %4020 = vmatprep.subr.mxu0 0.0
          %4021 = vmatpush2.xpose.msra.mxu0 0.0
          %4022 = vmatprep.subr.mxu0 0.0
          %4023 = vmatpush2.xpose.msra.mxu0 0.0
          %4024 = vmatprep.subr.mxu0 0.0
          %4025 = vmatpush2.xpose.msra.mxu0 0.0
          %4026 = vmatprep.subr.mxu0 0.0
          %4027 = vmatpush2.xpose.msra.mxu0 0.0
          %4028 = vmatprep.subr.mxu0 0.0
          %4029 = vmatpush2.xpose.msra.mxu0 0.0
          %4030 = vmatprep.subr.mxu0 0.0
          %4031 = vmatpush2.xpose.msra.mxu0 0.0
          %4032 = vmatprep.mubr.f32.mxu0 0.0
          %4033 = vmatmul.mubr.f32.gmra.mxu0 %v3966
          %v4034 = vpop.f32.mrf.mxu0
          %v4035 = vadd.f32 0.0, %v4034
          %v4036 = vpop.f32.mrf.mxu0
          %4037 = vdwg.mxu0
          %v4038 = vld [vmem:[%s247 + $0x4] sm:$0xf]
          %v4039 = vmul.f32 %v2728, %v4035
          %4041 = vrot.lane.b32.xlu0 %v4038, 16
          %v4042 = vpop.permute.xlu0 %4041
          %v4044 = vadd.f32 %v4039, %v4042
          %4046 = vrot.lane.b32.xlu0 %v4044, 112
          %v4047 = vpop.permute.xlu0 %4046
          %4049 = vst.msk [vmem:[%s238 + $0x4] sm:$0xf] %vm3354, %v4047
        $region56: #{tpu_custom_call.1} parent=35 // pred_fallthru
          _
        %s4050 = sand.u32 %s140, 1
        %s4051 = scalar_lea.sflag [#allocation7], %s4050
        %s4052 = sand.u32 %s140, 1
        %s4053 = smul.addr %s4052, 8
        %s4054 = scalar_lea.vmem [#allocation8], %s4053
        // Predicated region
        $region57: #{tpu_custom_call.1} parent=35 // pred_check
          %p4055 = pneg %p150
        $region58: #{tpu_custom_call.1} parent=35 // pred_check_branch
          %4057 = sbr.rel (%p4055) target = $region60
        $region59: #{tpu_custom_call.1} parent=35 // pred_region
          %s4058 = smul.u32 2, %s27
          %s4060 = ssub.s32 128, 128
          %4061 = vsyncadd %s4051, %s4060
          %s4062 = smul.addr %s25, 2
          %s4063 = sadd.s32 %s4058, %s4062
          %s4064 = smul.addr %s4063, 64
          %s4065 = scalar_lea.hbm %s4, %s4064
          %s4067 = sshll.u32 %s4054, 4
          %s4068 = int_to_ptr.vmem [resolvable:$true] %s4067
          %4070 = dma.vmem_to_hbm [thread:$0]  %s4068, 128, %s4065, %s4051
        $region60: #{tpu_custom_call.1} parent=35 // pred_fallthru
          _
      $region36: #{tpu_custom_call.1} parent=5 // pred_fallthru
        _
      %p4071 = scmp.le.s32.totalorder 2, %s15
      // Predicated region
      $region61: #{tpu_custom_call.1} parent=5 // pred_check
        %p4072 = pneg %p4071
      $region62: #{tpu_custom_call.1} parent=5 // pred_check_branch
        %4074 = sbr.rel (%p4072) target = $region64
      $region63: #{tpu_custom_call.1} parent=5 // pred_region
        %s4075 = ssub.s32 %s15, 2
        // Predicated region
        $region65: #{tpu_custom_call.1} parent=63 // pred_check
          %p4076 = pneg %p156
        $region66: #{tpu_custom_call.1} parent=63 // pred_check_branch
          %4078 = sbr.rel (%p4076) target = $region68
        $region67: #{tpu_custom_call.1} parent=63 // pred_region
          %s4079 = sand.u32 %s141, 1
          %s4080 = scalar_lea.sflag [#allocation7], %s4079
          %s4081 = sand.u32 %s141, 1
          %s4082 = smul.addr %s4081, 8
          %s4083 = scalar_lea.vmem [#allocation8], %s4082
          %4084 = dma.done %s4080, 128
        $region68: #{tpu_custom_call.1} parent=63 // pred_fallthru
          _
      $region64: #{tpu_custom_call.1} parent=5 // pred_fallthru
        _
    $region6: #{tpu_custom_call.1} parent=1 // loop_footer
      %s19 = sadd.s32 1, %s15
    $region7: #{tpu_custom_call.1} parent=1 // loop_footer_branch
      %14 = sbr.rel target = $region3
    $region8: #{tpu_custom_call.1} parent=1 // loop_exit
      _
    %4085 = vsyncpa [#allocation6], 1
    %s4086 = scalar_lea.sflag [#allocation6], 1
    %4087 = vsyncpa %s4086, 1
    %4088 = vsyncpa [#allocation7], 1
    %s4089 = scalar_lea.sflag [#allocation7], 1
    %4090 = vsyncpa %s4089, 1

</llo_original>
